<compile_context>
chip_gen: v7x
topology: tpu7x:2x2x1
jax: 0.10.0
libtpu: 0.0.40
codegen_flags: <defaults>
</compile_context>

<pallas_src>
import functools
import math

import jax
import jax.numpy as jnp
from jax.experimental import pallas as pl
from jax.experimental.pallas import tpu as pltpu

HIDDEN = 128
MLP_DIM = 3072
CHUNK = 512                      # fc1/fc2 column chunk; MLP_DIM % CHUNK == 0
N_CHUNKS = MLP_DIM // CHUNK
_INV_SQRT2 = 1.0 / math.sqrt(2.0)


def _round_up(n, m):
    return ((n + m - 1) // m) * m


def _cdiv(a, b):
    return (a + b - 1) // b


def _erf(x):
    # Abramowitz & Stegun 7.1.26 polynomial approximation of erf
    # (max abs err ~1.5e-7, i.e. f32 precision), built only from VPU/EUP ops.
    # Matches torch.nn.GELU (exact-erf GELU) to f32.  The 1/(1 + p|x|) term
    # uses the EUP approximate reciprocal (otherwise-idle slot) plus one
    # Newton-Raphson step — keep the NR step, the raw approximation alone
    # would risk the 2e-4 tolerance.
    a1, a2, a3, a4, a5 = (0.254829592, -0.284496736, 1.421413741,
                          -1.453152027, 1.061405429)
    p = 0.3275911
    ax = jnp.abs(x)
    d = 1.0 + p * ax
    t = pl.reciprocal(d, approx=True)
    t = t * (2.0 - d * t)          # one NR step -> ~f32-exact 1/d
    poly = ((((a5 * t + a4) * t + a3) * t + a2) * t + a1) * t
    y = 1.0 - poly * jnp.exp(-ax * ax)
    return jnp.where(x < 0.0, -y, y)


def _gelu_exact(x):
    return 0.5 * x * (1.0 + _erf(x * _INV_SQRT2))


def mlp_kernel(x_ref, w1_ref, b1_ref, w2_ref, b2_ref, o_ref):
    # One row-tile of tokens; both matmuls + GELU fused (MXU + VPU/EUP).
    # The 3072-wide hidden dim is processed in N_CHUNKS static 512-column
    # slices so the live GELU intermediate is (tm, 512) instead of (tm, 3072);
    # fc2 partial products accumulate into a (tm, 128) f32 accumulator.
    # Operands stay in their native dtype (f32 or bf16); accumulation is f32.
    x = x_ref[...]
    tm = x.shape[0]
    acc = jnp.zeros((tm, HIDDEN), jnp.float32)
    for c in range(N_CHUNKS):                 # static unroll (6 chunks)
        c0, c1 = c * CHUNK, (c + 1) * CHUNK   # static, 128-aligned slices
        h = jnp.dot(x, w1_ref[:, c0:c1],
                    preferred_element_type=jnp.float32) + b1_ref[:, c0:c1]
        h = _gelu_exact(h)
        # TODO(synk): Dropout(p=0.1) is identity in eval mode; train-mode
        # dropout would use pltpu.prng_seed / pltpu.prng_random_bits here.
        acc = acc + jnp.dot(h.astype(w2_ref.dtype), w2_ref[c0:c1, :],
                            preferred_element_type=jnp.float32)
    o_ref[...] = (acc + b2_ref[...]).astype(o_ref.dtype)


@functools.partial(jax.jit, static_argnames=("tm", "use_bf16_matmul"))
def mlp_forward(x, w1, b1, w2, b2, *, tm=512, use_bf16_matmul=False):
    """x: (B, S, HIDDEN) -> (B, S, HIDDEN)."""
    B, S, H = x.shape
    assert H == HIDDEN
    out_dtype = x.dtype
    M = B * S
    x2 = x.reshape(M, H)

    if use_bf16_matmul:
        # Opt-in: bf16 operands with f32 accumulation -> much higher MXU
        # throughput on v6e/v7x and half the weight/x DMA bytes, at ~0.4%
        # relative error (exceeds the f32-path 2e-4 tolerance, so gated).
        x2 = x2.astype(jnp.bfloat16)
        w1 = w1.astype(jnp.bfloat16)
        w2 = w2.astype(jnp.bfloat16)

    # Row tile: keep the step count implied by `tm`, then shrink the tile to
    # the 16-aligned ceiling of M/steps to minimize padded rows (e.g. M=400,
    # tm=256 -> 2 steps of 208 rows = 416 padded rows, not 512).  The 16
    # alignment also satisfies the bf16 (16, 128) minimum tile.
    n_steps = max(1, _cdiv(M, tm))
    tm_eff = _round_up(_cdiv(M, n_steps), 16)
    M_pad = n_steps * tm_eff
    if M_pad != M:
        x2 = jnp.pad(x2, ((0, M_pad - M), (0, 0)))

    out = pl.pallas_call(
        mlp_kernel,
        out_shape=jax.ShapeDtypeStruct((M_pad, H), out_dtype),
        grid_spec=pltpu.PrefetchScalarGridSpec(
            num_scalar_prefetch=0,
            grid=(n_steps,),
            in_specs=[
                pl.BlockSpec((tm_eff, HIDDEN), lambda i: (i, 0)),      # x tile
                # Weights are grid-invariant -> single-buffer them to halve
                # their VMEM footprint (most valuable on v7x's 64 MiB/core).
                pl.BlockSpec((HIDDEN, MLP_DIM), lambda i: (0, 0),
                             pipeline_mode=pl.Buffered(1)),            # w1
                pl.BlockSpec((1, MLP_DIM), lambda i: (0, 0)),          # b1
                pl.BlockSpec((MLP_DIM, HIDDEN), lambda i: (0, 0),
                             pipeline_mode=pl.Buffered(1)),            # w2
                pl.BlockSpec((1, HIDDEN), lambda i: (0, 0)),           # b2
            ],
            out_specs=pl.BlockSpec((tm_eff, HIDDEN), lambda i: (i, 0)),
        ),
        compiler_params=pltpu.CompilerParams(
            # TODO(synk): confirm on v7x xprof that the 1-D "parallel" grid
            # actually shards across both TensorCores; if not, add a leading
            # size-2 CORE_PARALLEL axis.
            dimension_semantics=("parallel",),
            # Chunked footprint: ~3 MiB resident weights + double-buffered
            # x/out tiles (~1 MiB) + (tm, CHUNK) f32 chunk intermediates +
            # (tm, 128) accumulator + Mosaic scratch ~= 10 MiB at tm=512.
            # 24 MiB keeps >2x headroom; sweep down toward 12-16 MiB on v7x
            # once measured.
            vmem_limit_bytes=24 << 20,
        ),
    )(x2, w1, b1, w2, b2)

    if M_pad != M:
        out = out[:M]
    return out.reshape(B, S, H)


def init_params(key):
    # Deterministic init matching the module's _init_weights:
    #  fc1/fc2 weight: xavier_uniform_; bias: normal(std=1e-6).
    k1, k2, k3, k4 = jax.random.split(key, 4)
    bound1 = math.sqrt(6.0 / (HIDDEN + MLP_DIM))   # fan_in=128, fan_out=3072
    bound2 = math.sqrt(6.0 / (MLP_DIM + HIDDEN))
    w1 = jax.random.uniform(k1, (HIDDEN, MLP_DIM), jnp.float32, -bound1, bound1)
    w2 = jax.random.uniform(k2, (MLP_DIM, HIDDEN), jnp.float32, -bound2, bound2)
    b1 = 1e-6 * jax.random.normal(k3, (1, MLP_DIM), jnp.float32)
    b2 = 1e-6 * jax.random.normal(k4, (1, HIDDEN), jnp.float32)
    return w1, b1, w2, b2


def reference_forward(x, w1, b1, w2, b2):
    # Pure-JAX reference (exact-erf GELU, dropout in eval mode = identity).
    h = jnp.einsum("bsh,hd->bsd", x, w1) + b1[0]
    h = 0.5 * h * (1.0 + jax.scipy.special.erf(h / math.sqrt(2.0)))
    return jnp.einsum("bsd,dh->bsh", h, w2) + b2[0]


if __name__ == "__main__":
    key = jax.random.PRNGKey(0)
    kp, kx1, kx2 = jax.random.split(key, 3)
    w1, b1, w2, b2 = init_params(kp)

    # Small shape consistent with the module (tokens = batch*seq, hidden=128).
    B, S = 2, 8
    x = jax.random.normal(kx1, (B, S, HIDDEN), jnp.float32)
    y = jax.block_until_ready(mlp_forward(x, w1, b1, w2, b2))
    y_ref = reference_forward(x, w1, b1, w2, b2)
    assert y.shape == (B, S, HIDDEN)
    assert jnp.allclose(y, y_ref, atol=2e-4, rtol=2e-4), (
        float(jnp.max(jnp.abs(y - y_ref))))

    # Larger token count, explicit tm=256 -> exercises the multi-step grid and
    # the minimize-padding tile selection (M=400 -> 2 steps of 208 rows).
    B2, S2 = 2, 200
    xb = jax.random.normal(kx2, (B2, S2, HIDDEN), jnp.float32)
    yb = jax.block_until_ready(mlp_forward(xb, w1, b1, w2, b2, tm=256))
    yb_ref = reference_forward(xb, w1, b1, w2, b2)
    assert jnp.allclose(yb, yb_ref, atol=2e-4, rtol=2e-4), (
        float(jnp.max(jnp.abs(yb - yb_ref))))

    # Opt-in bf16-operand path (f32 accumulation); loose tolerance because
    # bf16 operand rounding gives ~0.4% relative error.  Also exercises the
    # 16-row minimum bf16 tile (tm_eff = 16 here).
    yc = jax.block_until_ready(
        mlp_forward(x, w1, b1, w2, b2, use_bf16_matmul=True))
    assert jnp.allclose(yc, y_ref, atol=5e-2, rtol=5e-2), (
        float(jnp.max(jnp.abs(yc - y_ref))))

    print("KERNEL_OK")
</pallas_src>

<mosaic_0001>
module attributes {stable_mosaic.version = 11 : i64} {
  func.func @mlp_kernel(%arg0: i32, %arg1: memref<16x128xf32, #tpu.memory_space<vmem>>, %arg2: memref<128x3072xf32, #tpu.memory_space<vmem>>, %arg3: memref<1x3072xf32, #tpu.memory_space<vmem>>, %arg4: memref<3072x128xf32, #tpu.memory_space<vmem>>, %arg5: memref<1x128xf32, #tpu.memory_space<vmem>>, %arg6: memref<16x128xf32, #tpu.memory_space<vmem>>) attributes {dimension_semantics = [#tpu.dimension_semantics<parallel>], iteration_bounds = array<i64: 1>, scalar_prefetch = 0 : i64, scratch_operands = 0 : i64, tpu.core_type = #tpu.core_type<tc>, window_params = [{transform_indices = @transform_0, window_bounds = array<i64: 16, 128>}, {pipeline_mode = #tpu.pipeline_mode<synchronous>, transform_indices = @transform_1, window_bounds = array<i64: 128, 3072>}, {pipeline_mode = #tpu.pipeline_mode<synchronous>, transform_indices = @transform_2, window_bounds = array<i64: 1, 3072>}, {pipeline_mode = #tpu.pipeline_mode<synchronous>, transform_indices = @transform_3, window_bounds = array<i64: 3072, 128>}, {pipeline_mode = #tpu.pipeline_mode<synchronous>, transform_indices = @transform_4, window_bounds = array<i64: 1, 128>}, {transform_indices = @transform_5, window_bounds = array<i64: 16, 128>}]} {
    %c0 = arith.constant 0 : index
    %c0_0 = arith.constant 0 : index
    %0 = vector.load %arg1[%c0, %c0_0] : memref<16x128xf32, #tpu.memory_space<vmem>>, vector<16x128xf32>
    %cst = arith.constant 0.000000e+00 : f32
    %1 = vector.broadcast %cst : f32 to vector<16x128xf32>
    %c0_1 = arith.constant 0 : index
    %c0_2 = arith.constant 0 : index
    %2 = vector.load %arg2[%c0_1, %c0_2] : memref<128x3072xf32, #tpu.memory_space<vmem>>, vector<128x512xf32>
    %cst_3 = arith.constant dense<0.000000e+00> : vector<16x512xf32>
    %3 = tpu.matmul %0, %2, %cst_3 {dimension_numbers = #tpu.dot_dimension_numbers<[1], [0], [0], [1], [0, 0, 1, 1], [], []>} : vector<16x128xf32>, vector<128x512xf32>, vector<16x512xf32> -> vector<16x512xf32>
    %c0_4 = arith.constant 0 : index
    %c0_5 = arith.constant 0 : index
    %4 = vector.load %arg3[%c0_4, %c0_5] : memref<1x3072xf32, #tpu.memory_space<vmem>>, vector<1x512xf32>
    %5 = vector.broadcast %4 : vector<1x512xf32> to vector<16x512xf32>
    %6 = arith.addf %3, %5 : vector<16x512xf32>
    %cst_6 = arith.constant 5.000000e-01 : f32
    %7 = vector.broadcast %cst_6 : f32 to vector<16x512xf32>
    %8 = arith.mulf %7, %6 : vector<16x512xf32>
    %cst_7 = arith.constant 0.707106769 : f32
    %9 = vector.broadcast %cst_7 : f32 to vector<16x512xf32>
    %10 = arith.mulf %6, %9 : vector<16x512xf32>
    %11 = math.absf %10 : vector<16x512xf32>
    %cst_8 = arith.constant 0.327591091 : f32
    %12 = vector.broadcast %cst_8 : f32 to vector<16x512xf32>
    %13 = arith.mulf %12, %11 : vector<16x512xf32>
    %cst_9 = arith.constant 1.000000e+00 : f32
    %14 = vector.broadcast %cst_9 : f32 to vector<16x512xf32>
    %15 = arith.addf %14, %13 : vector<16x512xf32>
    %16 = tpu.reciprocal %15 {approx = true} : vector<16x512xf32> -> vector<16x512xf32>
    %17 = arith.mulf %15, %16 : vector<16x512xf32>
    %cst_10 = arith.constant 2.000000e+00 : f32
    %18 = vector.broadcast %cst_10 : f32 to vector<16x512xf32>
    %19 = arith.subf %18, %17 : vector<16x512xf32>
    %20 = arith.mulf %16, %19 : vector<16x512xf32>
    %cst_11 = arith.constant 1.06140542 : f32
    %21 = vector.broadcast %cst_11 : f32 to vector<16x512xf32>
    %22 = arith.mulf %21, %20 : vector<16x512xf32>
    %cst_12 = arith.constant -1.45315206 : f32
    %23 = vector.broadcast %cst_12 : f32 to vector<16x512xf32>
    %24 = arith.addf %22, %23 : vector<16x512xf32>
    %25 = arith.mulf %24, %20 : vector<16x512xf32>
    %cst_13 = arith.constant 1.42141378 : f32
    %26 = vector.broadcast %cst_13 : f32 to vector<16x512xf32>
    %27 = arith.addf %25, %26 : vector<16x512xf32>
    %28 = arith.mulf %27, %20 : vector<16x512xf32>
    %cst_14 = arith.constant -0.284496725 : f32
    %29 = vector.broadcast %cst_14 : f32 to vector<16x512xf32>
    %30 = arith.addf %28, %29 : vector<16x512xf32>
    %31 = arith.mulf %30, %20 : vector<16x512xf32>
    %cst_15 = arith.constant 0.254829586 : f32
    %32 = vector.broadcast %cst_15 : f32 to vector<16x512xf32>
    %33 = arith.addf %31, %32 : vector<16x512xf32>
    %34 = arith.mulf %33, %20 : vector<16x512xf32>
    %cst_16 = arith.constant 0.000000e+00 : f32
    %35 = vector.broadcast %cst_16 : f32 to vector<16x512xf32>
    %36 = arith.subf %35, %11 : vector<16x512xf32>
    %37 = arith.mulf %36, %11 : vector<16x512xf32>
    %38 = math.exp %37 : vector<16x512xf32>
    %39 = arith.mulf %34, %38 : vector<16x512xf32>
    %cst_17 = arith.constant 1.000000e+00 : f32
    %40 = vector.broadcast %cst_17 : f32 to vector<16x512xf32>
    %41 = arith.subf %40, %39 : vector<16x512xf32>
    %cst_18 = arith.constant 0.000000e+00 : f32
    %42 = vector.broadcast %cst_18 : f32 to vector<16x512xf32>
    %43 = arith.cmpf olt, %10, %42 : vector<16x512xf32>
    %cst_19 = arith.constant 0.000000e+00 : f32
    %44 = vector.broadcast %cst_19 : f32 to vector<16x512xf32>
    %45 = arith.subf %44, %41 : vector<16x512xf32>
    %46 = arith.select %43, %45, %41 : vector<16x512xi1>, vector<16x512xf32>
    %cst_20 = arith.constant 1.000000e+00 : f32
    %47 = vector.broadcast %cst_20 : f32 to vector<16x512xf32>
    %48 = arith.addf %47, %46 : vector<16x512xf32>
    %49 = arith.mulf %8, %48 : vector<16x512xf32>
    %c0_21 = arith.constant 0 : index
    %c0_22 = arith.constant 0 : index
    %50 = vector.load %arg4[%c0_21, %c0_22] : memref<3072x128xf32, #tpu.memory_space<vmem>>, vector<512x128xf32>
    %cst_23 = arith.constant dense<0.000000e+00> : vector<16x128xf32>
    %51 = tpu.matmul %49, %50, %cst_23 {dimension_numbers = #tpu.dot_dimension_numbers<[1], [0], [0], [1], [0, 0, 1, 1], [], []>} : vector<16x512xf32>, vector<512x128xf32>, vector<16x128xf32> -> vector<16x128xf32>
    %52 = arith.addf %1, %51 : vector<16x128xf32>
    %c0_24 = arith.constant 0 : index
    %c512 = arith.constant 512 : index
    %53 = vector.load %arg2[%c0_24, %c512] : memref<128x3072xf32, #tpu.memory_space<vmem>>, vector<128x512xf32>
    %cst_25 = arith.constant dense<0.000000e+00> : vector<16x512xf32>
    %54 = tpu.matmul %0, %53, %cst_25 {dimension_numbers = #tpu.dot_dimension_numbers<[1], [0], [0], [1], [0, 0, 1, 1], [], []>} : vector<16x128xf32>, vector<128x512xf32>, vector<16x512xf32> -> vector<16x512xf32>
    %c0_26 = arith.constant 0 : index
    %c512_27 = arith.constant 512 : index
    %55 = vector.load %arg3[%c0_26, %c512_27] : memref<1x3072xf32, #tpu.memory_space<vmem>>, vector<1x512xf32>
    %56 = vector.broadcast %55 : vector<1x512xf32> to vector<16x512xf32>
    %57 = arith.addf %54, %56 : vector<16x512xf32>
    %cst_28 = arith.constant 5.000000e-01 : f32
    %58 = vector.broadcast %cst_28 : f32 to vector<16x512xf32>
    %59 = arith.mulf %58, %57 : vector<16x512xf32>
    %cst_29 = arith.constant 0.707106769 : f32
    %60 = vector.broadcast %cst_29 : f32 to vector<16x512xf32>
    %61 = arith.mulf %57, %60 : vector<16x512xf32>
    %62 = math.absf %61 : vector<16x512xf32>
    %cst_30 = arith.constant 0.327591091 : f32
    %63 = vector.broadcast %cst_30 : f32 to vector<16x512xf32>
    %64 = arith.mulf %63, %62 : vector<16x512xf32>
    %cst_31 = arith.constant 1.000000e+00 : f32
    %65 = vector.broadcast %cst_31 : f32 to vector<16x512xf32>
    %66 = arith.addf %65, %64 : vector<16x512xf32>
    %67 = tpu.reciprocal %66 {approx = true} : vector<16x512xf32> -> vector<16x512xf32>
    %68 = arith.mulf %66, %67 : vector<16x512xf32>
    %cst_32 = arith.constant 2.000000e+00 : f32
    %69 = vector.broadcast %cst_32 : f32 to vector<16x512xf32>
    %70 = arith.subf %69, %68 : vector<16x512xf32>
    %71 = arith.mulf %67, %70 : vector<16x512xf32>
    %cst_33 = arith.constant 1.06140542 : f32
    %72 = vector.broadcast %cst_33 : f32 to vector<16x512xf32>
    %73 = arith.mulf %72, %71 : vector<16x512xf32>
    %cst_34 = arith.constant -1.45315206 : f32
    %74 = vector.broadcast %cst_34 : f32 to vector<16x512xf32>
    %75 = arith.addf %73, %74 : vector<16x512xf32>
    %76 = arith.mulf %75, %71 : vector<16x512xf32>
    %cst_35 = arith.constant 1.42141378 : f32
    %77 = vector.broadcast %cst_35 : f32 to vector<16x512xf32>
    %78 = arith.addf %76, %77 : vector<16x512xf32>
    %79 = arith.mulf %78, %71 : vector<16x512xf32>
    %cst_36 = arith.constant -0.284496725 : f32
    %80 = vector.broadcast %cst_36 : f32 to vector<16x512xf32>
    %81 = arith.addf %79, %80 : vector<16x512xf32>
    %82 = arith.mulf %81, %71 : vector<16x512xf32>
    %cst_37 = arith.constant 0.254829586 : f32
    %83 = vector.broadcast %cst_37 : f32 to vector<16x512xf32>
    %84 = arith.addf %82, %83 : vector<16x512xf32>
    %85 = arith.mulf %84, %71 : vector<16x512xf32>
    %cst_38 = arith.constant 0.000000e+00 : f32
    %86 = vector.broadcast %cst_38 : f32 to vector<16x512xf32>
    %87 = arith.subf %86, %62 : vector<16x512xf32>
    %88 = arith.mulf %87, %62 : vector<16x512xf32>
    %89 = math.exp %88 : vector<16x512xf32>
    %90 = arith.mulf %85, %89 : vector<16x512xf32>
    %cst_39 = arith.constant 1.000000e+00 : f32
    %91 = vector.broadcast %cst_39 : f32 to vector<16x512xf32>
    %92 = arith.subf %91, %90 : vector<16x512xf32>
    %cst_40 = arith.constant 0.000000e+00 : f32
    %93 = vector.broadcast %cst_40 : f32 to vector<16x512xf32>
    %94 = arith.cmpf olt, %61, %93 : vector<16x512xf32>
    %cst_41 = arith.constant 0.000000e+00 : f32
    %95 = vector.broadcast %cst_41 : f32 to vector<16x512xf32>
    %96 = arith.subf %95, %92 : vector<16x512xf32>
    %97 = arith.select %94, %96, %92 : vector<16x512xi1>, vector<16x512xf32>
    %cst_42 = arith.constant 1.000000e+00 : f32
    %98 = vector.broadcast %cst_42 : f32 to vector<16x512xf32>
    %99 = arith.addf %98, %97 : vector<16x512xf32>
    %100 = arith.mulf %59, %99 : vector<16x512xf32>
    %c512_43 = arith.constant 512 : index
    %c0_44 = arith.constant 0 : index
    %101 = vector.load %arg4[%c512_43, %c0_44] : memref<3072x128xf32, #tpu.memory_space<vmem>>, vector<512x128xf32>
    %cst_45 = arith.constant dense<0.000000e+00> : vector<16x128xf32>
    %102 = tpu.matmul %100, %101, %cst_45 {dimension_numbers = #tpu.dot_dimension_numbers<[1], [0], [0], [1], [0, 0, 1, 1], [], []>} : vector<16x512xf32>, vector<512x128xf32>, vector<16x128xf32> -> vector<16x128xf32>
    %103 = arith.addf %52, %102 : vector<16x128xf32>
    %c0_46 = arith.constant 0 : index
    %c1024 = arith.constant 1024 : index
    %104 = vector.load %arg2[%c0_46, %c1024] : memref<128x3072xf32, #tpu.memory_space<vmem>>, vector<128x512xf32>
    %cst_47 = arith.constant dense<0.000000e+00> : vector<16x512xf32>
    %105 = tpu.matmul %0, %104, %cst_47 {dimension_numbers = #tpu.dot_dimension_numbers<[1], [0], [0], [1], [0, 0, 1, 1], [], []>} : vector<16x128xf32>, vector<128x512xf32>, vector<16x512xf32> -> vector<16x512xf32>
    %c0_48 = arith.constant 0 : index
    %c1024_49 = arith.constant 1024 : index
    %106 = vector.load %arg3[%c0_48, %c1024_49] : memref<1x3072xf32, #tpu.memory_space<vmem>>, vector<1x512xf32>
    %107 = vector.broadcast %106 : vector<1x512xf32> to vector<16x512xf32>
    %108 = arith.addf %105, %107 : vector<16x512xf32>
    %cst_50 = arith.constant 5.000000e-01 : f32
    %109 = vector.broadcast %cst_50 : f32 to vector<16x512xf32>
    %110 = arith.mulf %109, %108 : vector<16x512xf32>
    %cst_51 = arith.constant 0.707106769 : f32
    %111 = vector.broadcast %cst_51 : f32 to vector<16x512xf32>
    %112 = arith.mulf %108, %111 : vector<16x512xf32>
    %113 = math.absf %112 : vector<16x512xf32>
    %cst_52 = arith.constant 0.327591091 : f32
    %114 = vector.broadcast %cst_52 : f32 to vector<16x512xf32>
    %115 = arith.mulf %114, %113 : vector<16x512xf32>
    %cst_53 = arith.constant 1.000000e+00 : f32
    %116 = vector.broadcast %cst_53 : f32 to vector<16x512xf32>
    %117 = arith.addf %116, %115 : vector<16x512xf32>
    %118 = tpu.reciprocal %117 {approx = true} : vector<16x512xf32> -> vector<16x512xf32>
    %119 = arith.mulf %117, %118 : vector<16x512xf32>
    %cst_54 = arith.constant 2.000000e+00 : f32
    %120 = vector.broadcast %cst_54 : f32 to vector<16x512xf32>
    %121 = arith.subf %120, %119 : vector<16x512xf32>
    %122 = arith.mulf %118, %121 : vector<16x512xf32>
    %cst_55 = arith.constant 1.06140542 : f32
    %123 = vector.broadcast %cst_55 : f32 to vector<16x512xf32>
    %124 = arith.mulf %123, %122 : vector<16x512xf32>
    %cst_56 = arith.constant -1.45315206 : f32
    %125 = vector.broadcast %cst_56 : f32 to vector<16x512xf32>
    %126 = arith.addf %124, %125 : vector<16x512xf32>
    %127 = arith.mulf %126, %122 : vector<16x512xf32>
    %cst_57 = arith.constant 1.42141378 : f32
    %128 = vector.broadcast %cst_57 : f32 to vector<16x512xf32>
    %129 = arith.addf %127, %128 : vector<16x512xf32>
    %130 = arith.mulf %129, %122 : vector<16x512xf32>
    %cst_58 = arith.constant -0.284496725 : f32
    %131 = vector.broadcast %cst_58 : f32 to vector<16x512xf32>
    %132 = arith.addf %130, %131 : vector<16x512xf32>
    %133 = arith.mulf %132, %122 : vector<16x512xf32>
    %cst_59 = arith.constant 0.254829586 : f32
    %134 = vector.broadcast %cst_59 : f32 to vector<16x512xf32>
    %135 = arith.addf %133, %134 : vector<16x512xf32>
    %136 = arith.mulf %135, %122 : vector<16x512xf32>
    %cst_60 = arith.constant 0.000000e+00 : f32
    %137 = vector.broadcast %cst_60 : f32 to vector<16x512xf32>
    %138 = arith.subf %137, %113 : vector<16x512xf32>
    %139 = arith.mulf %138, %113 : vector<16x512xf32>
    %140 = math.exp %139 : vector<16x512xf32>
    %141 = arith.mulf %136, %140 : vector<16x512xf32>
    %cst_61 = arith.constant 1.000000e+00 : f32
    %142 = vector.broadcast %cst_61 : f32 to vector<16x512xf32>
    %143 = arith.subf %142, %141 : vector<16x512xf32>
    %cst_62 = arith.constant 0.000000e+00 : f32
    %144 = vector.broadcast %cst_62 : f32 to vector<16x512xf32>
    %145 = arith.cmpf olt, %112, %144 : vector<16x512xf32>
    %cst_63 = arith.constant 0.000000e+00 : f32
    %146 = vector.broadcast %cst_63 : f32 to vector<16x512xf32>
    %147 = arith.subf %146, %143 : vector<16x512xf32>
    %148 = arith.select %145, %147, %143 : vector<16x512xi1>, vector<16x512xf32>
    %cst_64 = arith.constant 1.000000e+00 : f32
    %149 = vector.broadcast %cst_64 : f32 to vector<16x512xf32>
    %150 = arith.addf %149, %148 : vector<16x512xf32>
    %151 = arith.mulf %110, %150 : vector<16x512xf32>
    %c1024_65 = arith.constant 1024 : index
    %c0_66 = arith.constant 0 : index
    %152 = vector.load %arg4[%c1024_65, %c0_66] : memref<3072x128xf32, #tpu.memory_space<vmem>>, vector<512x128xf32>
    %cst_67 = arith.constant dense<0.000000e+00> : vector<16x128xf32>
    %153 = tpu.matmul %151, %152, %cst_67 {dimension_numbers = #tpu.dot_dimension_numbers<[1], [0], [0], [1], [0, 0, 1, 1], [], []>} : vector<16x512xf32>, vector<512x128xf32>, vector<16x128xf32> -> vector<16x128xf32>
    %154 = arith.addf %103, %153 : vector<16x128xf32>
    %c0_68 = arith.constant 0 : index
    %c1536 = arith.constant 1536 : index
    %155 = vector.load %arg2[%c0_68, %c1536] : memref<128x3072xf32, #tpu.memory_space<vmem>>, vector<128x512xf32>
    %cst_69 = arith.constant dense<0.000000e+00> : vector<16x512xf32>
    %156 = tpu.matmul %0, %155, %cst_69 {dimension_numbers = #tpu.dot_dimension_numbers<[1], [0], [0], [1], [0, 0, 1, 1], [], []>} : vector<16x128xf32>, vector<128x512xf32>, vector<16x512xf32> -> vector<16x512xf32>
    %c0_70 = arith.constant 0 : index
    %c1536_71 = arith.constant 1536 : index
    %157 = vector.load %arg3[%c0_70, %c1536_71] : memref<1x3072xf32, #tpu.memory_space<vmem>>, vector<1x512xf32>
    %158 = vector.broadcast %157 : vector<1x512xf32> to vector<16x512xf32>
    %159 = arith.addf %156, %158 : vector<16x512xf32>
    %cst_72 = arith.constant 5.000000e-01 : f32
    %160 = vector.broadcast %cst_72 : f32 to vector<16x512xf32>
    %161 = arith.mulf %160, %159 : vector<16x512xf32>
    %cst_73 = arith.constant 0.707106769 : f32
    %162 = vector.broadcast %cst_73 : f32 to vector<16x512xf32>
    %163 = arith.mulf %159, %162 : vector<16x512xf32>
    %164 = math.absf %163 : vector<16x512xf32>
    %cst_74 = arith.constant 0.327591091 : f32
    %165 = vector.broadcast %cst_74 : f32 to vector<16x512xf32>
    %166 = arith.mulf %165, %164 : vector<16x512xf32>
    %cst_75 = arith.constant 1.000000e+00 : f32
    %167 = vector.broadcast %cst_75 : f32 to vector<16x512xf32>
    %168 = arith.addf %167, %166 : vector<16x512xf32>
    %169 = tpu.reciprocal %168 {approx = true} : vector<16x512xf32> -> vector<16x512xf32>
    %170 = arith.mulf %168, %169 : vector<16x512xf32>
    %cst_76 = arith.constant 2.000000e+00 : f32
    %171 = vector.broadcast %cst_76 : f32 to vector<16x512xf32>
    %172 = arith.subf %171, %170 : vector<16x512xf32>
    %173 = arith.mulf %169, %172 : vector<16x512xf32>
    %cst_77 = arith.constant 1.06140542 : f32
    %174 = vector.broadcast %cst_77 : f32 to vector<16x512xf32>
    %175 = arith.mulf %174, %173 : vector<16x512xf32>
    %cst_78 = arith.constant -1.45315206 : f32
    %176 = vector.broadcast %cst_78 : f32 to vector<16x512xf32>
    %177 = arith.addf %175, %176 : vector<16x512xf32>
    %178 = arith.mulf %177, %173 : vector<16x512xf32>
    %cst_79 = arith.constant 1.42141378 : f32
    %179 = vector.broadcast %cst_79 : f32 to vector<16x512xf32>
    %180 = arith.addf %178, %179 : vector<16x512xf32>
    %181 = arith.mulf %180, %173 : vector<16x512xf32>
    %cst_80 = arith.constant -0.284496725 : f32
    %182 = vector.broadcast %cst_80 : f32 to vector<16x512xf32>
    %183 = arith.addf %181, %182 : vector<16x512xf32>
    %184 = arith.mulf %183, %173 : vector<16x512xf32>
    %cst_81 = arith.constant 0.254829586 : f32
    %185 = vector.broadcast %cst_81 : f32 to vector<16x512xf32>
    %186 = arith.addf %184, %185 : vector<16x512xf32>
    %187 = arith.mulf %186, %173 : vector<16x512xf32>
    %cst_82 = arith.constant 0.000000e+00 : f32
    %188 = vector.broadcast %cst_82 : f32 to vector<16x512xf32>
    %189 = arith.subf %188, %164 : vector<16x512xf32>
    %190 = arith.mulf %189, %164 : vector<16x512xf32>
    %191 = math.exp %190 : vector<16x512xf32>
    %192 = arith.mulf %187, %191 : vector<16x512xf32>
    %cst_83 = arith.constant 1.000000e+00 : f32
    %193 = vector.broadcast %cst_83 : f32 to vector<16x512xf32>
    %194 = arith.subf %193, %192 : vector<16x512xf32>
    %cst_84 = arith.constant 0.000000e+00 : f32
    %195 = vector.broadcast %cst_84 : f32 to vector<16x512xf32>
    %196 = arith.cmpf olt, %163, %195 : vector<16x512xf32>
    %cst_85 = arith.constant 0.000000e+00 : f32
    %197 = vector.broadcast %cst_85 : f32 to vector<16x512xf32>
    %198 = arith.subf %197, %194 : vector<16x512xf32>
    %199 = arith.select %196, %198, %194 : vector<16x512xi1>, vector<16x512xf32>
    %cst_86 = arith.constant 1.000000e+00 : f32
    %200 = vector.broadcast %cst_86 : f32 to vector<16x512xf32>
    %201 = arith.addf %200, %199 : vector<16x512xf32>
    %202 = arith.mulf %161, %201 : vector<16x512xf32>
    %c1536_87 = arith.constant 1536 : index
    %c0_88 = arith.constant 0 : index
    %203 = vector.load %arg4[%c1536_87, %c0_88] : memref<3072x128xf32, #tpu.memory_space<vmem>>, vector<512x128xf32>
    %cst_89 = arith.constant dense<0.000000e+00> : vector<16x128xf32>
    %204 = tpu.matmul %202, %203, %cst_89 {dimension_numbers = #tpu.dot_dimension_numbers<[1], [0], [0], [1], [0, 0, 1, 1], [], []>} : vector<16x512xf32>, vector<512x128xf32>, vector<16x128xf32> -> vector<16x128xf32>
    %205 = arith.addf %154, %204 : vector<16x128xf32>
    %c0_90 = arith.constant 0 : index
    %c2048 = arith.constant 2048 : index
    %206 = vector.load %arg2[%c0_90, %c2048] : memref<128x3072xf32, #tpu.memory_space<vmem>>, vector<128x512xf32>
    %cst_91 = arith.constant dense<0.000000e+00> : vector<16x512xf32>
    %207 = tpu.matmul %0, %206, %cst_91 {dimension_numbers = #tpu.dot_dimension_numbers<[1], [0], [0], [1], [0, 0, 1, 1], [], []>} : vector<16x128xf32>, vector<128x512xf32>, vector<16x512xf32> -> vector<16x512xf32>
    %c0_92 = arith.constant 0 : index
    %c2048_93 = arith.constant 2048 : index
    %208 = vector.load %arg3[%c0_92, %c2048_93] : memref<1x3072xf32, #tpu.memory_space<vmem>>, vector<1x512xf32>
    %209 = vector.broadcast %208 : vector<1x512xf32> to vector<16x512xf32>
    %210 = arith.addf %207, %209 : vector<16x512xf32>
    %cst_94 = arith.constant 5.000000e-01 : f32
    %211 = vector.broadcast %cst_94 : f32 to vector<16x512xf32>
    %212 = arith.mulf %211, %210 : vector<16x512xf32>
    %cst_95 = arith.constant 0.707106769 : f32
    %213 = vector.broadcast %cst_95 : f32 to vector<16x512xf32>
    %214 = arith.mulf %210, %213 : vector<16x512xf32>
    %215 = math.absf %214 : vector<16x512xf32>
    %cst_96 = arith.constant 0.327591091 : f32
    %216 = vector.broadcast %cst_96 : f32 to vector<16x512xf32>
    %217 = arith.mulf %216, %215 : vector<16x512xf32>
    %cst_97 = arith.constant 1.000000e+00 : f32
    %218 = vector.broadcast %cst_97 : f32 to vector<16x512xf32>
    %219 = arith.addf %218, %217 : vector<16x512xf32>
    %220 = tpu.reciprocal %219 {approx = true} : vector<16x512xf32> -> vector<16x512xf32>
    %221 = arith.mulf %219, %220 : vector<16x512xf32>
    %cst_98 = arith.constant 2.000000e+00 : f32
    %222 = vector.broadcast %cst_98 : f32 to vector<16x512xf32>
    %223 = arith.subf %222, %221 : vector<16x512xf32>
    %224 = arith.mulf %220, %223 : vector<16x512xf32>
    %cst_99 = arith.constant 1.06140542 : f32
    %225 = vector.broadcast %cst_99 : f32 to vector<16x512xf32>
    %226 = arith.mulf %225, %224 : vector<16x512xf32>
    %cst_100 = arith.constant -1.45315206 : f32
    %227 = vector.broadcast %cst_100 : f32 to vector<16x512xf32>
    %228 = arith.addf %226, %227 : vector<16x512xf32>
    %229 = arith.mulf %228, %224 : vector<16x512xf32>
    %cst_101 = arith.constant 1.42141378 : f32
    %230 = vector.broadcast %cst_101 : f32 to vector<16x512xf32>
    %231 = arith.addf %229, %230 : vector<16x512xf32>
    %232 = arith.mulf %231, %224 : vector<16x512xf32>
    %cst_102 = arith.constant -0.284496725 : f32
    %233 = vector.broadcast %cst_102 : f32 to vector<16x512xf32>
    %234 = arith.addf %232, %233 : vector<16x512xf32>
    %235 = arith.mulf %234, %224 : vector<16x512xf32>
    %cst_103 = arith.constant 0.254829586 : f32
    %236 = vector.broadcast %cst_103 : f32 to vector<16x512xf32>
    %237 = arith.addf %235, %236 : vector<16x512xf32>
    %238 = arith.mulf %237, %224 : vector<16x512xf32>
    %cst_104 = arith.constant 0.000000e+00 : f32
    %239 = vector.broadcast %cst_104 : f32 to vector<16x512xf32>
    %240 = arith.subf %239, %215 : vector<16x512xf32>
    %241 = arith.mulf %240, %215 : vector<16x512xf32>
    %242 = math.exp %241 : vector<16x512xf32>
    %243 = arith.mulf %238, %242 : vector<16x512xf32>
    %cst_105 = arith.constant 1.000000e+00 : f32
    %244 = vector.broadcast %cst_105 : f32 to vector<16x512xf32>
    %245 = arith.subf %244, %243 : vector<16x512xf32>
    %cst_106 = arith.constant 0.000000e+00 : f32
    %246 = vector.broadcast %cst_106 : f32 to vector<16x512xf32>
    %247 = arith.cmpf olt, %214, %246 : vector<16x512xf32>
    %cst_107 = arith.constant 0.000000e+00 : f32
    %248 = vector.broadcast %cst_107 : f32 to vector<16x512xf32>
    %249 = arith.subf %248, %245 : vector<16x512xf32>
    %250 = arith.select %247, %249, %245 : vector<16x512xi1>, vector<16x512xf32>
    %cst_108 = arith.constant 1.000000e+00 : f32
    %251 = vector.broadcast %cst_108 : f32 to vector<16x512xf32>
    %252 = arith.addf %251, %250 : vector<16x512xf32>
    %253 = arith.mulf %212, %252 : vector<16x512xf32>
    %c2048_109 = arith.constant 2048 : index
    %c0_110 = arith.constant 0 : index
    %254 = vector.load %arg4[%c2048_109, %c0_110] : memref<3072x128xf32, #tpu.memory_space<vmem>>, vector<512x128xf32>
    %cst_111 = arith.constant dense<0.000000e+00> : vector<16x128xf32>
    %255 = tpu.matmul %253, %254, %cst_111 {dimension_numbers = #tpu.dot_dimension_numbers<[1], [0], [0], [1], [0, 0, 1, 1], [], []>} : vector<16x512xf32>, vector<512x128xf32>, vector<16x128xf32> -> vector<16x128xf32>
    %256 = arith.addf %205, %255 : vector<16x128xf32>
    %c0_112 = arith.constant 0 : index
    %c2560 = arith.constant 2560 : index
    %257 = vector.load %arg2[%c0_112, %c2560] : memref<128x3072xf32, #tpu.memory_space<vmem>>, vector<128x512xf32>
    %cst_113 = arith.constant dense<0.000000e+00> : vector<16x512xf32>
    %258 = tpu.matmul %0, %257, %cst_113 {dimension_numbers = #tpu.dot_dimension_numbers<[1], [0], [0], [1], [0, 0, 1, 1], [], []>} : vector<16x128xf32>, vector<128x512xf32>, vector<16x512xf32> -> vector<16x512xf32>
    %c0_114 = arith.constant 0 : index
    %c2560_115 = arith.constant 2560 : index
    %259 = vector.load %arg3[%c0_114, %c2560_115] : memref<1x3072xf32, #tpu.memory_space<vmem>>, vector<1x512xf32>
    %260 = vector.broadcast %259 : vector<1x512xf32> to vector<16x512xf32>
    %261 = arith.addf %258, %260 : vector<16x512xf32>
    %cst_116 = arith.constant 5.000000e-01 : f32
    %262 = vector.broadcast %cst_116 : f32 to vector<16x512xf32>
    %263 = arith.mulf %262, %261 : vector<16x512xf32>
    %cst_117 = arith.constant 0.707106769 : f32
    %264 = vector.broadcast %cst_117 : f32 to vector<16x512xf32>
    %265 = arith.mulf %261, %264 : vector<16x512xf32>
    %266 = math.absf %265 : vector<16x512xf32>
    %cst_118 = arith.constant 0.327591091 : f32
    %267 = vector.broadcast %cst_118 : f32 to vector<16x512xf32>
    %268 = arith.mulf %267, %266 : vector<16x512xf32>
    %cst_119 = arith.constant 1.000000e+00 : f32
    %269 = vector.broadcast %cst_119 : f32 to vector<16x512xf32>
    %270 = arith.addf %269, %268 : vector<16x512xf32>
    %271 = tpu.reciprocal %270 {approx = true} : vector<16x512xf32> -> vector<16x512xf32>
    %272 = arith.mulf %270, %271 : vector<16x512xf32>
    %cst_120 = arith.constant 2.000000e+00 : f32
    %273 = vector.broadcast %cst_120 : f32 to vector<16x512xf32>
    %274 = arith.subf %273, %272 : vector<16x512xf32>
    %275 = arith.mulf %271, %274 : vector<16x512xf32>
    %cst_121 = arith.constant 1.06140542 : f32
    %276 = vector.broadcast %cst_121 : f32 to vector<16x512xf32>
    %277 = arith.mulf %276, %275 : vector<16x512xf32>
    %cst_122 = arith.constant -1.45315206 : f32
    %278 = vector.broadcast %cst_122 : f32 to vector<16x512xf32>
    %279 = arith.addf %277, %278 : vector<16x512xf32>
    %280 = arith.mulf %279, %275 : vector<16x512xf32>
    %cst_123 = arith.constant 1.42141378 : f32
    %281 = vector.broadcast %cst_123 : f32 to vector<16x512xf32>
    %282 = arith.addf %280, %281 : vector<16x512xf32>
    %283 = arith.mulf %282, %275 : vector<16x512xf32>
    %cst_124 = arith.constant -0.284496725 : f32
    %284 = vector.broadcast %cst_124 : f32 to vector<16x512xf32>
    %285 = arith.addf %283, %284 : vector<16x512xf32>
    %286 = arith.mulf %285, %275 : vector<16x512xf32>
    %cst_125 = arith.constant 0.254829586 : f32
    %287 = vector.broadcast %cst_125 : f32 to vector<16x512xf32>
    %288 = arith.addf %286, %287 : vector<16x512xf32>
    %289 = arith.mulf %288, %275 : vector<16x512xf32>
    %cst_126 = arith.constant 0.000000e+00 : f32
    %290 = vector.broadcast %cst_126 : f32 to vector<16x512xf32>
    %291 = arith.subf %290, %266 : vector<16x512xf32>
    %292 = arith.mulf %291, %266 : vector<16x512xf32>
    %293 = math.exp %292 : vector<16x512xf32>
    %294 = arith.mulf %289, %293 : vector<16x512xf32>
    %cst_127 = arith.constant 1.000000e+00 : f32
    %295 = vector.broadcast %cst_127 : f32 to vector<16x512xf32>
    %296 = arith.subf %295, %294 : vector<16x512xf32>
    %cst_128 = arith.constant 0.000000e+00 : f32
    %297 = vector.broadcast %cst_128 : f32 to vector<16x512xf32>
    %298 = arith.cmpf olt, %265, %297 : vector<16x512xf32>
    %cst_129 = arith.constant 0.000000e+00 : f32
    %299 = vector.broadcast %cst_129 : f32 to vector<16x512xf32>
    %300 = arith.subf %299, %296 : vector<16x512xf32>
    %301 = arith.select %298, %300, %296 : vector<16x512xi1>, vector<16x512xf32>
    %cst_130 = arith.constant 1.000000e+00 : f32
    %302 = vector.broadcast %cst_130 : f32 to vector<16x512xf32>
    %303 = arith.addf %302, %301 : vector<16x512xf32>
    %304 = arith.mulf %263, %303 : vector<16x512xf32>
    %c2560_131 = arith.constant 2560 : index
    %c0_132 = arith.constant 0 : index
    %305 = vector.load %arg4[%c2560_131, %c0_132] : memref<3072x128xf32, #tpu.memory_space<vmem>>, vector<512x128xf32>
    %cst_133 = arith.constant dense<0.000000e+00> : vector<16x128xf32>
    %306 = tpu.matmul %304, %305, %cst_133 {dimension_numbers = #tpu.dot_dimension_numbers<[1], [0], [0], [1], [0, 0, 1, 1], [], []>} : vector<16x512xf32>, vector<512x128xf32>, vector<16x128xf32> -> vector<16x128xf32>
    %307 = arith.addf %256, %306 : vector<16x128xf32>
    %c0_134 = arith.constant 0 : index
    %c0_135 = arith.constant 0 : index
    %308 = vector.load %arg5[%c0_134, %c0_135] : memref<1x128xf32, #tpu.memory_space<vmem>>, vector<1x128xf32>
    %309 = vector.broadcast %308 : vector<1x128xf32> to vector<16x128xf32>
    %310 = arith.addf %307, %309 : vector<16x128xf32>
    %c0_136 = arith.constant 0 : index
    %c0_137 = arith.constant 0 : index
    %311 = vector.load %arg6[%c0_136, %c0_137] : memref<16x128xf32, #tpu.memory_space<vmem>>, vector<16x128xf32>
    tpu.vector_store %arg6[%c0_136, %c0_137], %310 {strides = array<i32>} : memref<16x128xf32, #tpu.memory_space<vmem>>, vector<16x128xf32>,
    return
  }
  func.func @transform_0(%arg0: i32) -> (i32, i32) {
    %c0_i32 = arith.constant 0 : i32
    %c0_i32_0 = arith.constant 0 : i32
    return %arg0, %c0_i32 : i32, i32
  }
  func.func @transform_1(%arg0: i32) -> (i32, i32) {
    %c0_i32 = arith.constant 0 : i32
    %c0_i32_0 = arith.constant 0 : i32
    %c0_i32_1 = arith.constant 0 : i32
    return %c0_i32, %c0_i32_0 : i32, i32
  }
  func.func @transform_2(%arg0: i32) -> (i32, i32) {
    %c0_i32 = arith.constant 0 : i32
    %c0_i32_0 = arith.constant 0 : i32
    %c0_i32_1 = arith.constant 0 : i32
    return %c0_i32, %c0_i32_0 : i32, i32
  }
  func.func @transform_3(%arg0: i32) -> (i32, i32) {
    %c0_i32 = arith.constant 0 : i32
    %c0_i32_0 = arith.constant 0 : i32
    %c0_i32_1 = arith.constant 0 : i32
    return %c0_i32, %c0_i32_0 : i32, i32
  }
  func.func @transform_4(%arg0: i32) -> (i32, i32) {
    %c0_i32 = arith.constant 0 : i32
    %c0_i32_0 = arith.constant 0 : i32
    %c0_i32_1 = arith.constant 0 : i32
    return %c0_i32, %c0_i32_0 : i32, i32
  }
  func.func @transform_5(%arg0: i32) -> (i32, i32) {
    %c0_i32 = arith.constant 0 : i32
    %c0_i32_0 = arith.constant 0 : i32
    return %arg0, %c0_i32 : i32, i32
  }
}

</mosaic_0001>

<llo_original>
// kernel: mlp_forward.1
$region0: #{mlp_forward.1}
  #allocation0 [shape = 'u32[]', space=smem, size = 0x4, offset = 0x4, fixed_abs, tag = 'smem constant byte address 0x4 - core index']
  #allocation1 [shape = 'u32[144,128]{1,0:T(1,128)}', space=vmem, size = 0x12000, scoped, tag = 'internal scratch']
  %s0 = inlined_call_operand.hbm [shape: f32[16,128], index: 0, kind: input, shape index: {}]
  %s1 = inlined_call_operand.hbm [shape: f32[128,3072], index: 1, kind: input, shape index: {}]
  %s2 = inlined_call_operand.hbm [shape: f32[1,3072], index: 2, kind: input, shape index: {}]
  %s3 = inlined_call_operand.hbm [shape: f32[3072,128], index: 3, kind: input, shape index: {}]
  %s4 = inlined_call_operand.hbm [shape: f32[1,128], index: 4, kind: input, shape index: {}]
  %s5 = inlined_call_operand.hbm [shape: f32[16,128], index: 5, kind: output, shape index: {}]
  %s6 = sld [smem:[#allocation0]]
  $region50: #{mlp_forward.1} parent=0
    _
  %s8 = ssub.s32 1, %s6
  %s9 = scalar_select 0, %s8, %s6
  $region1: #{mlp_forward.1} parent=0
    #allocation2 [shape = 'u8[8192]{0}', space=vmem, size = 0x2000, scoped, tag = 'input window, operand 0, single buffered']
    #allocation3 [shape = 's32[1]{0}', space=sflag, size = 0x4, scoped, tag = 'scoped memory for mlp_forward.1']
    #allocation4 [shape = 's32[1]{0}', space=sflag, size = 0x4, scoped, tag = 'scoped memory for mlp_forward.1']
    #allocation5 [shape = 'u8[1572864]{0}', space=vmem, size = 0x180000, scoped, tag = 'input window, operand 1, single buffered']
    #allocation6 [shape = 's32[1]{0}', space=sflag, size = 0x4, scoped, tag = 'scoped memory for mlp_forward.1']
    #allocation7 [shape = 'u8[12288]{0}', space=vmem, size = 0x3000, scoped, tag = 'input window, operand 2, single buffered']
    #allocation8 [shape = 'u8[1572864]{0}', space=vmem, size = 0x180000, scoped, tag = 'input window, operand 3, single buffered']
    #allocation9 [shape = 's32[1]{0}', space=sflag, size = 0x4, scoped, tag = 'scoped memory for mlp_forward.1']
    #allocation10 [shape = 'u8[512]{0}', space=vmem, size = 0x400, scoped, tag = 'input window, operand 4, single buffered']
    #allocation11 [shape = 'u8[8192]{0}', space=vmem, size = 0x2000, scoped, tag = 'output window, operand 0, single buffered']
    %10 = vsyncpa [#allocation3], 0
    %11 = vsyncpa [#allocation6], 0
    %12 = vsyncpa [#allocation9], 0
    %13 = vsyncpa [#allocation4], 0
    // Predicated region
    $region2: #{mlp_forward.1} parent=1 // pred_check
      _
    $region3: #{mlp_forward.1} parent=1 // pred_check_branch
      %15 = sbr.rel (0) target = $region5
    $region4: #{mlp_forward.1} parent=1 // pred_region
      %s17 = ssub.s32 256, 256
      %18 = vsyncadd [#allocation3], %s17
      %s19 = sshll.u32 [#allocation2], 4
      %s20 = int_to_ptr.vmem [resolvable:$true] %s19
      %25 = dma.hbm_to_vmem [thread:$0]  %s0, 256, %s20, [#allocation3], 128, 128, 8
    $region5: #{mlp_forward.1} parent=1 // pred_fallthru
      _
    // Predicated region
    $region6: #{mlp_forward.1} parent=1 // pred_check
      _
    $region7: #{mlp_forward.1} parent=1 // pred_check_branch
      %27 = sbr.rel (0) target = $region9
    $region8: #{mlp_forward.1} parent=1 // pred_region
      %s29 = ssub.s32 49152, 49152
      %30 = vsyncadd [#allocation6], %s29
      %s31 = sshll.u32 [#allocation5], 4
      %s32 = int_to_ptr.vmem [resolvable:$true] %s31
      %37 = dma.hbm_to_vmem [thread:$0]  %s1, 49152, %s32, [#allocation6], 3072, 3072, 192
    $region9: #{mlp_forward.1} parent=1 // pred_fallthru
      _
    // Predicated region
    $region10: #{mlp_forward.1} parent=1 // pred_check
      _
    $region11: #{mlp_forward.1} parent=1 // pred_check_branch
      %39 = sbr.rel (0) target = $region13
    $region12: #{mlp_forward.1} parent=1 // pred_region
      %s41 = ssub.s32 384, 384
      %42 = vsyncadd [#allocation6], %s41
      %s44 = sshll.u32 [#allocation7], 4
      %s45 = int_to_ptr.vmem [resolvable:$true] %s44
      %47 = dma.hbm_to_vmem [thread:$0]  %s2, 384, %s45, [#allocation6]
    $region13: #{mlp_forward.1} parent=1 // pred_fallthru
      _
    // Predicated region
    $region14: #{mlp_forward.1} parent=1 // pred_check
      _
    $region15: #{mlp_forward.1} parent=1 // pred_check_branch
      %49 = sbr.rel (0) target = $region17
    $region16: #{mlp_forward.1} parent=1 // pred_region
      %s51 = ssub.s32 49152, 49152
      %52 = vsyncadd [#allocation9], %s51
      %s53 = sshll.u32 [#allocation8], 4
      %s54 = int_to_ptr.vmem [resolvable:$true] %s53
      %59 = dma.hbm_to_vmem [thread:$0]  %s3, 49152, %s54, [#allocation9], 128, 128, 8
    $region17: #{mlp_forward.1} parent=1 // pred_fallthru
      _
    // Predicated region
    $region18: #{mlp_forward.1} parent=1 // pred_check
      _
    $region19: #{mlp_forward.1} parent=1 // pred_check_branch
      %61 = sbr.rel (0) target = $region21
    $region20: #{mlp_forward.1} parent=1 // pred_region
      %s63 = ssub.s32 16, 16
      %64 = vsyncadd [#allocation9], %s63
      %s66 = sshll.u32 [#allocation10], 4
      %s67 = int_to_ptr.vmem [resolvable:$true] %s66
      %69 = dma.hbm_to_vmem [thread:$0]  %s4, 16, %s67, [#allocation9]
    $region21: #{mlp_forward.1} parent=1 // pred_fallthru
      _
    // Predicated region
    $region22: #{mlp_forward.1} parent=1 // pred_check
      _
    $region23: #{mlp_forward.1} parent=1 // pred_check_branch
      %71 = sbr.rel (0) target = $region25
    $region24: #{mlp_forward.1} parent=1 // pred_region
      %72 = dma.done [#allocation3], 256
    $region25: #{mlp_forward.1} parent=1 // pred_fallthru
      _
    // Predicated region
    $region26: #{mlp_forward.1} parent=1 // pred_check
      _
    $region27: #{mlp_forward.1} parent=1 // pred_check_branch
      %74 = sbr.rel (0) target = $region29
    $region28: #{mlp_forward.1} parent=1 // pred_region
      %75 = dma.done [#allocation6], 49152
    $region29: #{mlp_forward.1} parent=1 // pred_fallthru
      _
    // Predicated region
    $region30: #{mlp_forward.1} parent=1 // pred_check
      _
    $region31: #{mlp_forward.1} parent=1 // pred_check_branch
      %77 = sbr.rel (0) target = $region33
    $region32: #{mlp_forward.1} parent=1 // pred_region
      %78 = dma.done [#allocation6], 384
    $region33: #{mlp_forward.1} parent=1 // pred_fallthru
      _
    // Predicated region
    $region34: #{mlp_forward.1} parent=1 // pred_check
      _
    $region35: #{mlp_forward.1} parent=1 // pred_check_branch
      %80 = sbr.rel (0) target = $region37
    $region36: #{mlp_forward.1} parent=1 // pred_region
      %81 = dma.done [#allocation9], 49152
    $region37: #{mlp_forward.1} parent=1 // pred_fallthru
      _
    // Predicated region
    $region38: #{mlp_forward.1} parent=1 // pred_check
      _
    $region39: #{mlp_forward.1} parent=1 // pred_check_branch
      %83 = sbr.rel (0) target = $region41
    $region40: #{mlp_forward.1} parent=1 // pred_region
      %84 = dma.done [#allocation9], 16
    $region41: #{mlp_forward.1} parent=1 // pred_fallthru
      _
    %v85 = vld [vmem:[#allocation2] sm:$0xff]
    %v86 = vld [vmem:[#allocation2 + $0x8] sm:$0xff]
    %v87 = vld [vmem:[#allocation5] sm:$0xff]
    %v88 = vld [vmem:[#allocation5 + $0x8] sm:$0xff]
    %v89 = vld [vmem:[#allocation5 + $0x10] sm:$0xff]
    %v90 = vld [vmem:[#allocation5 + $0x18] sm:$0xff]
    %v91 = vld [vmem:[#allocation5 + $0xc0] sm:$0xff]
    %v92 = vld [vmem:[#allocation5 + $0xc8] sm:$0xff]
    %v93 = vld [vmem:[#allocation5 + $0xd0] sm:$0xff]
    %v94 = vld [vmem:[#allocation5 + $0xd8] sm:$0xff]
    %v95 = vld [vmem:[#allocation5 + $0x180] sm:$0xff]
    %v96 = vld [vmem:[#allocation5 + $0x188] sm:$0xff]
    %v97 = vld [vmem:[#allocation5 + $0x190] sm:$0xff]
    %v98 = vld [vmem:[#allocation5 + $0x198] sm:$0xff]
    %v99 = vld [vmem:[#allocation5 + $0x240] sm:$0xff]
    %v100 = vld [vmem:[#allocation5 + $0x248] sm:$0xff]
    %v101 = vld [vmem:[#allocation5 + $0x250] sm:$0xff]
    %v102 = vld [vmem:[#allocation5 + $0x258] sm:$0xff]
    %v103 = vld [vmem:[#allocation5 + $0x300] sm:$0xff]
    %v104 = vld [vmem:[#allocation5 + $0x308] sm:$0xff]
    %v105 = vld [vmem:[#allocation5 + $0x310] sm:$0xff]
    %v106 = vld [vmem:[#allocation5 + $0x318] sm:$0xff]
    %v107 = vld [vmem:[#allocation5 + $0x3c0] sm:$0xff]
    %v108 = vld [vmem:[#allocation5 + $0x3c8] sm:$0xff]
    %v109 = vld [vmem:[#allocation5 + $0x3d0] sm:$0xff]
    %v110 = vld [vmem:[#allocation5 + $0x3d8] sm:$0xff]
    %v111 = vld [vmem:[#allocation5 + $0x480] sm:$0xff]
    %v112 = vld [vmem:[#allocation5 + $0x488] sm:$0xff]
    %v113 = vld [vmem:[#allocation5 + $0x490] sm:$0xff]
    %v114 = vld [vmem:[#allocation5 + $0x498] sm:$0xff]
    %v115 = vld [vmem:[#allocation5 + $0x540] sm:$0xff]
    %v116 = vld [vmem:[#allocation5 + $0x548] sm:$0xff]
    %v117 = vld [vmem:[#allocation5 + $0x550] sm:$0xff]
    %v118 = vld [vmem:[#allocation5 + $0x558] sm:$0xff]
    %v119 = vld [vmem:[#allocation5 + $0x600] sm:$0xff]
    %v120 = vld [vmem:[#allocation5 + $0x608] sm:$0xff]
    %v121 = vld [vmem:[#allocation5 + $0x610] sm:$0xff]
    %v122 = vld [vmem:[#allocation5 + $0x618] sm:$0xff]
    %v123 = vld [vmem:[#allocation5 + $0x6c0] sm:$0xff]
    %v124 = vld [vmem:[#allocation5 + $0x6c8] sm:$0xff]
    %v125 = vld [vmem:[#allocation5 + $0x6d0] sm:$0xff]
    %v126 = vld [vmem:[#allocation5 + $0x6d8] sm:$0xff]
    %v127 = vld [vmem:[#allocation5 + $0x780] sm:$0xff]
    %v128 = vld [vmem:[#allocation5 + $0x788] sm:$0xff]
    %v129 = vld [vmem:[#allocation5 + $0x790] sm:$0xff]
    %v130 = vld [vmem:[#allocation5 + $0x798] sm:$0xff]
    %v131 = vld [vmem:[#allocation5 + $0x840] sm:$0xff]
    %v132 = vld [vmem:[#allocation5 + $0x848] sm:$0xff]
    %v133 = vld [vmem:[#allocation5 + $0x850] sm:$0xff]
    %v134 = vld [vmem:[#allocation5 + $0x858] sm:$0xff]
    %v135 = vld [vmem:[#allocation5 + $0x900] sm:$0xff]
    %v136 = vld [vmem:[#allocation5 + $0x908] sm:$0xff]
    %v137 = vld [vmem:[#allocation5 + $0x910] sm:$0xff]
    %v138 = vld [vmem:[#allocation5 + $0x918] sm:$0xff]
    %v139 = vld [vmem:[#allocation5 + $0x9c0] sm:$0xff]
    %v140 = vld [vmem:[#allocation5 + $0x9c8] sm:$0xff]
    %v141 = vld [vmem:[#allocation5 + $0x9d0] sm:$0xff]
    %v142 = vld [vmem:[#allocation5 + $0x9d8] sm:$0xff]
    %v143 = vld [vmem:[#allocation5 + $0xa80] sm:$0xff]
    %v144 = vld [vmem:[#allocation5 + $0xa88] sm:$0xff]
    %v145 = vld [vmem:[#allocation5 + $0xa90] sm:$0xff]
    %v146 = vld [vmem:[#allocation5 + $0xa98] sm:$0xff]
    %v147 = vld [vmem:[#allocation5 + $0xb40] sm:$0xff]
    %v148 = vld [vmem:[#allocation5 + $0xb48] sm:$0xff]
    %v149 = vld [vmem:[#allocation5 + $0xb50] sm:$0xff]
    %v150 = vld [vmem:[#allocation5 + $0xb58] sm:$0xff]
    %v151 = vld [vmem:[#allocation7] sm:$0xf]
    %v153 = vlaneseq
    %v154 = vshrl.u32 %v153, 7
    %v155 = vsub.s32 0, %v154
    %v156 = vrot.slane %v151, %v155
    %v157 = vlaneseq
    %v158 = vshrl.u32 %v157, 7
    %v159 = vsub.s32 1, %v158
    %v160 = vrot.slane %v151, %v159
    %v161 = vlaneseq
    %v162 = vshrl.u32 %v161, 7
    %v163 = vsub.s32 2, %v162
    %v164 = vrot.slane %v151, %v163
    %v165 = vlaneseq
    %v166 = vshrl.u32 %v165, 7
    %v167 = vsub.s32 3, %v166
    %v168 = vrot.slane %v151, %v167
    %173 = vmatprep.subr.mxu0 %v88
    %174 = vmatpush1.msra.mxu0 %v87
    %175 = vmatprep.subr.mxu0 %v92
    %176 = vmatpush1.msra.mxu0 %v91
    %177 = vmatprep.subr.mxu0 %v96
    %178 = vmatpush1.msra.mxu0 %v95
    %179 = vmatprep.subr.mxu0 %v100
    %180 = vmatpush1.msra.mxu0 %v99
    %181 = vmatprep.subr.mxu0 %v104
    %182 = vmatpush1.msra.mxu0 %v103
    %183 = vmatprep.subr.mxu0 %v108
    %184 = vmatpush1.msra.mxu0 %v107
    %185 = vmatprep.subr.mxu0 %v112
    %186 = vmatpush1.msra.mxu0 %v111
    %187 = vmatprep.subr.mxu0 %v116
    %188 = vmatpush1.msra.mxu0 %v115
    %189 = vmatprep.subr.mxu0 %v120
    %190 = vmatpush1.msra.mxu0 %v119
    %191 = vmatprep.subr.mxu0 %v124
    %192 = vmatpush1.msra.mxu0 %v123
    %193 = vmatprep.subr.mxu0 %v128
    %194 = vmatpush1.msra.mxu0 %v127
    %195 = vmatprep.subr.mxu0 %v132
    %196 = vmatpush1.msra.mxu0 %v131
    %197 = vmatprep.subr.mxu0 %v136
    %198 = vmatpush1.msra.mxu0 %v135
    %199 = vmatprep.subr.mxu0 %v140
    %200 = vmatpush1.msra.mxu0 %v139
    %201 = vmatprep.subr.mxu0 %v144
    %202 = vmatpush1.msra.mxu0 %v143
    %203 = vmatprep.subr.mxu0 %v148
    %204 = vmatpush1.msra.mxu0 %v147
    %205 = vmatprep.subr.mxu0 0.0
    %206 = vmatpush1.msra.mxu0 0.0
    %207 = vmatprep.subr.mxu0 0.0
    %208 = vmatpush1.msra.mxu0 0.0
    %209 = vmatprep.subr.mxu0 0.0
    %210 = vmatpush1.msra.mxu0 0.0
    %211 = vmatprep.subr.mxu0 0.0
    %212 = vmatpush1.msra.mxu0 0.0
    %213 = vmatprep.subr.mxu0 0.0
    %214 = vmatpush1.msra.mxu0 0.0
    %215 = vmatprep.subr.mxu0 0.0
    %216 = vmatpush1.msra.mxu0 0.0
    %217 = vmatprep.subr.mxu0 0.0
    %218 = vmatpush1.msra.mxu0 0.0
    %219 = vmatprep.subr.mxu0 0.0
    %220 = vmatpush1.msra.mxu0 0.0
    %221 = vmatprep.subr.mxu0 0.0
    %222 = vmatpush1.msra.mxu0 0.0
    %223 = vmatprep.subr.mxu0 0.0
    %224 = vmatpush1.msra.mxu0 0.0
    %225 = vmatprep.subr.mxu0 0.0
    %226 = vmatpush1.msra.mxu0 0.0
    %227 = vmatprep.subr.mxu0 0.0
    %228 = vmatpush1.msra.mxu0 0.0
    %229 = vmatprep.subr.mxu0 0.0
    %230 = vmatpush1.msra.mxu0 0.0
    %231 = vmatprep.subr.mxu0 0.0
    %232 = vmatpush1.msra.mxu0 0.0
    %233 = vmatprep.subr.mxu0 0.0
    %234 = vmatpush1.msra.mxu0 0.0
    %235 = vmatprep.subr.mxu0 0.0
    %236 = vmatpush1.msra.mxu0 0.0
    %237 = vmatprep.mubr.f32.mxu0 0.0
    %238 = vmatmul.mubr.f32.gmra.mrb[0].mxu0 %v85
    %v239 = vpop.f32.mrb[0].mxu0
    %v240 = vadd.f32 %v156, %v239
    %v241 = vpop.f32.mrb[0].mxu0
    %v242 = vadd.f32 %v160, %v241
    %243 = vmatprep.mubr.f32.mxu0 0.0
    %244 = vmatmul.mubr.f32.gmra.mrb[0].mxu0 %v86
    %v245 = vpop.f32.mrb[0].mxu0
    %v246 = vadd.f32 %v156, %v245
    %v247 = vpop.f32.mrb[0].mxu0
    %v248 = vadd.f32 %v160, %v247
    %249 = vdwg.mxu0
    %250 = vmatprep.subr.mxu0 %v90
    %251 = vmatpush1.msra.mxu0 %v89
    %252 = vmatprep.subr.mxu0 %v94
    %253 = vmatpush1.msra.mxu0 %v93
    %254 = vmatprep.subr.mxu0 %v98
    %255 = vmatpush1.msra.mxu0 %v97
    %256 = vmatprep.subr.mxu0 %v102
    %257 = vmatpush1.msra.mxu0 %v101
    %258 = vmatprep.subr.mxu0 %v106
    %259 = vmatpush1.msra.mxu0 %v105
    %260 = vmatprep.subr.mxu0 %v110
    %261 = vmatpush1.msra.mxu0 %v109
    %262 = vmatprep.subr.mxu0 %v114
    %263 = vmatpush1.msra.mxu0 %v113
    %264 = vmatprep.subr.mxu0 %v118
    %265 = vmatpush1.msra.mxu0 %v117
    %266 = vmatprep.subr.mxu0 %v122
    %267 = vmatpush1.msra.mxu0 %v121
    %268 = vmatprep.subr.mxu0 %v126
    %269 = vmatpush1.msra.mxu0 %v125
    %270 = vmatprep.subr.mxu0 %v130
    %271 = vmatpush1.msra.mxu0 %v129
    %272 = vmatprep.subr.mxu0 %v134
    %273 = vmatpush1.msra.mxu0 %v133
    %274 = vmatprep.subr.mxu0 %v138
    %275 = vmatpush1.msra.mxu0 %v137
    %276 = vmatprep.subr.mxu0 %v142
    %277 = vmatpush1.msra.mxu0 %v141
    %278 = vmatprep.subr.mxu0 %v146
    %279 = vmatpush1.msra.mxu0 %v145
    %280 = vmatprep.subr.mxu0 %v150
    %281 = vmatpush1.msra.mxu0 %v149
    %282 = vmatprep.subr.mxu0 0.0
    %283 = vmatpush1.msra.mxu0 0.0
    %284 = vmatprep.subr.mxu0 0.0
    %285 = vmatpush1.msra.mxu0 0.0
    %286 = vmatprep.subr.mxu0 0.0
    %287 = vmatpush1.msra.mxu0 0.0
    %288 = vmatprep.subr.mxu0 0.0
    %289 = vmatpush1.msra.mxu0 0.0
    %290 = vmatprep.subr.mxu0 0.0
    %291 = vmatpush1.msra.mxu0 0.0
    %292 = vmatprep.subr.mxu0 0.0
    %293 = vmatpush1.msra.mxu0 0.0
    %294 = vmatprep.subr.mxu0 0.0
    %295 = vmatpush1.msra.mxu0 0.0
    %296 = vmatprep.subr.mxu0 0.0
    %297 = vmatpush1.msra.mxu0 0.0
    %298 = vmatprep.subr.mxu0 0.0
    %299 = vmatpush1.msra.mxu0 0.0
    %300 = vmatprep.subr.mxu0 0.0
    %301 = vmatpush1.msra.mxu0 0.0
    %302 = vmatprep.subr.mxu0 0.0
    %303 = vmatpush1.msra.mxu0 0.0
    %304 = vmatprep.subr.mxu0 0.0
    %305 = vmatpush1.msra.mxu0 0.0
    %306 = vmatprep.subr.mxu0 0.0
    %307 = vmatpush1.msra.mxu0 0.0
    %308 = vmatprep.subr.mxu0 0.0
    %309 = vmatpush1.msra.mxu0 0.0
    %310 = vmatprep.subr.mxu0 0.0
    %311 = vmatpush1.msra.mxu0 0.0
    %312 = vmatprep.subr.mxu0 0.0
    %313 = vmatpush1.msra.mxu0 0.0
    %314 = vmatprep.mubr.f32.mxu0 0.0
    %315 = vmatmul.mubr.f32.gmra.mrb[0].mxu0 %v85
    %v316 = vpop.f32.mrb[0].mxu0
    %v317 = vadd.f32 %v164, %v316
    %v318 = vpop.f32.mrb[0].mxu0
    %v319 = vadd.f32 %v168, %v318
    %320 = vmatprep.mubr.f32.mxu0 0.0
    %321 = vmatmul.mubr.f32.gmra.mrb[0].mxu0 %v86
    %v322 = vpop.f32.mrb[0].mxu0
    %v323 = vadd.f32 %v164, %v322
    %v324 = vpop.f32.mrb[0].mxu0
    %v325 = vadd.f32 %v168, %v324
    %326 = vdwg.mxu0
    %v327 = vmul.f32 %v240, 0.5
    %v328 = vmul.f32 %v242, 0.5
    %v329 = vmul.f32 %v317, 0.5
    %v330 = vmul.f32 %v319, 0.5
    %v331 = vmul.f32 %v246, 0.5
    %v332 = vmul.f32 %v248, 0.5
    %v333 = vmul.f32 %v323, 0.5
    %v334 = vmul.f32 %v325, 0.5
    %v335 = vmul.f32 %v240, 0.70710677
    %v336 = vmul.f32 %v242, 0.70710677
    %v337 = vmul.f32 %v317, 0.70710677
    %v338 = vmul.f32 %v319, 0.70710677
    %v339 = vmul.f32 %v246, 0.70710677
    %v340 = vmul.f32 %v248, 0.70710677
    %v341 = vmul.f32 %v323, 0.70710677
    %v342 = vmul.f32 %v325, 0.70710677
    %v343 = vand.u32 2147483647, %v335
    %v344 = vand.u32 2147483647, %v336
    %v345 = vand.u32 2147483647, %v337
    %v346 = vand.u32 2147483647, %v338
    %v347 = vand.u32 2147483647, %v339
    %v348 = vand.u32 2147483647, %v340
    %v349 = vand.u32 2147483647, %v341
    %v350 = vand.u32 2147483647, %v342
    %v351 = vmul.f32 %v343, 0.3275911
    %v352 = vmul.f32 %v344, 0.3275911
    %v353 = vmul.f32 %v345, 0.3275911
    %v354 = vmul.f32 %v346, 0.3275911
    %v355 = vmul.f32 %v347, 0.3275911
    %v356 = vmul.f32 %v348, 0.3275911
    %v357 = vmul.f32 %v349, 0.3275911
    %v358 = vmul.f32 %v350, 0.3275911
    %v359 = vadd.f32 %v351, 1.0
    %v360 = vadd.f32 %v352, 1.0
    %v361 = vadd.f32 %v353, 1.0
    %v362 = vadd.f32 %v354, 1.0
    %v363 = vadd.f32 %v355, 1.0
    %v364 = vadd.f32 %v356, 1.0
    %v365 = vadd.f32 %v357, 1.0
    %v366 = vadd.f32 %v358, 1.0
    %v367 = vrcp.pop %v359
    %v368 = vrcp.pop %v360
    %v369 = vrcp.pop %v361
    %v370 = vrcp.pop %v362
    %v371 = vrcp.pop %v363
    %v372 = vrcp.pop %v364
    %v373 = vrcp.pop %v365
    %v374 = vrcp.pop %v366
    %v375 = vmul.f32 %v359, %v367
    %v376 = vmul.f32 %v360, %v368
    %v377 = vmul.f32 %v361, %v369
    %v378 = vmul.f32 %v362, %v370
    %v379 = vmul.f32 %v363, %v371
    %v380 = vmul.f32 %v364, %v372
    %v381 = vmul.f32 %v365, %v373
    %v382 = vmul.f32 %v366, %v374
    %v383 = vsub.f32 2.0, %v375
    %v384 = vsub.f32 2.0, %v376
    %v385 = vsub.f32 2.0, %v377
    %v386 = vsub.f32 2.0, %v378
    %v387 = vsub.f32 2.0, %v379
    %v388 = vsub.f32 2.0, %v380
    %v389 = vsub.f32 2.0, %v381
    %v390 = vsub.f32 2.0, %v382
    %v391 = vmul.f32 %v367, %v383
    %v392 = vmul.f32 %v368, %v384
    %v393 = vmul.f32 %v369, %v385
    %v394 = vmul.f32 %v370, %v386
    %v395 = vmul.f32 %v371, %v387
    %v396 = vmul.f32 %v372, %v388
    %v397 = vmul.f32 %v373, %v389
    %v398 = vmul.f32 %v374, %v390
    %v399 = vmul.f32 %v391, 1.0614054
    %v400 = vmul.f32 %v392, 1.0614054
    %v401 = vmul.f32 %v393, 1.0614054
    %v402 = vmul.f32 %v394, 1.0614054
    %v403 = vmul.f32 %v395, 1.0614054
    %v404 = vmul.f32 %v396, 1.0614054
    %v405 = vmul.f32 %v397, 1.0614054
    %v406 = vmul.f32 %v398, 1.0614054
    %v407 = vadd.f32 %v399, -1.4531521
    %v408 = vadd.f32 %v400, -1.4531521
    %v409 = vadd.f32 %v401, -1.4531521
    %v410 = vadd.f32 %v402, -1.4531521
    %v411 = vadd.f32 %v403, -1.4531521
    %v412 = vadd.f32 %v404, -1.4531521
    %v413 = vadd.f32 %v405, -1.4531521
    %v414 = vadd.f32 %v406, -1.4531521
    %v415 = vmul.f32 %v407, %v391
    %v416 = vmul.f32 %v408, %v392
    %v417 = vmul.f32 %v409, %v393
    %v418 = vmul.f32 %v410, %v394
    %v419 = vmul.f32 %v411, %v395
    %v420 = vmul.f32 %v412, %v396
    %v421 = vmul.f32 %v413, %v397
    %v422 = vmul.f32 %v414, %v398
    %v423 = vadd.f32 %v415, 1.4214138
    %v424 = vadd.f32 %v416, 1.4214138
    %v425 = vadd.f32 %v417, 1.4214138
    %v426 = vadd.f32 %v418, 1.4214138
    %v427 = vadd.f32 %v419, 1.4214138
    %v428 = vadd.f32 %v420, 1.4214138
    %v429 = vadd.f32 %v421, 1.4214138
    %v430 = vadd.f32 %v422, 1.4214138
    %v431 = vmul.f32 %v423, %v391
    %v432 = vmul.f32 %v424, %v392
    %v433 = vmul.f32 %v425, %v393
    %v434 = vmul.f32 %v426, %v394
    %v435 = vmul.f32 %v427, %v395
    %v436 = vmul.f32 %v428, %v396
    %v437 = vmul.f32 %v429, %v397
    %v438 = vmul.f32 %v430, %v398
    %v439 = vadd.f32 %v431, -0.28449672
    %v440 = vadd.f32 %v432, -0.28449672
    %v441 = vadd.f32 %v433, -0.28449672
    %v442 = vadd.f32 %v434, -0.28449672
    %v443 = vadd.f32 %v435, -0.28449672
    %v444 = vadd.f32 %v436, -0.28449672
    %v445 = vadd.f32 %v437, -0.28449672
    %v446 = vadd.f32 %v438, -0.28449672
    %v447 = vmul.f32 %v439, %v391
    %v448 = vmul.f32 %v440, %v392
    %v449 = vmul.f32 %v441, %v393
    %v450 = vmul.f32 %v442, %v394
    %v451 = vmul.f32 %v443, %v395
    %v452 = vmul.f32 %v444, %v396
    %v453 = vmul.f32 %v445, %v397
    %v454 = vmul.f32 %v446, %v398
    %v455 = vadd.f32 %v447, 0.2548296
    %v456 = vadd.f32 %v448, 0.2548296
    %v457 = vadd.f32 %v449, 0.2548296
    %v458 = vadd.f32 %v450, 0.2548296
    %v459 = vadd.f32 %v451, 0.2548296
    %v460 = vadd.f32 %v452, 0.2548296
    %v461 = vadd.f32 %v453, 0.2548296
    %v462 = vadd.f32 %v454, 0.2548296
    %v463 = vmul.f32 %v455, %v391
    %v464 = vmul.f32 %v456, %v392
    %v465 = vmul.f32 %v457, %v393
    %v466 = vmul.f32 %v458, %v394
    %v467 = vmul.f32 %v459, %v395
    %v468 = vmul.f32 %v460, %v396
    %v469 = vmul.f32 %v461, %v397
    %v470 = vmul.f32 %v462, %v398
    %v471 = vsub.f32 0.0, %v343
    %v472 = vsub.f32 0.0, %v344
    %v473 = vsub.f32 0.0, %v345
    %v474 = vsub.f32 0.0, %v346
    %v475 = vsub.f32 0.0, %v347
    %v476 = vsub.f32 0.0, %v348
    %v477 = vsub.f32 0.0, %v349
    %v478 = vsub.f32 0.0, %v350
    %v479 = vmul.f32 %v471, %v343
    %v480 = vmul.f32 %v472, %v344
    %v481 = vmul.f32 %v473, %v345
    %v482 = vmul.f32 %v474, %v346
    %v483 = vmul.f32 %v475, %v347
    %v484 = vmul.f32 %v476, %v348
    %v485 = vmul.f32 %v477, %v349
    %v486 = vmul.f32 %v478, %v350
    %v487 = vmul.f32 %v479, 1.442695
    %v488 = vpow.pop %v487
    %v489 = vmul.f32 %v480, 1.442695
    %v490 = vpow.pop %v489
    %v491 = vmul.f32 %v481, 1.442695
    %v492 = vpow.pop %v491
    %v493 = vmul.f32 %v482, 1.442695
    %v494 = vpow.pop %v493
    %v495 = vmul.f32 %v483, 1.442695
    %v496 = vpow.pop %v495
    %v497 = vmul.f32 %v484, 1.442695
    %v498 = vpow.pop %v497
    %v499 = vmul.f32 %v485, 1.442695
    %v500 = vpow.pop %v499
    %v501 = vmul.f32 %v486, 1.442695
    %v502 = vpow.pop %v501
    %v503 = vmul.f32 %v463, %v488
    %v504 = vmul.f32 %v464, %v490
    %v505 = vmul.f32 %v465, %v492
    %v506 = vmul.f32 %v466, %v494
    %v507 = vmul.f32 %v467, %v496
    %v508 = vmul.f32 %v468, %v498
    %v509 = vmul.f32 %v469, %v500
    %v510 = vmul.f32 %v470, %v502
    %v511 = vsub.f32 1.0, %v503
    %v512 = vsub.f32 1.0, %v504
    %v513 = vsub.f32 1.0, %v505
    %v514 = vsub.f32 1.0, %v506
    %v515 = vsub.f32 1.0, %v507
    %v516 = vsub.f32 1.0, %v508
    %v517 = vsub.f32 1.0, %v509
    %v518 = vsub.f32 1.0, %v510
    %vm519 = vcmp.lt.f32.partialorder %v335, 0.0
    %vm520 = vcmp.lt.f32.partialorder %v336, 0.0
    %vm521 = vcmp.lt.f32.partialorder %v337, 0.0
    %vm522 = vcmp.lt.f32.partialorder %v338, 0.0
    %vm523 = vcmp.lt.f32.partialorder %v339, 0.0
    %vm524 = vcmp.lt.f32.partialorder %v340, 0.0
    %vm525 = vcmp.lt.f32.partialorder %v341, 0.0
    %vm526 = vcmp.lt.f32.partialorder %v342, 0.0
    %v527 = vsub.f32 0.0, %v511
    %v528 = vsub.f32 0.0, %v512
    %v529 = vsub.f32 0.0, %v513
    %v530 = vsub.f32 0.0, %v514
    %v531 = vsub.f32 0.0, %v515
    %v532 = vsub.f32 0.0, %v516
    %v533 = vsub.f32 0.0, %v517
    %v534 = vsub.f32 0.0, %v518
    %v535 = vsel %vm519, %v527, %v511
    %v536 = vsel %vm520, %v528, %v512
    %v537 = vsel %vm521, %v529, %v513
    %v538 = vsel %vm522, %v530, %v514
    %v539 = vsel %vm523, %v531, %v515
    %v540 = vsel %vm524, %v532, %v516
    %v541 = vsel %vm525, %v533, %v517
    %v542 = vsel %vm526, %v534, %v518
    %v543 = vadd.f32 %v535, 1.0
    %v544 = vadd.f32 %v536, 1.0
    %v545 = vadd.f32 %v537, 1.0
    %v546 = vadd.f32 %v538, 1.0
    %v547 = vadd.f32 %v539, 1.0
    %v548 = vadd.f32 %v540, 1.0
    %v549 = vadd.f32 %v541, 1.0
    %v550 = vadd.f32 %v542, 1.0
    %v551 = vmul.f32 %v327, %v543
    %v552 = vmul.f32 %v328, %v544
    %v553 = vmul.f32 %v329, %v545
    %v554 = vmul.f32 %v330, %v546
    %v555 = vmul.f32 %v331, %v547
    %v556 = vmul.f32 %v332, %v548
    %v557 = vmul.f32 %v333, %v549
    %v558 = vmul.f32 %v334, %v550
    %v559 = vld [vmem:[#allocation8] sm:$0xff]
    %v560 = vld [vmem:[#allocation8 + $0x8] sm:$0xff]
    %v561 = vld [vmem:[#allocation8 + $0x10] sm:$0xff]
    %v562 = vld [vmem:[#allocation8 + $0x18] sm:$0xff]
    %v563 = vld [vmem:[#allocation8 + $0x20] sm:$0xff]
    %v564 = vld [vmem:[#allocation8 + $0x28] sm:$0xff]
    %v565 = vld [vmem:[#allocation8 + $0x30] sm:$0xff]
    %v566 = vld [vmem:[#allocation8 + $0x38] sm:$0xff]
    %v567 = vld [vmem:[#allocation8 + $0x40] sm:$0xff]
    %v568 = vld [vmem:[#allocation8 + $0x48] sm:$0xff]
    %v569 = vld [vmem:[#allocation8 + $0x50] sm:$0xff]
    %v570 = vld [vmem:[#allocation8 + $0x58] sm:$0xff]
    %v571 = vld [vmem:[#allocation8 + $0x60] sm:$0xff]
    %v572 = vld [vmem:[#allocation8 + $0x68] sm:$0xff]
    %v573 = vld [vmem:[#allocation8 + $0x70] sm:$0xff]
    %v574 = vld [vmem:[#allocation8 + $0x78] sm:$0xff]
    %v575 = vld [vmem:[#allocation8 + $0x80] sm:$0xff]
    %v576 = vld [vmem:[#allocation8 + $0x88] sm:$0xff]
    %v577 = vld [vmem:[#allocation8 + $0x90] sm:$0xff]
    %v578 = vld [vmem:[#allocation8 + $0x98] sm:$0xff]
    %v579 = vld [vmem:[#allocation8 + $0xa0] sm:$0xff]
    %v580 = vld [vmem:[#allocation8 + $0xa8] sm:$0xff]
    %v581 = vld [vmem:[#allocation8 + $0xb0] sm:$0xff]
    %v582 = vld [vmem:[#allocation8 + $0xb8] sm:$0xff]
    %v583 = vld [vmem:[#allocation8 + $0xc0] sm:$0xff]
    %v584 = vld [vmem:[#allocation8 + $0xc8] sm:$0xff]
    %v585 = vld [vmem:[#allocation8 + $0xd0] sm:$0xff]
    %v586 = vld [vmem:[#allocation8 + $0xd8] sm:$0xff]
    %v587 = vld [vmem:[#allocation8 + $0xe0] sm:$0xff]
    %v588 = vld [vmem:[#allocation8 + $0xe8] sm:$0xff]
    %v589 = vld [vmem:[#allocation8 + $0xf0] sm:$0xff]
    %v590 = vld [vmem:[#allocation8 + $0xf8] sm:$0xff]
    %v591 = vld [vmem:[#allocation8 + $0x100] sm:$0xff]
    %v592 = vld [vmem:[#allocation8 + $0x108] sm:$0xff]
    %v593 = vld [vmem:[#allocation8 + $0x110] sm:$0xff]
    %v594 = vld [vmem:[#allocation8 + $0x118] sm:$0xff]
    %v595 = vld [vmem:[#allocation8 + $0x120] sm:$0xff]
    %v596 = vld [vmem:[#allocation8 + $0x128] sm:$0xff]
    %v597 = vld [vmem:[#allocation8 + $0x130] sm:$0xff]
    %v598 = vld [vmem:[#allocation8 + $0x138] sm:$0xff]
    %v599 = vld [vmem:[#allocation8 + $0x140] sm:$0xff]
    %v600 = vld [vmem:[#allocation8 + $0x148] sm:$0xff]
    %v601 = vld [vmem:[#allocation8 + $0x150] sm:$0xff]
    %v602 = vld [vmem:[#allocation8 + $0x158] sm:$0xff]
    %v603 = vld [vmem:[#allocation8 + $0x160] sm:$0xff]
    %v604 = vld [vmem:[#allocation8 + $0x168] sm:$0xff]
    %v605 = vld [vmem:[#allocation8 + $0x170] sm:$0xff]
    %v606 = vld [vmem:[#allocation8 + $0x178] sm:$0xff]
    %v607 = vld [vmem:[#allocation8 + $0x180] sm:$0xff]
    %v608 = vld [vmem:[#allocation8 + $0x188] sm:$0xff]
    %v609 = vld [vmem:[#allocation8 + $0x190] sm:$0xff]
    %v610 = vld [vmem:[#allocation8 + $0x198] sm:$0xff]
    %v611 = vld [vmem:[#allocation8 + $0x1a0] sm:$0xff]
    %v612 = vld [vmem:[#allocation8 + $0x1a8] sm:$0xff]
    %v613 = vld [vmem:[#allocation8 + $0x1b0] sm:$0xff]
    %v614 = vld [vmem:[#allocation8 + $0x1b8] sm:$0xff]
    %v615 = vld [vmem:[#allocation8 + $0x1c0] sm:$0xff]
    %v616 = vld [vmem:[#allocation8 + $0x1c8] sm:$0xff]
    %v617 = vld [vmem:[#allocation8 + $0x1d0] sm:$0xff]
    %v618 = vld [vmem:[#allocation8 + $0x1d8] sm:$0xff]
    %v619 = vld [vmem:[#allocation8 + $0x1e0] sm:$0xff]
    %v620 = vld [vmem:[#allocation8 + $0x1e8] sm:$0xff]
    %v621 = vld [vmem:[#allocation8 + $0x1f0] sm:$0xff]
    %v622 = vld [vmem:[#allocation8 + $0x1f8] sm:$0xff]
    %v623 = vld [vmem:[#allocation5 + $0x20] sm:$0xff]
    %v624 = vld [vmem:[#allocation5 + $0x28] sm:$0xff]
    %v625 = vld [vmem:[#allocation5 + $0x30] sm:$0xff]
    %v626 = vld [vmem:[#allocation5 + $0x38] sm:$0xff]
    %v627 = vld [vmem:[#allocation5 + $0xe0] sm:$0xff]
    %v628 = vld [vmem:[#allocation5 + $0xe8] sm:$0xff]
    %v629 = vld [vmem:[#allocation5 + $0xf0] sm:$0xff]
    %v630 = vld [vmem:[#allocation5 + $0xf8] sm:$0xff]
    %v631 = vld [vmem:[#allocation5 + $0x1a0] sm:$0xff]
    %v632 = vld [vmem:[#allocation5 + $0x1a8] sm:$0xff]
    %v633 = vld [vmem:[#allocation5 + $0x1b0] sm:$0xff]
    %v634 = vld [vmem:[#allocation5 + $0x1b8] sm:$0xff]
    %v635 = vld [vmem:[#allocation5 + $0x260] sm:$0xff]
    %v636 = vld [vmem:[#allocation5 + $0x268] sm:$0xff]
    %v637 = vld [vmem:[#allocation5 + $0x270] sm:$0xff]
    %v638 = vld [vmem:[#allocation5 + $0x278] sm:$0xff]
    %v639 = vld [vmem:[#allocation5 + $0x320] sm:$0xff]
    %v640 = vld [vmem:[#allocation5 + $0x328] sm:$0xff]
    %v641 = vld [vmem:[#allocation5 + $0x330] sm:$0xff]
    %v642 = vld [vmem:[#allocation5 + $0x338] sm:$0xff]
    %v643 = vld [vmem:[#allocation5 + $0x3e0] sm:$0xff]
    %v644 = vld [vmem:[#allocation5 + $0x3e8] sm:$0xff]
    %v645 = vld [vmem:[#allocation5 + $0x3f0] sm:$0xff]
    %v646 = vld [vmem:[#allocation5 + $0x3f8] sm:$0xff]
    %v647 = vld [vmem:[#allocation5 + $0x4a0] sm:$0xff]
    %v648 = vld [vmem:[#allocation5 + $0x4a8] sm:$0xff]
    %v649 = vld [vmem:[#allocation5 + $0x4b0] sm:$0xff]
    %v650 = vld [vmem:[#allocation5 + $0x4b8] sm:$0xff]
    %v651 = vld [vmem:[#allocation5 + $0x560] sm:$0xff]
    %v652 = vld [vmem:[#allocation5 + $0x568] sm:$0xff]
    %v653 = vld [vmem:[#allocation5 + $0x570] sm:$0xff]
    %v654 = vld [vmem:[#allocation5 + $0x578] sm:$0xff]
    %v655 = vld [vmem:[#allocation5 + $0x620] sm:$0xff]
    %v656 = vld [vmem:[#allocation5 + $0x628] sm:$0xff]
    %v657 = vld [vmem:[#allocation5 + $0x630] sm:$0xff]
    %v658 = vld [vmem:[#allocation5 + $0x638] sm:$0xff]
    %v659 = vld [vmem:[#allocation5 + $0x6e0] sm:$0xff]
    %v660 = vld [vmem:[#allocation5 + $0x6e8] sm:$0xff]
    %v661 = vld [vmem:[#allocation5 + $0x6f0] sm:$0xff]
    %v662 = vld [vmem:[#allocation5 + $0x6f8] sm:$0xff]
    %v663 = vld [vmem:[#allocation5 + $0x7a0] sm:$0xff]
    %v664 = vld [vmem:[#allocation5 + $0x7a8] sm:$0xff]
    %v665 = vld [vmem:[#allocation5 + $0x7b0] sm:$0xff]
    %v666 = vld [vmem:[#allocation5 + $0x7b8] sm:$0xff]
    %v667 = vld [vmem:[#allocation5 + $0x860] sm:$0xff]
    %v668 = vld [vmem:[#allocation5 + $0x868] sm:$0xff]
    %v669 = vld [vmem:[#allocation5 + $0x870] sm:$0xff]
    %v670 = vld [vmem:[#allocation5 + $0x878] sm:$0xff]
    %v671 = vld [vmem:[#allocation5 + $0x920] sm:$0xff]
    %v672 = vld [vmem:[#allocation5 + $0x928] sm:$0xff]
    %v673 = vld [vmem:[#allocation5 + $0x930] sm:$0xff]
    %v674 = vld [vmem:[#allocation5 + $0x938] sm:$0xff]
    %v675 = vld [vmem:[#allocation5 + $0x9e0] sm:$0xff]
    %v676 = vld [vmem:[#allocation5 + $0x9e8] sm:$0xff]
    %v677 = vld [vmem:[#allocation5 + $0x9f0] sm:$0xff]
    %v678 = vld [vmem:[#allocation5 + $0x9f8] sm:$0xff]
    %v679 = vld [vmem:[#allocation5 + $0xaa0] sm:$0xff]
    %v680 = vld [vmem:[#allocation5 + $0xaa8] sm:$0xff]
    %v681 = vld [vmem:[#allocation5 + $0xab0] sm:$0xff]
    %v682 = vld [vmem:[#allocation5 + $0xab8] sm:$0xff]
    %v683 = vld [vmem:[#allocation5 + $0xb60] sm:$0xff]
    %v684 = vld [vmem:[#allocation5 + $0xb68] sm:$0xff]
    %v685 = vld [vmem:[#allocation5 + $0xb70] sm:$0xff]
    %v686 = vld [vmem:[#allocation5 + $0xb78] sm:$0xff]
    %v687 = vld [vmem:[#allocation7 + $0x4] sm:$0xf]
    %v689 = vlaneseq
    %v690 = vshrl.u32 %v689, 7
    %v691 = vsub.s32 0, %v690
    %v692 = vrot.slane %v687, %v691
    %v693 = vlaneseq
    %v694 = vshrl.u32 %v693, 7
    %v695 = vsub.s32 1, %v694
    %v696 = vrot.slane %v687, %v695
    %v697 = vlaneseq
    %v698 = vshrl.u32 %v697, 7
    %v699 = vsub.s32 2, %v698
    %v700 = vrot.slane %v687, %v699
    %v701 = vlaneseq
    %v702 = vshrl.u32 %v701, 7
    %v703 = vsub.s32 3, %v702
    %v704 = vrot.slane %v687, %v703
    %709 = vmatprep.subr.mxu0 %v624
    %710 = vmatpush1.msra.mxu0 %v623
    %711 = vmatprep.subr.mxu0 %v628
    %712 = vmatpush1.msra.mxu0 %v627
    %713 = vmatprep.subr.mxu0 %v632
    %714 = vmatpush1.msra.mxu0 %v631
    %715 = vmatprep.subr.mxu0 %v636
    %716 = vmatpush1.msra.mxu0 %v635
    %717 = vmatprep.subr.mxu0 %v640
    %718 = vmatpush1.msra.mxu0 %v639
    %719 = vmatprep.subr.mxu0 %v644
    %720 = vmatpush1.msra.mxu0 %v643
    %721 = vmatprep.subr.mxu0 %v648
    %722 = vmatpush1.msra.mxu0 %v647
    %723 = vmatprep.subr.mxu0 %v652
    %724 = vmatpush1.msra.mxu0 %v651
    %725 = vmatprep.subr.mxu0 %v656
    %726 = vmatpush1.msra.mxu0 %v655
    %727 = vmatprep.subr.mxu0 %v660
    %728 = vmatpush1.msra.mxu0 %v659
    %729 = vmatprep.subr.mxu0 %v664
    %730 = vmatpush1.msra.mxu0 %v663
    %731 = vmatprep.subr.mxu0 %v668
    %732 = vmatpush1.msra.mxu0 %v667
    %733 = vmatprep.subr.mxu0 %v672
    %734 = vmatpush1.msra.mxu0 %v671
    %735 = vmatprep.subr.mxu0 %v676
    %736 = vmatpush1.msra.mxu0 %v675
    %737 = vmatprep.subr.mxu0 %v680
    %738 = vmatpush1.msra.mxu0 %v679
    %739 = vmatprep.subr.mxu0 %v684
    %740 = vmatpush1.msra.mxu0 %v683
    %741 = vmatprep.subr.mxu0 0.0
    %742 = vmatpush1.msra.mxu0 0.0
    %743 = vmatprep.subr.mxu0 0.0
    %744 = vmatpush1.msra.mxu0 0.0
    %745 = vmatprep.subr.mxu0 0.0
    %746 = vmatpush1.msra.mxu0 0.0
    %747 = vmatprep.subr.mxu0 0.0
    %748 = vmatpush1.msra.mxu0 0.0
    %749 = vmatprep.subr.mxu0 0.0
    %750 = vmatpush1.msra.mxu0 0.0
    %751 = vmatprep.subr.mxu0 0.0
    %752 = vmatpush1.msra.mxu0 0.0
    %753 = vmatprep.subr.mxu0 0.0
    %754 = vmatpush1.msra.mxu0 0.0
    %755 = vmatprep.subr.mxu0 0.0
    %756 = vmatpush1.msra.mxu0 0.0
    %757 = vmatprep.subr.mxu0 0.0
    %758 = vmatpush1.msra.mxu0 0.0
    %759 = vmatprep.subr.mxu0 0.0
    %760 = vmatpush1.msra.mxu0 0.0
    %761 = vmatprep.subr.mxu0 0.0
    %762 = vmatpush1.msra.mxu0 0.0
    %763 = vmatprep.subr.mxu0 0.0
    %764 = vmatpush1.msra.mxu0 0.0
    %765 = vmatprep.subr.mxu0 0.0
    %766 = vmatpush1.msra.mxu0 0.0
    %767 = vmatprep.subr.mxu0 0.0
    %768 = vmatpush1.msra.mxu0 0.0
    %769 = vmatprep.subr.mxu0 0.0
    %770 = vmatpush1.msra.mxu0 0.0
    %771 = vmatprep.subr.mxu0 0.0
    %772 = vmatpush1.msra.mxu0 0.0
    %773 = vmatprep.mubr.f32.mxu0 0.0
    %774 = vmatmul.mubr.f32.gmra.mrb[0].mxu0 %v85
    %v775 = vpop.f32.mrb[0].mxu0
    %v776 = vadd.f32 %v692, %v775
    %v777 = vpop.f32.mrb[0].mxu0
    %v778 = vadd.f32 %v696, %v777
    %779 = vmatprep.mubr.f32.mxu0 0.0
    %780 = vmatmul.mubr.f32.gmra.mrb[0].mxu0 %v86
    %v781 = vpop.f32.mrb[0].mxu0
    %v782 = vadd.f32 %v692, %v781
    %v783 = vpop.f32.mrb[0].mxu0
    %v784 = vadd.f32 %v696, %v783
    %785 = vdwg.mxu0
    %786 = vmatprep.subr.mxu0 %v626
    %787 = vmatpush1.msra.mxu0 %v625
    %788 = vmatprep.subr.mxu0 %v630
    %789 = vmatpush1.msra.mxu0 %v629
    %790 = vmatprep.subr.mxu0 %v634
    %791 = vmatpush1.msra.mxu0 %v633
    %792 = vmatprep.subr.mxu0 %v638
    %793 = vmatpush1.msra.mxu0 %v637
    %794 = vmatprep.subr.mxu0 %v642
    %795 = vmatpush1.msra.mxu0 %v641
    %796 = vmatprep.subr.mxu0 %v646
    %797 = vmatpush1.msra.mxu0 %v645
    %798 = vmatprep.subr.mxu0 %v650
    %799 = vmatpush1.msra.mxu0 %v649
    %800 = vmatprep.subr.mxu0 %v654
    %801 = vmatpush1.msra.mxu0 %v653
    %802 = vmatprep.subr.mxu0 %v658
    %803 = vmatpush1.msra.mxu0 %v657
    %804 = vmatprep.subr.mxu0 %v662
    %805 = vmatpush1.msra.mxu0 %v661
    %806 = vmatprep.subr.mxu0 %v666
    %807 = vmatpush1.msra.mxu0 %v665
    %808 = vmatprep.subr.mxu0 %v670
    %809 = vmatpush1.msra.mxu0 %v669
    %810 = vmatprep.subr.mxu0 %v674
    %811 = vmatpush1.msra.mxu0 %v673
    %812 = vmatprep.subr.mxu0 %v678
    %813 = vmatpush1.msra.mxu0 %v677
    %814 = vmatprep.subr.mxu0 %v682
    %815 = vmatpush1.msra.mxu0 %v681
    %816 = vmatprep.subr.mxu0 %v686
    %817 = vmatpush1.msra.mxu0 %v685
    %818 = vmatprep.subr.mxu0 0.0
    %819 = vmatpush1.msra.mxu0 0.0
    %820 = vmatprep.subr.mxu0 0.0
    %821 = vmatpush1.msra.mxu0 0.0
    %822 = vmatprep.subr.mxu0 0.0
    %823 = vmatpush1.msra.mxu0 0.0
    %824 = vmatprep.subr.mxu0 0.0
    %825 = vmatpush1.msra.mxu0 0.0
    %826 = vmatprep.subr.mxu0 0.0
    %827 = vmatpush1.msra.mxu0 0.0
    %828 = vmatprep.subr.mxu0 0.0
    %829 = vmatpush1.msra.mxu0 0.0
    %830 = vmatprep.subr.mxu0 0.0
    %831 = vmatpush1.msra.mxu0 0.0
    %832 = vmatprep.subr.mxu0 0.0
    %833 = vmatpush1.msra.mxu0 0.0
    %834 = vmatprep.subr.mxu0 0.0
    %835 = vmatpush1.msra.mxu0 0.0
    %836 = vmatprep.subr.mxu0 0.0
    %837 = vmatpush1.msra.mxu0 0.0
    %838 = vmatprep.subr.mxu0 0.0
    %839 = vmatpush1.msra.mxu0 0.0
    %840 = vmatprep.subr.mxu0 0.0
    %841 = vmatpush1.msra.mxu0 0.0
    %842 = vmatprep.subr.mxu0 0.0
    %843 = vmatpush1.msra.mxu0 0.0
    %844 = vmatprep.subr.mxu0 0.0
    %845 = vmatpush1.msra.mxu0 0.0
    %846 = vmatprep.subr.mxu0 0.0
    %847 = vmatpush1.msra.mxu0 0.0
    %848 = vmatprep.subr.mxu0 0.0
    %849 = vmatpush1.msra.mxu0 0.0
    %850 = vmatprep.mubr.f32.mxu0 0.0
    %851 = vmatmul.mubr.f32.gmra.mrb[0].mxu0 %v85
    %v852 = vpop.f32.mrb[0].mxu0
    %v853 = vadd.f32 %v700, %v852
    %v854 = vpop.f32.mrb[0].mxu0
    %v855 = vadd.f32 %v704, %v854
    %856 = vmatprep.mubr.f32.mxu0 0.0
    %857 = vmatmul.mubr.f32.gmra.mrb[0].mxu0 %v86
    %v858 = vpop.f32.mrb[0].mxu0
    %v859 = vadd.f32 %v700, %v858
    %v860 = vpop.f32.mrb[0].mxu0
    %v861 = vadd.f32 %v704, %v860
    %862 = vdwg.mxu0
    %v863 = vmul.f32 %v776, 0.5
    %v864 = vmul.f32 %v778, 0.5
    %v865 = vmul.f32 %v853, 0.5
    %v866 = vmul.f32 %v855, 0.5
    %v867 = vmul.f32 %v782, 0.5
    %v868 = vmul.f32 %v784, 0.5
    %v869 = vmul.f32 %v859, 0.5
    %v870 = vmul.f32 %v861, 0.5
    %v871 = vmul.f32 %v776, 0.70710677
    %v872 = vmul.f32 %v778, 0.70710677
    %v873 = vmul.f32 %v853, 0.70710677
    %v874 = vmul.f32 %v855, 0.70710677
    %v875 = vmul.f32 %v782, 0.70710677
    %v876 = vmul.f32 %v784, 0.70710677
    %v877 = vmul.f32 %v859, 0.70710677
    %v878 = vmul.f32 %v861, 0.70710677
    %v879 = vand.u32 2147483647, %v871
    %v880 = vand.u32 2147483647, %v872
    %v881 = vand.u32 2147483647, %v873
    %v882 = vand.u32 2147483647, %v874
    %v883 = vand.u32 2147483647, %v875
    %v884 = vand.u32 2147483647, %v876
    %v885 = vand.u32 2147483647, %v877
    %v886 = vand.u32 2147483647, %v878
    %v887 = vmul.f32 %v879, 0.3275911
    %v888 = vmul.f32 %v880, 0.3275911
    %v889 = vmul.f32 %v881, 0.3275911
    %v890 = vmul.f32 %v882, 0.3275911
    %v891 = vmul.f32 %v883, 0.3275911
    %v892 = vmul.f32 %v884, 0.3275911
    %v893 = vmul.f32 %v885, 0.3275911
    %v894 = vmul.f32 %v886, 0.3275911
    %v895 = vadd.f32 %v887, 1.0
    %v896 = vadd.f32 %v888, 1.0
    %v897 = vadd.f32 %v889, 1.0
    %v898 = vadd.f32 %v890, 1.0
    %v899 = vadd.f32 %v891, 1.0
    %v900 = vadd.f32 %v892, 1.0
    %v901 = vadd.f32 %v893, 1.0
    %v902 = vadd.f32 %v894, 1.0
    %v903 = vrcp.pop %v895
    %v904 = vrcp.pop %v896
    %v905 = vrcp.pop %v897
    %v906 = vrcp.pop %v898
    %v907 = vrcp.pop %v899
    %v908 = vrcp.pop %v900
    %v909 = vrcp.pop %v901
    %v910 = vrcp.pop %v902
    %v911 = vmul.f32 %v895, %v903
    %v912 = vmul.f32 %v896, %v904
    %v913 = vmul.f32 %v897, %v905
    %v914 = vmul.f32 %v898, %v906
    %v915 = vmul.f32 %v899, %v907
    %v916 = vmul.f32 %v900, %v908
    %v917 = vmul.f32 %v901, %v909
    %v918 = vmul.f32 %v902, %v910
    %v919 = vsub.f32 2.0, %v911
    %v920 = vsub.f32 2.0, %v912
    %v921 = vsub.f32 2.0, %v913
    %v922 = vsub.f32 2.0, %v914
    %v923 = vsub.f32 2.0, %v915
    %v924 = vsub.f32 2.0, %v916
    %v925 = vsub.f32 2.0, %v917
    %v926 = vsub.f32 2.0, %v918
    %v927 = vmul.f32 %v903, %v919
    %v928 = vmul.f32 %v904, %v920
    %v929 = vmul.f32 %v905, %v921
    %v930 = vmul.f32 %v906, %v922
    %v931 = vmul.f32 %v907, %v923
    %v932 = vmul.f32 %v908, %v924
    %v933 = vmul.f32 %v909, %v925
    %v934 = vmul.f32 %v910, %v926
    %v935 = vmul.f32 %v927, 1.0614054
    %v936 = vmul.f32 %v928, 1.0614054
    %v937 = vmul.f32 %v929, 1.0614054
    %v938 = vmul.f32 %v930, 1.0614054
    %v939 = vmul.f32 %v931, 1.0614054
    %v940 = vmul.f32 %v932, 1.0614054
    %v941 = vmul.f32 %v933, 1.0614054
    %v942 = vmul.f32 %v934, 1.0614054
    %v943 = vadd.f32 %v935, -1.4531521
    %v944 = vadd.f32 %v936, -1.4531521
    %v945 = vadd.f32 %v937, -1.4531521
    %v946 = vadd.f32 %v938, -1.4531521
    %v947 = vadd.f32 %v939, -1.4531521
    %v948 = vadd.f32 %v940, -1.4531521
    %v949 = vadd.f32 %v941, -1.4531521
    %v950 = vadd.f32 %v942, -1.4531521
    %v951 = vmul.f32 %v943, %v927
    %v952 = vmul.f32 %v944, %v928
    %v953 = vmul.f32 %v945, %v929
    %v954 = vmul.f32 %v946, %v930
    %v955 = vmul.f32 %v947, %v931
    %v956 = vmul.f32 %v948, %v932
    %v957 = vmul.f32 %v949, %v933
    %v958 = vmul.f32 %v950, %v934
    %v959 = vadd.f32 %v951, 1.4214138
    %v960 = vadd.f32 %v952, 1.4214138
    %v961 = vadd.f32 %v953, 1.4214138
    %v962 = vadd.f32 %v954, 1.4214138
    %v963 = vadd.f32 %v955, 1.4214138
    %v964 = vadd.f32 %v956, 1.4214138
    %v965 = vadd.f32 %v957, 1.4214138
    %v966 = vadd.f32 %v958, 1.4214138
    %v967 = vmul.f32 %v959, %v927
    %v968 = vmul.f32 %v960, %v928
    %v969 = vmul.f32 %v961, %v929
    %v970 = vmul.f32 %v962, %v930
    %v971 = vmul.f32 %v963, %v931
    %v972 = vmul.f32 %v964, %v932
    %v973 = vmul.f32 %v965, %v933
    %v974 = vmul.f32 %v966, %v934
    %v975 = vadd.f32 %v967, -0.28449672
    %v976 = vadd.f32 %v968, -0.28449672
    %v977 = vadd.f32 %v969, -0.28449672
    %v978 = vadd.f32 %v970, -0.28449672
    %v979 = vadd.f32 %v971, -0.28449672
    %v980 = vadd.f32 %v972, -0.28449672
    %v981 = vadd.f32 %v973, -0.28449672
    %v982 = vadd.f32 %v974, -0.28449672
    %v983 = vmul.f32 %v975, %v927
    %v984 = vmul.f32 %v976, %v928
    %v985 = vmul.f32 %v977, %v929
    %v986 = vmul.f32 %v978, %v930
    %v987 = vmul.f32 %v979, %v931
    %v988 = vmul.f32 %v980, %v932
    %v989 = vmul.f32 %v981, %v933
    %v990 = vmul.f32 %v982, %v934
    %v991 = vadd.f32 %v983, 0.2548296
    %v992 = vadd.f32 %v984, 0.2548296
    %v993 = vadd.f32 %v985, 0.2548296
    %v994 = vadd.f32 %v986, 0.2548296
    %v995 = vadd.f32 %v987, 0.2548296
    %v996 = vadd.f32 %v988, 0.2548296
    %v997 = vadd.f32 %v989, 0.2548296
    %v998 = vadd.f32 %v990, 0.2548296
    %v999 = vmul.f32 %v991, %v927
    %v1000 = vmul.f32 %v992, %v928
    %v1001 = vmul.f32 %v993, %v929
    %v1002 = vmul.f32 %v994, %v930
    %v1003 = vmul.f32 %v995, %v931
    %v1004 = vmul.f32 %v996, %v932
    %v1005 = vmul.f32 %v997, %v933
    %v1006 = vmul.f32 %v998, %v934
    %v1007 = vsub.f32 0.0, %v879
    %v1008 = vsub.f32 0.0, %v880
    %v1009 = vsub.f32 0.0, %v881
    %v1010 = vsub.f32 0.0, %v882
    %v1011 = vsub.f32 0.0, %v883
    %v1012 = vsub.f32 0.0, %v884
    %v1013 = vsub.f32 0.0, %v885
    %v1014 = vsub.f32 0.0, %v886
    %v1015 = vmul.f32 %v1007, %v879
    %v1016 = vmul.f32 %v1008, %v880
    %v1017 = vmul.f32 %v1009, %v881
    %v1018 = vmul.f32 %v1010, %v882
    %v1019 = vmul.f32 %v1011, %v883
    %v1020 = vmul.f32 %v1012, %v884
    %v1021 = vmul.f32 %v1013, %v885
    %v1022 = vmul.f32 %v1014, %v886
    %v1023 = vmul.f32 %v1015, 1.442695
    %v1024 = vpow.pop %v1023
    %v1025 = vmul.f32 %v1016, 1.442695
    %v1026 = vpow.pop %v1025
    %v1027 = vmul.f32 %v1017, 1.442695
    %v1028 = vpow.pop %v1027
    %v1029 = vmul.f32 %v1018, 1.442695
    %v1030 = vpow.pop %v1029
    %v1031 = vmul.f32 %v1019, 1.442695
    %v1032 = vpow.pop %v1031
    %v1033 = vmul.f32 %v1020, 1.442695
    %v1034 = vpow.pop %v1033
    %v1035 = vmul.f32 %v1021, 1.442695
    %v1036 = vpow.pop %v1035
    %v1037 = vmul.f32 %v1022, 1.442695
    %v1038 = vpow.pop %v1037
    %v1039 = vmul.f32 %v999, %v1024
    %v1040 = vmul.f32 %v1000, %v1026
    %v1041 = vmul.f32 %v1001, %v1028
    %v1042 = vmul.f32 %v1002, %v1030
    %v1043 = vmul.f32 %v1003, %v1032
    %v1044 = vmul.f32 %v1004, %v1034
    %v1045 = vmul.f32 %v1005, %v1036
    %v1046 = vmul.f32 %v1006, %v1038
    %v1047 = vsub.f32 1.0, %v1039
    %v1048 = vsub.f32 1.0, %v1040
    %v1049 = vsub.f32 1.0, %v1041
    %v1050 = vsub.f32 1.0, %v1042
    %v1051 = vsub.f32 1.0, %v1043
    %v1052 = vsub.f32 1.0, %v1044
    %v1053 = vsub.f32 1.0, %v1045
    %v1054 = vsub.f32 1.0, %v1046
    %vm1055 = vcmp.lt.f32.partialorder %v871, 0.0
    %vm1056 = vcmp.lt.f32.partialorder %v872, 0.0
    %vm1057 = vcmp.lt.f32.partialorder %v873, 0.0
    %vm1058 = vcmp.lt.f32.partialorder %v874, 0.0
    %vm1059 = vcmp.lt.f32.partialorder %v875, 0.0
    %vm1060 = vcmp.lt.f32.partialorder %v876, 0.0
    %vm1061 = vcmp.lt.f32.partialorder %v877, 0.0
    %vm1062 = vcmp.lt.f32.partialorder %v878, 0.0
    %v1063 = vsub.f32 0.0, %v1047
    %v1064 = vsub.f32 0.0, %v1048
    %v1065 = vsub.f32 0.0, %v1049
    %v1066 = vsub.f32 0.0, %v1050
    %v1067 = vsub.f32 0.0, %v1051
    %v1068 = vsub.f32 0.0, %v1052
    %v1069 = vsub.f32 0.0, %v1053
    %v1070 = vsub.f32 0.0, %v1054
    %v1071 = vsel %vm1055, %v1063, %v1047
    %v1072 = vsel %vm1056, %v1064, %v1048
    %v1073 = vsel %vm1057, %v1065, %v1049
    %v1074 = vsel %vm1058, %v1066, %v1050
    %v1075 = vsel %vm1059, %v1067, %v1051
    %v1076 = vsel %vm1060, %v1068, %v1052
    %v1077 = vsel %vm1061, %v1069, %v1053
    %v1078 = vsel %vm1062, %v1070, %v1054
    %v1079 = vadd.f32 %v1071, 1.0
    %v1080 = vadd.f32 %v1072, 1.0
    %v1081 = vadd.f32 %v1073, 1.0
    %v1082 = vadd.f32 %v1074, 1.0
    %v1083 = vadd.f32 %v1075, 1.0
    %v1084 = vadd.f32 %v1076, 1.0
    %v1085 = vadd.f32 %v1077, 1.0
    %v1086 = vadd.f32 %v1078, 1.0
    %v1087 = vmul.f32 %v863, %v1079
    %v1088 = vmul.f32 %v864, %v1080
    %v1089 = vmul.f32 %v865, %v1081
    %v1090 = vmul.f32 %v866, %v1082
    %v1091 = vmul.f32 %v867, %v1083
    %v1092 = vmul.f32 %v868, %v1084
    %v1093 = vmul.f32 %v869, %v1085
    %v1094 = vmul.f32 %v870, %v1086
    %v1095 = vld [vmem:[#allocation8 + $0x200] sm:$0xff]
    %v1096 = vld [vmem:[#allocation8 + $0x208] sm:$0xff]
    %v1097 = vld [vmem:[#allocation8 + $0x210] sm:$0xff]
    %v1098 = vld [vmem:[#allocation8 + $0x218] sm:$0xff]
    %v1099 = vld [vmem:[#allocation8 + $0x220] sm:$0xff]
    %v1100 = vld [vmem:[#allocation8 + $0x228] sm:$0xff]
    %v1101 = vld [vmem:[#allocation8 + $0x230] sm:$0xff]
    %v1102 = vld [vmem:[#allocation8 + $0x238] sm:$0xff]
    %v1103 = vld [vmem:[#allocation8 + $0x240] sm:$0xff]
    %v1104 = vld [vmem:[#allocation8 + $0x248] sm:$0xff]
    %v1105 = vld [vmem:[#allocation8 + $0x250] sm:$0xff]
    %v1106 = vld [vmem:[#allocation8 + $0x258] sm:$0xff]
    %v1107 = vld [vmem:[#allocation8 + $0x260] sm:$0xff]
    %v1108 = vld [vmem:[#allocation8 + $0x268] sm:$0xff]
    %v1109 = vld [vmem:[#allocation8 + $0x270] sm:$0xff]
    %v1110 = vld [vmem:[#allocation8 + $0x278] sm:$0xff]
    %v1111 = vld [vmem:[#allocation8 + $0x280] sm:$0xff]
    %v1112 = vld [vmem:[#allocation8 + $0x288] sm:$0xff]
    %v1113 = vld [vmem:[#allocation8 + $0x290] sm:$0xff]
    %v1114 = vld [vmem:[#allocation8 + $0x298] sm:$0xff]
    %v1115 = vld [vmem:[#allocation8 + $0x2a0] sm:$0xff]
    %v1116 = vld [vmem:[#allocation8 + $0x2a8] sm:$0xff]
    %v1117 = vld [vmem:[#allocation8 + $0x2b0] sm:$0xff]
    %v1118 = vld [vmem:[#allocation8 + $0x2b8] sm:$0xff]
    %v1119 = vld [vmem:[#allocation8 + $0x2c0] sm:$0xff]
    %v1120 = vld [vmem:[#allocation8 + $0x2c8] sm:$0xff]
    %v1121 = vld [vmem:[#allocation8 + $0x2d0] sm:$0xff]
    %v1122 = vld [vmem:[#allocation8 + $0x2d8] sm:$0xff]
    %v1123 = vld [vmem:[#allocation8 + $0x2e0] sm:$0xff]
    %v1124 = vld [vmem:[#allocation8 + $0x2e8] sm:$0xff]
    %v1125 = vld [vmem:[#allocation8 + $0x2f0] sm:$0xff]
    %v1126 = vld [vmem:[#allocation8 + $0x2f8] sm:$0xff]
    %v1127 = vld [vmem:[#allocation8 + $0x300] sm:$0xff]
    %v1128 = vld [vmem:[#allocation8 + $0x308] sm:$0xff]
    %v1129 = vld [vmem:[#allocation8 + $0x310] sm:$0xff]
    %v1130 = vld [vmem:[#allocation8 + $0x318] sm:$0xff]
    %v1131 = vld [vmem:[#allocation8 + $0x320] sm:$0xff]
    %v1132 = vld [vmem:[#allocation8 + $0x328] sm:$0xff]
    %v1133 = vld [vmem:[#allocation8 + $0x330] sm:$0xff]
    %v1134 = vld [vmem:[#allocation8 + $0x338] sm:$0xff]
    %v1135 = vld [vmem:[#allocation8 + $0x340] sm:$0xff]
    %v1136 = vld [vmem:[#allocation8 + $0x348] sm:$0xff]
    %v1137 = vld [vmem:[#allocation8 + $0x350] sm:$0xff]
    %v1138 = vld [vmem:[#allocation8 + $0x358] sm:$0xff]
    %v1139 = vld [vmem:[#allocation8 + $0x360] sm:$0xff]
    %v1140 = vld [vmem:[#allocation8 + $0x368] sm:$0xff]
    %v1141 = vld [vmem:[#allocation8 + $0x370] sm:$0xff]
    %v1142 = vld [vmem:[#allocation8 + $0x378] sm:$0xff]
    %v1143 = vld [vmem:[#allocation8 + $0x380] sm:$0xff]
    %v1144 = vld [vmem:[#allocation8 + $0x388] sm:$0xff]
    %v1145 = vld [vmem:[#allocation8 + $0x390] sm:$0xff]
    %v1146 = vld [vmem:[#allocation8 + $0x398] sm:$0xff]
    %v1147 = vld [vmem:[#allocation8 + $0x3a0] sm:$0xff]
    %v1148 = vld [vmem:[#allocation8 + $0x3a8] sm:$0xff]
    %v1149 = vld [vmem:[#allocation8 + $0x3b0] sm:$0xff]
    %v1150 = vld [vmem:[#allocation8 + $0x3b8] sm:$0xff]
    %v1151 = vld [vmem:[#allocation8 + $0x3c0] sm:$0xff]
    %v1152 = vld [vmem:[#allocation8 + $0x3c8] sm:$0xff]
    %v1153 = vld [vmem:[#allocation8 + $0x3d0] sm:$0xff]
    %v1154 = vld [vmem:[#allocation8 + $0x3d8] sm:$0xff]
    %v1155 = vld [vmem:[#allocation8 + $0x3e0] sm:$0xff]
    %v1156 = vld [vmem:[#allocation8 + $0x3e8] sm:$0xff]
    %v1157 = vld [vmem:[#allocation8 + $0x3f0] sm:$0xff]
    %v1158 = vld [vmem:[#allocation8 + $0x3f8] sm:$0xff]
    %1159 = vmatprep.subr.mxu0 0.0
    %1160 = vmatpush1.msra.mxu0 %v1095
    %1161 = vmatprep.subr.mxu0 0.0
    %1162 = vmatpush1.msra.mxu0 %v1096
    %1163 = vmatprep.subr.mxu0 0.0
    %1164 = vmatpush1.msra.mxu0 %v1097
    %1165 = vmatprep.subr.mxu0 0.0
    %1166 = vmatpush1.msra.mxu0 %v1098
    %1167 = vmatprep.subr.mxu0 0.0
    %1168 = vmatpush1.msra.mxu0 %v1099
    %1169 = vmatprep.subr.mxu0 0.0
    %1170 = vmatpush1.msra.mxu0 %v1100
    %1171 = vmatprep.subr.mxu0 0.0
    %1172 = vmatpush1.msra.mxu0 %v1101
    %1173 = vmatprep.subr.mxu0 0.0
    %1174 = vmatpush1.msra.mxu0 %v1102
    %1175 = vmatprep.subr.mxu0 0.0
    %1176 = vmatpush1.msra.mxu0 %v1103
    %1177 = vmatprep.subr.mxu0 0.0
    %1178 = vmatpush1.msra.mxu0 %v1104
    %1179 = vmatprep.subr.mxu0 0.0
    %1180 = vmatpush1.msra.mxu0 %v1105
    %1181 = vmatprep.subr.mxu0 0.0
    %1182 = vmatpush1.msra.mxu0 %v1106
    %1183 = vmatprep.subr.mxu0 0.0
    %1184 = vmatpush1.msra.mxu0 %v1107
    %1185 = vmatprep.subr.mxu0 0.0
    %1186 = vmatpush1.msra.mxu0 %v1108
    %1187 = vmatprep.subr.mxu0 0.0
    %1188 = vmatpush1.msra.mxu0 %v1109
    %1189 = vmatprep.subr.mxu0 0.0
    %1190 = vmatpush1.msra.mxu0 %v1110
    %1191 = vmatprep.subr.mxu0 0.0
    %1192 = vmatpush1.msra.mxu0 %v1111
    %1193 = vmatprep.subr.mxu0 0.0
    %1194 = vmatpush1.msra.mxu0 %v1112
    %1195 = vmatprep.subr.mxu0 0.0
    %1196 = vmatpush1.msra.mxu0 %v1113
    %1197 = vmatprep.subr.mxu0 0.0
    %1198 = vmatpush1.msra.mxu0 %v1114
    %1199 = vmatprep.subr.mxu0 0.0
    %1200 = vmatpush1.msra.mxu0 %v1115
    %1201 = vmatprep.subr.mxu0 0.0
    %1202 = vmatpush1.msra.mxu0 %v1116
    %1203 = vmatprep.subr.mxu0 0.0
    %1204 = vmatpush1.msra.mxu0 %v1117
    %1205 = vmatprep.subr.mxu0 0.0
    %1206 = vmatpush1.msra.mxu0 %v1118
    %1207 = vmatprep.subr.mxu0 0.0
    %1208 = vmatpush1.msra.mxu0 %v1119
    %1209 = vmatprep.subr.mxu0 0.0
    %1210 = vmatpush1.msra.mxu0 %v1120
    %1211 = vmatprep.subr.mxu0 0.0
    %1212 = vmatpush1.msra.mxu0 %v1121
    %1213 = vmatprep.subr.mxu0 0.0
    %1214 = vmatpush1.msra.mxu0 %v1122
    %1215 = vmatprep.subr.mxu0 0.0
    %1216 = vmatpush1.msra.mxu0 %v1123
    %1217 = vmatprep.subr.mxu0 0.0
    %1218 = vmatpush1.msra.mxu0 %v1124
    %1219 = vmatprep.subr.mxu0 0.0
    %1220 = vmatpush1.msra.mxu0 %v1125
    %1221 = vmatprep.subr.mxu0 0.0
    %1222 = vmatpush1.msra.mxu0 %v1126
    %1223 = vmatprep.mubr.f32.mxu0 %v1088
    %1224 = vmatmul.mubr.f32.gmra.mrb[0].mxu0 %v1087
    %v1225 = vpop.f32.mrb[0].mxu0
    %v1226 = vadd.f32 0.0, %v1225
    %v1227 = vpop.f32.mrb[0].mxu0
    %1228 = vmatprep.mubr.f32.mxu0 %v1092
    %1229 = vmatmul.mubr.f32.gmra.mrb[0].mxu0 %v1091
    %v1230 = vpop.f32.mrb[0].mxu0
    %v1231 = vadd.f32 0.0, %v1230
    %v1232 = vpop.f32.mrb[0].mxu0
    %1233 = vdwg.mxu0
    %1234 = vmatprep.subr.mxu0 0.0
    %1235 = vmatpush1.msra.mxu0 %v1127
    %1236 = vmatprep.subr.mxu0 0.0
    %1237 = vmatpush1.msra.mxu0 %v1128
    %1238 = vmatprep.subr.mxu0 0.0
    %1239 = vmatpush1.msra.mxu0 %v1129
    %1240 = vmatprep.subr.mxu0 0.0
    %1241 = vmatpush1.msra.mxu0 %v1130
    %1242 = vmatprep.subr.mxu0 0.0
    %1243 = vmatpush1.msra.mxu0 %v1131
    %1244 = vmatprep.subr.mxu0 0.0
    %1245 = vmatpush1.msra.mxu0 %v1132
    %1246 = vmatprep.subr.mxu0 0.0
    %1247 = vmatpush1.msra.mxu0 %v1133
    %1248 = vmatprep.subr.mxu0 0.0
    %1249 = vmatpush1.msra.mxu0 %v1134
    %1250 = vmatprep.subr.mxu0 0.0
    %1251 = vmatpush1.msra.mxu0 %v1135
    %1252 = vmatprep.subr.mxu0 0.0
    %1253 = vmatpush1.msra.mxu0 %v1136
    %1254 = vmatprep.subr.mxu0 0.0
    %1255 = vmatpush1.msra.mxu0 %v1137
    %1256 = vmatprep.subr.mxu0 0.0
    %1257 = vmatpush1.msra.mxu0 %v1138
    %1258 = vmatprep.subr.mxu0 0.0
    %1259 = vmatpush1.msra.mxu0 %v1139
    %1260 = vmatprep.subr.mxu0 0.0
    %1261 = vmatpush1.msra.mxu0 %v1140
    %1262 = vmatprep.subr.mxu0 0.0
    %1263 = vmatpush1.msra.mxu0 %v1141
    %1264 = vmatprep.subr.mxu0 0.0
    %1265 = vmatpush1.msra.mxu0 %v1142
    %1266 = vmatprep.subr.mxu0 0.0
    %1267 = vmatpush1.msra.mxu0 %v1143
    %1268 = vmatprep.subr.mxu0 0.0
    %1269 = vmatpush1.msra.mxu0 %v1144
    %1270 = vmatprep.subr.mxu0 0.0
    %1271 = vmatpush1.msra.mxu0 %v1145
    %1272 = vmatprep.subr.mxu0 0.0
    %1273 = vmatpush1.msra.mxu0 %v1146
    %1274 = vmatprep.subr.mxu0 0.0
    %1275 = vmatpush1.msra.mxu0 %v1147
    %1276 = vmatprep.subr.mxu0 0.0
    %1277 = vmatpush1.msra.mxu0 %v1148
    %1278 = vmatprep.subr.mxu0 0.0
    %1279 = vmatpush1.msra.mxu0 %v1149
    %1280 = vmatprep.subr.mxu0 0.0
    %1281 = vmatpush1.msra.mxu0 %v1150
    %1282 = vmatprep.subr.mxu0 0.0
    %1283 = vmatpush1.msra.mxu0 %v1151
    %1284 = vmatprep.subr.mxu0 0.0
    %1285 = vmatpush1.msra.mxu0 %v1152
    %1286 = vmatprep.subr.mxu0 0.0
    %1287 = vmatpush1.msra.mxu0 %v1153
    %1288 = vmatprep.subr.mxu0 0.0
    %1289 = vmatpush1.msra.mxu0 %v1154
    %1290 = vmatprep.subr.mxu0 0.0
    %1291 = vmatpush1.msra.mxu0 %v1155
    %1292 = vmatprep.subr.mxu0 0.0
    %1293 = vmatpush1.msra.mxu0 %v1156
    %1294 = vmatprep.subr.mxu0 0.0
    %1295 = vmatpush1.msra.mxu0 %v1157
    %1296 = vmatprep.subr.mxu0 0.0
    %1297 = vmatpush1.msra.mxu0 %v1158
    %1298 = vmatprep.mubr.f32.mxu0 %v1090
    %1299 = vmatmul.mubr.f32.gmra.mrb[0].mxu0 %v1089
    %v1300 = vpop.f32.mrb[0].mxu0
    %v1301 = vadd.f32 %v1226, %v1300
    %v1302 = vpop.f32.mrb[0].mxu0
    %1303 = vmatprep.mubr.f32.mxu0 %v1094
    %1304 = vmatmul.mubr.f32.gmra.mrb[0].mxu0 %v1093
    %v1305 = vpop.f32.mrb[0].mxu0
    %v1306 = vadd.f32 %v1231, %v1305
    %v1307 = vpop.f32.mrb[0].mxu0
    %1308 = vdwg.mxu0
    %1309 = vmatprep.subr.mxu0 0.0
    %1310 = vmatpush1.msra.mxu0 %v559
    %1311 = vmatprep.subr.mxu0 0.0
    %1312 = vmatpush1.msra.mxu0 %v560
    %1313 = vmatprep.subr.mxu0 0.0
    %1314 = vmatpush1.msra.mxu0 %v561
    %1315 = vmatprep.subr.mxu0 0.0
    %1316 = vmatpush1.msra.mxu0 %v562
    %1317 = vmatprep.subr.mxu0 0.0
    %1318 = vmatpush1.msra.mxu0 %v563
    %1319 = vmatprep.subr.mxu0 0.0
    %1320 = vmatpush1.msra.mxu0 %v564
    %1321 = vmatprep.subr.mxu0 0.0
    %1322 = vmatpush1.msra.mxu0 %v565
    %1323 = vmatprep.subr.mxu0 0.0
    %1324 = vmatpush1.msra.mxu0 %v566
    %1325 = vmatprep.subr.mxu0 0.0
    %1326 = vmatpush1.msra.mxu0 %v567
    %1327 = vmatprep.subr.mxu0 0.0
    %1328 = vmatpush1.msra.mxu0 %v568
    %1329 = vmatprep.subr.mxu0 0.0
    %1330 = vmatpush1.msra.mxu0 %v569
    %1331 = vmatprep.subr.mxu0 0.0
    %1332 = vmatpush1.msra.mxu0 %v570
    %1333 = vmatprep.subr.mxu0 0.0
    %1334 = vmatpush1.msra.mxu0 %v571
    %1335 = vmatprep.subr.mxu0 0.0
    %1336 = vmatpush1.msra.mxu0 %v572
    %1337 = vmatprep.subr.mxu0 0.0
    %1338 = vmatpush1.msra.mxu0 %v573
    %1339 = vmatprep.subr.mxu0 0.0
    %1340 = vmatpush1.msra.mxu0 %v574
    %1341 = vmatprep.subr.mxu0 0.0
    %1342 = vmatpush1.msra.mxu0 %v575
    %1343 = vmatprep.subr.mxu0 0.0
    %1344 = vmatpush1.msra.mxu0 %v576
    %1345 = vmatprep.subr.mxu0 0.0
    %1346 = vmatpush1.msra.mxu0 %v577
    %1347 = vmatprep.subr.mxu0 0.0
    %1348 = vmatpush1.msra.mxu0 %v578
    %1349 = vmatprep.subr.mxu0 0.0
    %1350 = vmatpush1.msra.mxu0 %v579
    %1351 = vmatprep.subr.mxu0 0.0
    %1352 = vmatpush1.msra.mxu0 %v580
    %1353 = vmatprep.subr.mxu0 0.0
    %1354 = vmatpush1.msra.mxu0 %v581
    %1355 = vmatprep.subr.mxu0 0.0
    %1356 = vmatpush1.msra.mxu0 %v582
    %1357 = vmatprep.subr.mxu0 0.0
    %1358 = vmatpush1.msra.mxu0 %v583
    %1359 = vmatprep.subr.mxu0 0.0
    %1360 = vmatpush1.msra.mxu0 %v584
    %1361 = vmatprep.subr.mxu0 0.0
    %1362 = vmatpush1.msra.mxu0 %v585
    %1363 = vmatprep.subr.mxu0 0.0
    %1364 = vmatpush1.msra.mxu0 %v586
    %1365 = vmatprep.subr.mxu0 0.0
    %1366 = vmatpush1.msra.mxu0 %v587
    %1367 = vmatprep.subr.mxu0 0.0
    %1368 = vmatpush1.msra.mxu0 %v588
    %1369 = vmatprep.subr.mxu0 0.0
    %1370 = vmatpush1.msra.mxu0 %v589
    %1371 = vmatprep.subr.mxu0 0.0
    %1372 = vmatpush1.msra.mxu0 %v590
    %1373 = vmatprep.mubr.f32.mxu0 %v552
    %1374 = vmatmul.mubr.f32.gmra.mrb[0].mxu0 %v551
    %v1375 = vpop.f32.mrb[0].mxu0
    %v1376 = vadd.f32 %v1301, %v1375
    %v1377 = vpop.f32.mrb[0].mxu0
    %1378 = vmatprep.mubr.f32.mxu0 %v556
    %1379 = vmatmul.mubr.f32.gmra.mrb[0].mxu0 %v555
    %v1380 = vpop.f32.mrb[0].mxu0
    %v1381 = vadd.f32 %v1306, %v1380
    %v1382 = vpop.f32.mrb[0].mxu0
    %1383 = vdwg.mxu0
    %1384 = vmatprep.subr.mxu0 0.0
    %1385 = vmatpush1.msra.mxu0 %v591
    %1386 = vmatprep.subr.mxu0 0.0
    %1387 = vmatpush1.msra.mxu0 %v592
    %1388 = vmatprep.subr.mxu0 0.0
    %1389 = vmatpush1.msra.mxu0 %v593
    %1390 = vmatprep.subr.mxu0 0.0
    %1391 = vmatpush1.msra.mxu0 %v594
    %1392 = vmatprep.subr.mxu0 0.0
    %1393 = vmatpush1.msra.mxu0 %v595
    %1394 = vmatprep.subr.mxu0 0.0
    %1395 = vmatpush1.msra.mxu0 %v596
    %1396 = vmatprep.subr.mxu0 0.0
    %1397 = vmatpush1.msra.mxu0 %v597
    %1398 = vmatprep.subr.mxu0 0.0
    %1399 = vmatpush1.msra.mxu0 %v598
    %1400 = vmatprep.subr.mxu0 0.0
    %1401 = vmatpush1.msra.mxu0 %v599
    %1402 = vmatprep.subr.mxu0 0.0
    %1403 = vmatpush1.msra.mxu0 %v600
    %1404 = vmatprep.subr.mxu0 0.0
    %1405 = vmatpush1.msra.mxu0 %v601
    %1406 = vmatprep.subr.mxu0 0.0
    %1407 = vmatpush1.msra.mxu0 %v602
    %1408 = vmatprep.subr.mxu0 0.0
    %1409 = vmatpush1.msra.mxu0 %v603
    %1410 = vmatprep.subr.mxu0 0.0
    %1411 = vmatpush1.msra.mxu0 %v604
    %1412 = vmatprep.subr.mxu0 0.0
    %1413 = vmatpush1.msra.mxu0 %v605
    %1414 = vmatprep.subr.mxu0 0.0
    %1415 = vmatpush1.msra.mxu0 %v606
    %1416 = vmatprep.subr.mxu0 0.0
    %1417 = vmatpush1.msra.mxu0 %v607
    %1418 = vmatprep.subr.mxu0 0.0
    %1419 = vmatpush1.msra.mxu0 %v608
    %1420 = vmatprep.subr.mxu0 0.0
    %1421 = vmatpush1.msra.mxu0 %v609
    %1422 = vmatprep.subr.mxu0 0.0
    %1423 = vmatpush1.msra.mxu0 %v610
    %1424 = vmatprep.subr.mxu0 0.0
    %1425 = vmatpush1.msra.mxu0 %v611
    %1426 = vmatprep.subr.mxu0 0.0
    %1427 = vmatpush1.msra.mxu0 %v612
    %1428 = vmatprep.subr.mxu0 0.0
    %1429 = vmatpush1.msra.mxu0 %v613
    %1430 = vmatprep.subr.mxu0 0.0
    %1431 = vmatpush1.msra.mxu0 %v614
    %1432 = vmatprep.subr.mxu0 0.0
    %1433 = vmatpush1.msra.mxu0 %v615
    %1434 = vmatprep.subr.mxu0 0.0
    %1435 = vmatpush1.msra.mxu0 %v616
    %1436 = vmatprep.subr.mxu0 0.0
    %1437 = vmatpush1.msra.mxu0 %v617
    %1438 = vmatprep.subr.mxu0 0.0
    %1439 = vmatpush1.msra.mxu0 %v618
    %1440 = vmatprep.subr.mxu0 0.0
    %1441 = vmatpush1.msra.mxu0 %v619
    %1442 = vmatprep.subr.mxu0 0.0
    %1443 = vmatpush1.msra.mxu0 %v620
    %1444 = vmatprep.subr.mxu0 0.0
    %1445 = vmatpush1.msra.mxu0 %v621
    %1446 = vmatprep.subr.mxu0 0.0
    %1447 = vmatpush1.msra.mxu0 %v622
    %1448 = vmatprep.mubr.f32.mxu0 %v554
    %1449 = vmatmul.mubr.f32.gmra.mrb[0].mxu0 %v553
    %v1450 = vpop.f32.mrb[0].mxu0
    %v1451 = vadd.f32 %v1376, %v1450
    %v1452 = vpop.f32.mrb[0].mxu0
    %1453 = vmatprep.mubr.f32.mxu0 %v558
    %1454 = vmatmul.mubr.f32.gmra.mrb[0].mxu0 %v557
    %v1455 = vpop.f32.mrb[0].mxu0
    %v1456 = vadd.f32 %v1381, %v1455
    %v1457 = vpop.f32.mrb[0].mxu0
    %1458 = vdwg.mxu0
    %v1459 = vld [vmem:[#allocation5 + $0x40] sm:$0xff]
    %v1460 = vld [vmem:[#allocation5 + $0x48] sm:$0xff]
    %v1461 = vld [vmem:[#allocation5 + $0x50] sm:$0xff]
    %v1462 = vld [vmem:[#allocation5 + $0x58] sm:$0xff]
    %v1463 = vld [vmem:[#allocation5 + $0x100] sm:$0xff]
    %v1464 = vld [vmem:[#allocation5 + $0x108] sm:$0xff]
    %v1465 = vld [vmem:[#allocation5 + $0x110] sm:$0xff]
    %v1466 = vld [vmem:[#allocation5 + $0x118] sm:$0xff]
    %v1467 = vld [vmem:[#allocation5 + $0x1c0] sm:$0xff]
    %v1468 = vld [vmem:[#allocation5 + $0x1c8] sm:$0xff]
    %v1469 = vld [vmem:[#allocation5 + $0x1d0] sm:$0xff]
    %v1470 = vld [vmem:[#allocation5 + $0x1d8] sm:$0xff]
    %v1471 = vld [vmem:[#allocation5 + $0x280] sm:$0xff]
    %v1472 = vld [vmem:[#allocation5 + $0x288] sm:$0xff]
    %v1473 = vld [vmem:[#allocation5 + $0x290] sm:$0xff]
    %v1474 = vld [vmem:[#allocation5 + $0x298] sm:$0xff]
    %v1475 = vld [vmem:[#allocation5 + $0x340] sm:$0xff]
    %v1476 = vld [vmem:[#allocation5 + $0x348] sm:$0xff]
    %v1477 = vld [vmem:[#allocation5 + $0x350] sm:$0xff]
    %v1478 = vld [vmem:[#allocation5 + $0x358] sm:$0xff]
    %v1479 = vld [vmem:[#allocation5 + $0x400] sm:$0xff]
    %v1480 = vld [vmem:[#allocation5 + $0x408] sm:$0xff]
    %v1481 = vld [vmem:[#allocation5 + $0x410] sm:$0xff]
    %v1482 = vld [vmem:[#allocation5 + $0x418] sm:$0xff]
    %v1483 = vld [vmem:[#allocation5 + $0x4c0] sm:$0xff]
    %v1484 = vld [vmem:[#allocation5 + $0x4c8] sm:$0xff]
    %v1485 = vld [vmem:[#allocation5 + $0x4d0] sm:$0xff]
    %v1486 = vld [vmem:[#allocation5 + $0x4d8] sm:$0xff]
    %v1487 = vld [vmem:[#allocation5 + $0x580] sm:$0xff]
    %v1488 = vld [vmem:[#allocation5 + $0x588] sm:$0xff]
    %v1489 = vld [vmem:[#allocation5 + $0x590] sm:$0xff]
    %v1490 = vld [vmem:[#allocation5 + $0x598] sm:$0xff]
    %v1491 = vld [vmem:[#allocation5 + $0x640] sm:$0xff]
    %v1492 = vld [vmem:[#allocation5 + $0x648] sm:$0xff]
    %v1493 = vld [vmem:[#allocation5 + $0x650] sm:$0xff]
    %v1494 = vld [vmem:[#allocation5 + $0x658] sm:$0xff]
    %v1495 = vld [vmem:[#allocation5 + $0x700] sm:$0xff]
    %v1496 = vld [vmem:[#allocation5 + $0x708] sm:$0xff]
    %v1497 = vld [vmem:[#allocation5 + $0x710] sm:$0xff]
    %v1498 = vld [vmem:[#allocation5 + $0x718] sm:$0xff]
    %v1499 = vld [vmem:[#allocation5 + $0x7c0] sm:$0xff]
    %v1500 = vld [vmem:[#allocation5 + $0x7c8] sm:$0xff]
    %v1501 = vld [vmem:[#allocation5 + $0x7d0] sm:$0xff]
    %v1502 = vld [vmem:[#allocation5 + $0x7d8] sm:$0xff]
    %v1503 = vld [vmem:[#allocation5 + $0x880] sm:$0xff]
    %v1504 = vld [vmem:[#allocation5 + $0x888] sm:$0xff]
    %v1505 = vld [vmem:[#allocation5 + $0x890] sm:$0xff]
    %v1506 = vld [vmem:[#allocation5 + $0x898] sm:$0xff]
    %v1507 = vld [vmem:[#allocation5 + $0x940] sm:$0xff]
    %v1508 = vld [vmem:[#allocation5 + $0x948] sm:$0xff]
    %v1509 = vld [vmem:[#allocation5 + $0x950] sm:$0xff]
    %v1510 = vld [vmem:[#allocation5 + $0x958] sm:$0xff]
    %v1511 = vld [vmem:[#allocation5 + $0xa00] sm:$0xff]
    %v1512 = vld [vmem:[#allocation5 + $0xa08] sm:$0xff]
    %v1513 = vld [vmem:[#allocation5 + $0xa10] sm:$0xff]
    %v1514 = vld [vmem:[#allocation5 + $0xa18] sm:$0xff]
    %v1515 = vld [vmem:[#allocation5 + $0xac0] sm:$0xff]
    %v1516 = vld [vmem:[#allocation5 + $0xac8] sm:$0xff]
    %v1517 = vld [vmem:[#allocation5 + $0xad0] sm:$0xff]
    %v1518 = vld [vmem:[#allocation5 + $0xad8] sm:$0xff]
    %v1519 = vld [vmem:[#allocation5 + $0xb80] sm:$0xff]
    %v1520 = vld [vmem:[#allocation5 + $0xb88] sm:$0xff]
    %v1521 = vld [vmem:[#allocation5 + $0xb90] sm:$0xff]
    %v1522 = vld [vmem:[#allocation5 + $0xb98] sm:$0xff]
    %v1523 = vld [vmem:[#allocation7 + $0x8] sm:$0xf]
    %v1525 = vlaneseq
    %v1526 = vshrl.u32 %v1525, 7
    %v1527 = vsub.s32 0, %v1526
    %v1528 = vrot.slane %v1523, %v1527
    %v1529 = vlaneseq
    %v1530 = vshrl.u32 %v1529, 7
    %v1531 = vsub.s32 1, %v1530
    %v1532 = vrot.slane %v1523, %v1531
    %v1533 = vlaneseq
    %v1534 = vshrl.u32 %v1533, 7
    %v1535 = vsub.s32 2, %v1534
    %v1536 = vrot.slane %v1523, %v1535
    %v1537 = vlaneseq
    %v1538 = vshrl.u32 %v1537, 7
    %v1539 = vsub.s32 3, %v1538
    %v1540 = vrot.slane %v1523, %v1539
    %1545 = vmatprep.subr.mxu0 %v1460
    %1546 = vmatpush1.msra.mxu0 %v1459
    %1547 = vmatprep.subr.mxu0 %v1464
    %1548 = vmatpush1.msra.mxu0 %v1463
    %1549 = vmatprep.subr.mxu0 %v1468
    %1550 = vmatpush1.msra.mxu0 %v1467
    %1551 = vmatprep.subr.mxu0 %v1472
    %1552 = vmatpush1.msra.mxu0 %v1471
    %1553 = vmatprep.subr.mxu0 %v1476
    %1554 = vmatpush1.msra.mxu0 %v1475
    %1555 = vmatprep.subr.mxu0 %v1480
    %1556 = vmatpush1.msra.mxu0 %v1479
    %1557 = vmatprep.subr.mxu0 %v1484
    %1558 = vmatpush1.msra.mxu0 %v1483
    %1559 = vmatprep.subr.mxu0 %v1488
    %1560 = vmatpush1.msra.mxu0 %v1487
    %1561 = vmatprep.subr.mxu0 %v1492
    %1562 = vmatpush1.msra.mxu0 %v1491
    %1563 = vmatprep.subr.mxu0 %v1496
    %1564 = vmatpush1.msra.mxu0 %v1495
    %1565 = vmatprep.subr.mxu0 %v1500
    %1566 = vmatpush1.msra.mxu0 %v1499
    %1567 = vmatprep.subr.mxu0 %v1504
    %1568 = vmatpush1.msra.mxu0 %v1503
    %1569 = vmatprep.subr.mxu0 %v1508
    %1570 = vmatpush1.msra.mxu0 %v1507
    %1571 = vmatprep.subr.mxu0 %v1512
    %1572 = vmatpush1.msra.mxu0 %v1511
    %1573 = vmatprep.subr.mxu0 %v1516
    %1574 = vmatpush1.msra.mxu0 %v1515
    %1575 = vmatprep.subr.mxu0 %v1520
    %1576 = vmatpush1.msra.mxu0 %v1519
    %1577 = vmatprep.subr.mxu0 0.0
    %1578 = vmatpush1.msra.mxu0 0.0
    %1579 = vmatprep.subr.mxu0 0.0
    %1580 = vmatpush1.msra.mxu0 0.0
    %1581 = vmatprep.subr.mxu0 0.0
    %1582 = vmatpush1.msra.mxu0 0.0
    %1583 = vmatprep.subr.mxu0 0.0
    %1584 = vmatpush1.msra.mxu0 0.0
    %1585 = vmatprep.subr.mxu0 0.0
    %1586 = vmatpush1.msra.mxu0 0.0
    %1587 = vmatprep.subr.mxu0 0.0
    %1588 = vmatpush1.msra.mxu0 0.0
    %1589 = vmatprep.subr.mxu0 0.0
    %1590 = vmatpush1.msra.mxu0 0.0
    %1591 = vmatprep.subr.mxu0 0.0
    %1592 = vmatpush1.msra.mxu0 0.0
    %1593 = vmatprep.subr.mxu0 0.0
    %1594 = vmatpush1.msra.mxu0 0.0
    %1595 = vmatprep.subr.mxu0 0.0
    %1596 = vmatpush1.msra.mxu0 0.0
    %1597 = vmatprep.subr.mxu0 0.0
    %1598 = vmatpush1.msra.mxu0 0.0
    %1599 = vmatprep.subr.mxu0 0.0
    %1600 = vmatpush1.msra.mxu0 0.0
    %1601 = vmatprep.subr.mxu0 0.0
    %1602 = vmatpush1.msra.mxu0 0.0
    %1603 = vmatprep.subr.mxu0 0.0
    %1604 = vmatpush1.msra.mxu0 0.0
    %1605 = vmatprep.subr.mxu0 0.0
    %1606 = vmatpush1.msra.mxu0 0.0
    %1607 = vmatprep.subr.mxu0 0.0
    %1608 = vmatpush1.msra.mxu0 0.0
    %1609 = vmatprep.mubr.f32.mxu0 0.0
    %1610 = vmatmul.mubr.f32.gmra.mrb[0].mxu0 %v85
    %v1611 = vpop.f32.mrb[0].mxu0
    %v1612 = vadd.f32 %v1528, %v1611
    %v1613 = vpop.f32.mrb[0].mxu0
    %v1614 = vadd.f32 %v1532, %v1613
    %1615 = vmatprep.mubr.f32.mxu0 0.0
    %1616 = vmatmul.mubr.f32.gmra.mrb[0].mxu0 %v86
    %v1617 = vpop.f32.mrb[0].mxu0
    %v1618 = vadd.f32 %v1528, %v1617
    %v1619 = vpop.f32.mrb[0].mxu0
    %v1620 = vadd.f32 %v1532, %v1619
    %1621 = vdwg.mxu0
    %1622 = vmatprep.subr.mxu0 %v1462
    %1623 = vmatpush1.msra.mxu0 %v1461
    %1624 = vmatprep.subr.mxu0 %v1466
    %1625 = vmatpush1.msra.mxu0 %v1465
    %1626 = vmatprep.subr.mxu0 %v1470
    %1627 = vmatpush1.msra.mxu0 %v1469
    %1628 = vmatprep.subr.mxu0 %v1474
    %1629 = vmatpush1.msra.mxu0 %v1473
    %1630 = vmatprep.subr.mxu0 %v1478
    %1631 = vmatpush1.msra.mxu0 %v1477
    %1632 = vmatprep.subr.mxu0 %v1482
    %1633 = vmatpush1.msra.mxu0 %v1481
    %1634 = vmatprep.subr.mxu0 %v1486
    %1635 = vmatpush1.msra.mxu0 %v1485
    %1636 = vmatprep.subr.mxu0 %v1490
    %1637 = vmatpush1.msra.mxu0 %v1489
    %1638 = vmatprep.subr.mxu0 %v1494
    %1639 = vmatpush1.msra.mxu0 %v1493
    %1640 = vmatprep.subr.mxu0 %v1498
    %1641 = vmatpush1.msra.mxu0 %v1497
    %1642 = vmatprep.subr.mxu0 %v1502
    %1643 = vmatpush1.msra.mxu0 %v1501
    %1644 = vmatprep.subr.mxu0 %v1506
    %1645 = vmatpush1.msra.mxu0 %v1505
    %1646 = vmatprep.subr.mxu0 %v1510
    %1647 = vmatpush1.msra.mxu0 %v1509
    %1648 = vmatprep.subr.mxu0 %v1514
    %1649 = vmatpush1.msra.mxu0 %v1513
    %1650 = vmatprep.subr.mxu0 %v1518
    %1651 = vmatpush1.msra.mxu0 %v1517
    %1652 = vmatprep.subr.mxu0 %v1522
    %1653 = vmatpush1.msra.mxu0 %v1521
    %1654 = vmatprep.subr.mxu0 0.0
    %1655 = vmatpush1.msra.mxu0 0.0
    %1656 = vmatprep.subr.mxu0 0.0
    %1657 = vmatpush1.msra.mxu0 0.0
    %1658 = vmatprep.subr.mxu0 0.0
    %1659 = vmatpush1.msra.mxu0 0.0
    %1660 = vmatprep.subr.mxu0 0.0
    %1661 = vmatpush1.msra.mxu0 0.0
    %1662 = vmatprep.subr.mxu0 0.0
    %1663 = vmatpush1.msra.mxu0 0.0
    %1664 = vmatprep.subr.mxu0 0.0
    %1665 = vmatpush1.msra.mxu0 0.0
    %1666 = vmatprep.subr.mxu0 0.0
    %1667 = vmatpush1.msra.mxu0 0.0
    %1668 = vmatprep.subr.mxu0 0.0
    %1669 = vmatpush1.msra.mxu0 0.0
    %1670 = vmatprep.subr.mxu0 0.0
    %1671 = vmatpush1.msra.mxu0 0.0
    %1672 = vmatprep.subr.mxu0 0.0
    %1673 = vmatpush1.msra.mxu0 0.0
    %1674 = vmatprep.subr.mxu0 0.0
    %1675 = vmatpush1.msra.mxu0 0.0
    %1676 = vmatprep.subr.mxu0 0.0
    %1677 = vmatpush1.msra.mxu0 0.0
    %1678 = vmatprep.subr.mxu0 0.0
    %1679 = vmatpush1.msra.mxu0 0.0
    %1680 = vmatprep.subr.mxu0 0.0
    %1681 = vmatpush1.msra.mxu0 0.0
    %1682 = vmatprep.subr.mxu0 0.0
    %1683 = vmatpush1.msra.mxu0 0.0
    %1684 = vmatprep.subr.mxu0 0.0
    %1685 = vmatpush1.msra.mxu0 0.0
    %1686 = vmatprep.mubr.f32.mxu0 0.0
    %1687 = vmatmul.mubr.f32.gmra.mrb[0].mxu0 %v85
    %v1688 = vpop.f32.mrb[0].mxu0
    %v1689 = vadd.f32 %v1536, %v1688
    %v1690 = vpop.f32.mrb[0].mxu0
    %v1691 = vadd.f32 %v1540, %v1690
    %1692 = vmatprep.mubr.f32.mxu0 0.0
    %1693 = vmatmul.mubr.f32.gmra.mrb[0].mxu0 %v86
    %v1694 = vpop.f32.mrb[0].mxu0
    %v1695 = vadd.f32 %v1536, %v1694
    %v1696 = vpop.f32.mrb[0].mxu0
    %v1697 = vadd.f32 %v1540, %v1696
    %1698 = vdwg.mxu0
    %v1699 = vmul.f32 %v1612, 0.5
    %v1700 = vmul.f32 %v1614, 0.5
    %v1701 = vmul.f32 %v1689, 0.5
    %v1702 = vmul.f32 %v1691, 0.5
    %v1703 = vmul.f32 %v1618, 0.5
    %v1704 = vmul.f32 %v1620, 0.5
    %v1705 = vmul.f32 %v1695, 0.5
    %v1706 = vmul.f32 %v1697, 0.5
    %v1707 = vmul.f32 %v1612, 0.70710677
    %v1708 = vmul.f32 %v1614, 0.70710677
    %v1709 = vmul.f32 %v1689, 0.70710677
    %v1710 = vmul.f32 %v1691, 0.70710677
    %v1711 = vmul.f32 %v1618, 0.70710677
    %v1712 = vmul.f32 %v1620, 0.70710677
    %v1713 = vmul.f32 %v1695, 0.70710677
    %v1714 = vmul.f32 %v1697, 0.70710677
    %v1715 = vand.u32 2147483647, %v1707
    %v1716 = vand.u32 2147483647, %v1708
    %v1717 = vand.u32 2147483647, %v1709
    %v1718 = vand.u32 2147483647, %v1710
    %v1719 = vand.u32 2147483647, %v1711
    %v1720 = vand.u32 2147483647, %v1712
    %v1721 = vand.u32 2147483647, %v1713
    %v1722 = vand.u32 2147483647, %v1714
    %v1723 = vmul.f32 %v1715, 0.3275911
    %v1724 = vmul.f32 %v1716, 0.3275911
    %v1725 = vmul.f32 %v1717, 0.3275911
    %v1726 = vmul.f32 %v1718, 0.3275911
    %v1727 = vmul.f32 %v1719, 0.3275911
    %v1728 = vmul.f32 %v1720, 0.3275911
    %v1729 = vmul.f32 %v1721, 0.3275911
    %v1730 = vmul.f32 %v1722, 0.3275911
    %v1731 = vadd.f32 %v1723, 1.0
    %v1732 = vadd.f32 %v1724, 1.0
    %v1733 = vadd.f32 %v1725, 1.0
    %v1734 = vadd.f32 %v1726, 1.0
    %v1735 = vadd.f32 %v1727, 1.0
    %v1736 = vadd.f32 %v1728, 1.0
    %v1737 = vadd.f32 %v1729, 1.0
    %v1738 = vadd.f32 %v1730, 1.0
    %v1739 = vrcp.pop %v1731
    %v1740 = vrcp.pop %v1732
    %v1741 = vrcp.pop %v1733
    %v1742 = vrcp.pop %v1734
    %v1743 = vrcp.pop %v1735
    %v1744 = vrcp.pop %v1736
    %v1745 = vrcp.pop %v1737
    %v1746 = vrcp.pop %v1738
    %v1747 = vmul.f32 %v1731, %v1739
    %v1748 = vmul.f32 %v1732, %v1740
    %v1749 = vmul.f32 %v1733, %v1741
    %v1750 = vmul.f32 %v1734, %v1742
    %v1751 = vmul.f32 %v1735, %v1743
    %v1752 = vmul.f32 %v1736, %v1744
    %v1753 = vmul.f32 %v1737, %v1745
    %v1754 = vmul.f32 %v1738, %v1746
    %v1755 = vsub.f32 2.0, %v1747
    %v1756 = vsub.f32 2.0, %v1748
    %v1757 = vsub.f32 2.0, %v1749
    %v1758 = vsub.f32 2.0, %v1750
    %v1759 = vsub.f32 2.0, %v1751
    %v1760 = vsub.f32 2.0, %v1752
    %v1761 = vsub.f32 2.0, %v1753
    %v1762 = vsub.f32 2.0, %v1754
    %v1763 = vmul.f32 %v1739, %v1755
    %v1764 = vmul.f32 %v1740, %v1756
    %v1765 = vmul.f32 %v1741, %v1757
    %v1766 = vmul.f32 %v1742, %v1758
    %v1767 = vmul.f32 %v1743, %v1759
    %v1768 = vmul.f32 %v1744, %v1760
    %v1769 = vmul.f32 %v1745, %v1761
    %v1770 = vmul.f32 %v1746, %v1762
    %v1771 = vmul.f32 %v1763, 1.0614054
    %v1772 = vmul.f32 %v1764, 1.0614054
    %v1773 = vmul.f32 %v1765, 1.0614054
    %v1774 = vmul.f32 %v1766, 1.0614054
    %v1775 = vmul.f32 %v1767, 1.0614054
    %v1776 = vmul.f32 %v1768, 1.0614054
    %v1777 = vmul.f32 %v1769, 1.0614054
    %v1778 = vmul.f32 %v1770, 1.0614054
    %v1779 = vadd.f32 %v1771, -1.4531521
    %v1780 = vadd.f32 %v1772, -1.4531521
    %v1781 = vadd.f32 %v1773, -1.4531521
    %v1782 = vadd.f32 %v1774, -1.4531521
    %v1783 = vadd.f32 %v1775, -1.4531521
    %v1784 = vadd.f32 %v1776, -1.4531521
    %v1785 = vadd.f32 %v1777, -1.4531521
    %v1786 = vadd.f32 %v1778, -1.4531521
    %v1787 = vmul.f32 %v1779, %v1763
    %v1788 = vmul.f32 %v1780, %v1764
    %v1789 = vmul.f32 %v1781, %v1765
    %v1790 = vmul.f32 %v1782, %v1766
    %v1791 = vmul.f32 %v1783, %v1767
    %v1792 = vmul.f32 %v1784, %v1768
    %v1793 = vmul.f32 %v1785, %v1769
    %v1794 = vmul.f32 %v1786, %v1770
    %v1795 = vadd.f32 %v1787, 1.4214138
    %v1796 = vadd.f32 %v1788, 1.4214138
    %v1797 = vadd.f32 %v1789, 1.4214138
    %v1798 = vadd.f32 %v1790, 1.4214138
    %v1799 = vadd.f32 %v1791, 1.4214138
    %v1800 = vadd.f32 %v1792, 1.4214138
    %v1801 = vadd.f32 %v1793, 1.4214138
    %v1802 = vadd.f32 %v1794, 1.4214138
    %v1803 = vmul.f32 %v1795, %v1763
    %v1804 = vmul.f32 %v1796, %v1764
    %v1805 = vmul.f32 %v1797, %v1765
    %v1806 = vmul.f32 %v1798, %v1766
    %v1807 = vmul.f32 %v1799, %v1767
    %v1808 = vmul.f32 %v1800, %v1768
    %v1809 = vmul.f32 %v1801, %v1769
    %v1810 = vmul.f32 %v1802, %v1770
    %v1811 = vadd.f32 %v1803, -0.28449672
    %v1812 = vadd.f32 %v1804, -0.28449672
    %v1813 = vadd.f32 %v1805, -0.28449672
    %v1814 = vadd.f32 %v1806, -0.28449672
    %v1815 = vadd.f32 %v1807, -0.28449672
    %v1816 = vadd.f32 %v1808, -0.28449672
    %v1817 = vadd.f32 %v1809, -0.28449672
    %v1818 = vadd.f32 %v1810, -0.28449672
    %v1819 = vmul.f32 %v1811, %v1763
    %v1820 = vmul.f32 %v1812, %v1764
    %v1821 = vmul.f32 %v1813, %v1765
    %v1822 = vmul.f32 %v1814, %v1766
    %v1823 = vmul.f32 %v1815, %v1767
    %v1824 = vmul.f32 %v1816, %v1768
    %v1825 = vmul.f32 %v1817, %v1769
    %v1826 = vmul.f32 %v1818, %v1770
    %v1827 = vadd.f32 %v1819, 0.2548296
    %v1828 = vadd.f32 %v1820, 0.2548296
    %v1829 = vadd.f32 %v1821, 0.2548296
    %v1830 = vadd.f32 %v1822, 0.2548296
    %v1831 = vadd.f32 %v1823, 0.2548296
    %v1832 = vadd.f32 %v1824, 0.2548296
    %v1833 = vadd.f32 %v1825, 0.2548296
    %v1834 = vadd.f32 %v1826, 0.2548296
    %v1835 = vmul.f32 %v1827, %v1763
    %v1836 = vmul.f32 %v1828, %v1764
    %v1837 = vmul.f32 %v1829, %v1765
    %v1838 = vmul.f32 %v1830, %v1766
    %v1839 = vmul.f32 %v1831, %v1767
    %v1840 = vmul.f32 %v1832, %v1768
    %v1841 = vmul.f32 %v1833, %v1769
    %v1842 = vmul.f32 %v1834, %v1770
    %v1843 = vsub.f32 0.0, %v1715
    %v1844 = vsub.f32 0.0, %v1716
    %v1845 = vsub.f32 0.0, %v1717
    %v1846 = vsub.f32 0.0, %v1718
    %v1847 = vsub.f32 0.0, %v1719
    %v1848 = vsub.f32 0.0, %v1720
    %v1849 = vsub.f32 0.0, %v1721
    %v1850 = vsub.f32 0.0, %v1722
    %v1851 = vmul.f32 %v1843, %v1715
    %v1852 = vmul.f32 %v1844, %v1716
    %v1853 = vmul.f32 %v1845, %v1717
    %v1854 = vmul.f32 %v1846, %v1718
    %v1855 = vmul.f32 %v1847, %v1719
    %v1856 = vmul.f32 %v1848, %v1720
    %v1857 = vmul.f32 %v1849, %v1721
    %v1858 = vmul.f32 %v1850, %v1722
    %v1859 = vmul.f32 %v1851, 1.442695
    %v1860 = vpow.pop %v1859
    %v1861 = vmul.f32 %v1852, 1.442695
    %v1862 = vpow.pop %v1861
    %v1863 = vmul.f32 %v1853, 1.442695
    %v1864 = vpow.pop %v1863
    %v1865 = vmul.f32 %v1854, 1.442695
    %v1866 = vpow.pop %v1865
    %v1867 = vmul.f32 %v1855, 1.442695
    %v1868 = vpow.pop %v1867
    %v1869 = vmul.f32 %v1856, 1.442695
    %v1870 = vpow.pop %v1869
    %v1871 = vmul.f32 %v1857, 1.442695
    %v1872 = vpow.pop %v1871
    %v1873 = vmul.f32 %v1858, 1.442695
    %v1874 = vpow.pop %v1873
    %v1875 = vmul.f32 %v1835, %v1860
    %v1876 = vmul.f32 %v1836, %v1862
    %v1877 = vmul.f32 %v1837, %v1864
    %v1878 = vmul.f32 %v1838, %v1866
    %v1879 = vmul.f32 %v1839, %v1868
    %v1880 = vmul.f32 %v1840, %v1870
    %v1881 = vmul.f32 %v1841, %v1872
    %v1882 = vmul.f32 %v1842, %v1874
    %v1883 = vsub.f32 1.0, %v1875
    %v1884 = vsub.f32 1.0, %v1876
    %v1885 = vsub.f32 1.0, %v1877
    %v1886 = vsub.f32 1.0, %v1878
    %v1887 = vsub.f32 1.0, %v1879
    %v1888 = vsub.f32 1.0, %v1880
    %v1889 = vsub.f32 1.0, %v1881
    %v1890 = vsub.f32 1.0, %v1882
    %vm1891 = vcmp.lt.f32.partialorder %v1707, 0.0
    %vm1892 = vcmp.lt.f32.partialorder %v1708, 0.0
    %vm1893 = vcmp.lt.f32.partialorder %v1709, 0.0
    %vm1894 = vcmp.lt.f32.partialorder %v1710, 0.0
    %vm1895 = vcmp.lt.f32.partialorder %v1711, 0.0
    %vm1896 = vcmp.lt.f32.partialorder %v1712, 0.0
    %vm1897 = vcmp.lt.f32.partialorder %v1713, 0.0
    %vm1898 = vcmp.lt.f32.partialorder %v1714, 0.0
    %v1899 = vsub.f32 0.0, %v1883
    %v1900 = vsub.f32 0.0, %v1884
    %v1901 = vsub.f32 0.0, %v1885
    %v1902 = vsub.f32 0.0, %v1886
    %v1903 = vsub.f32 0.0, %v1887
    %v1904 = vsub.f32 0.0, %v1888
    %v1905 = vsub.f32 0.0, %v1889
    %v1906 = vsub.f32 0.0, %v1890
    %v1907 = vsel %vm1891, %v1899, %v1883
    %v1908 = vsel %vm1892, %v1900, %v1884
    %v1909 = vsel %vm1893, %v1901, %v1885
    %v1910 = vsel %vm1894, %v1902, %v1886
    %v1911 = vsel %vm1895, %v1903, %v1887
    %v1912 = vsel %vm1896, %v1904, %v1888
    %v1913 = vsel %vm1897, %v1905, %v1889
    %v1914 = vsel %vm1898, %v1906, %v1890
    %v1915 = vadd.f32 %v1907, 1.0
    %v1916 = vadd.f32 %v1908, 1.0
    %v1917 = vadd.f32 %v1909, 1.0
    %v1918 = vadd.f32 %v1910, 1.0
    %v1919 = vadd.f32 %v1911, 1.0
    %v1920 = vadd.f32 %v1912, 1.0
    %v1921 = vadd.f32 %v1913, 1.0
    %v1922 = vadd.f32 %v1914, 1.0
    %v1923 = vmul.f32 %v1699, %v1915
    %v1924 = vmul.f32 %v1700, %v1916
    %v1925 = vmul.f32 %v1701, %v1917
    %v1926 = vmul.f32 %v1702, %v1918
    %v1927 = vmul.f32 %v1703, %v1919
    %v1928 = vmul.f32 %v1704, %v1920
    %v1929 = vmul.f32 %v1705, %v1921
    %v1930 = vmul.f32 %v1706, %v1922
    %v1931 = vld [vmem:[#allocation8 + $0x400] sm:$0xff]
    %v1932 = vld [vmem:[#allocation8 + $0x408] sm:$0xff]
    %v1933 = vld [vmem:[#allocation8 + $0x410] sm:$0xff]
    %v1934 = vld [vmem:[#allocation8 + $0x418] sm:$0xff]
    %v1935 = vld [vmem:[#allocation8 + $0x420] sm:$0xff]
    %v1936 = vld [vmem:[#allocation8 + $0x428] sm:$0xff]
    %v1937 = vld [vmem:[#allocation8 + $0x430] sm:$0xff]
    %v1938 = vld [vmem:[#allocation8 + $0x438] sm:$0xff]
    %v1939 = vld [vmem:[#allocation8 + $0x440] sm:$0xff]
    %v1940 = vld [vmem:[#allocation8 + $0x448] sm:$0xff]
    %v1941 = vld [vmem:[#allocation8 + $0x450] sm:$0xff]
    %v1942 = vld [vmem:[#allocation8 + $0x458] sm:$0xff]
    %v1943 = vld [vmem:[#allocation8 + $0x460] sm:$0xff]
    %v1944 = vld [vmem:[#allocation8 + $0x468] sm:$0xff]
    %v1945 = vld [vmem:[#allocation8 + $0x470] sm:$0xff]
    %v1946 = vld [vmem:[#allocation8 + $0x478] sm:$0xff]
    %v1947 = vld [vmem:[#allocation8 + $0x480] sm:$0xff]
    %v1948 = vld [vmem:[#allocation8 + $0x488] sm:$0xff]
    %v1949 = vld [vmem:[#allocation8 + $0x490] sm:$0xff]
    %v1950 = vld [vmem:[#allocation8 + $0x498] sm:$0xff]
    %v1951 = vld [vmem:[#allocation8 + $0x4a0] sm:$0xff]
    %v1952 = vld [vmem:[#allocation8 + $0x4a8] sm:$0xff]
    %v1953 = vld [vmem:[#allocation8 + $0x4b0] sm:$0xff]
    %v1954 = vld [vmem:[#allocation8 + $0x4b8] sm:$0xff]
    %v1955 = vld [vmem:[#allocation8 + $0x4c0] sm:$0xff]
    %v1956 = vld [vmem:[#allocation8 + $0x4c8] sm:$0xff]
    %v1957 = vld [vmem:[#allocation8 + $0x4d0] sm:$0xff]
    %v1958 = vld [vmem:[#allocation8 + $0x4d8] sm:$0xff]
    %v1959 = vld [vmem:[#allocation8 + $0x4e0] sm:$0xff]
    %v1960 = vld [vmem:[#allocation8 + $0x4e8] sm:$0xff]
    %v1961 = vld [vmem:[#allocation8 + $0x4f0] sm:$0xff]
    %v1962 = vld [vmem:[#allocation8 + $0x4f8] sm:$0xff]
    %v1963 = vld [vmem:[#allocation8 + $0x500] sm:$0xff]
    %v1964 = vld [vmem:[#allocation8 + $0x508] sm:$0xff]
    %v1965 = vld [vmem:[#allocation8 + $0x510] sm:$0xff]
    %v1966 = vld [vmem:[#allocation8 + $0x518] sm:$0xff]
    %v1967 = vld [vmem:[#allocation8 + $0x520] sm:$0xff]
    %v1968 = vld [vmem:[#allocation8 + $0x528] sm:$0xff]
    %v1969 = vld [vmem:[#allocation8 + $0x530] sm:$0xff]
    %v1970 = vld [vmem:[#allocation8 + $0x538] sm:$0xff]
    %v1971 = vld [vmem:[#allocation8 + $0x540] sm:$0xff]
    %v1972 = vld [vmem:[#allocation8 + $0x548] sm:$0xff]
    %v1973 = vld [vmem:[#allocation8 + $0x550] sm:$0xff]
    %v1974 = vld [vmem:[#allocation8 + $0x558] sm:$0xff]
    %v1975 = vld [vmem:[#allocation8 + $0x560] sm:$0xff]
    %v1976 = vld [vmem:[#allocation8 + $0x568] sm:$0xff]
    %v1977 = vld [vmem:[#allocation8 + $0x570] sm:$0xff]
    %v1978 = vld [vmem:[#allocation8 + $0x578] sm:$0xff]
    %v1979 = vld [vmem:[#allocation8 + $0x580] sm:$0xff]
    %v1980 = vld [vmem:[#allocation8 + $0x588] sm:$0xff]
    %v1981 = vld [vmem:[#allocation8 + $0x590] sm:$0xff]
    %v1982 = vld [vmem:[#allocation8 + $0x598] sm:$0xff]
    %v1983 = vld [vmem:[#allocation8 + $0x5a0] sm:$0xff]
    %v1984 = vld [vmem:[#allocation8 + $0x5a8] sm:$0xff]
    %v1985 = vld [vmem:[#allocation8 + $0x5b0] sm:$0xff]
    %v1986 = vld [vmem:[#allocation8 + $0x5b8] sm:$0xff]
    %v1987 = vld [vmem:[#allocation8 + $0x5c0] sm:$0xff]
    %v1988 = vld [vmem:[#allocation8 + $0x5c8] sm:$0xff]
    %v1989 = vld [vmem:[#allocation8 + $0x5d0] sm:$0xff]
    %v1990 = vld [vmem:[#allocation8 + $0x5d8] sm:$0xff]
    %v1991 = vld [vmem:[#allocation8 + $0x5e0] sm:$0xff]
    %v1992 = vld [vmem:[#allocation8 + $0x5e8] sm:$0xff]
    %v1993 = vld [vmem:[#allocation8 + $0x5f0] sm:$0xff]
    %v1994 = vld [vmem:[#allocation8 + $0x5f8] sm:$0xff]
    %1995 = vmatprep.subr.mxu0 0.0
    %1996 = vmatpush1.msra.mxu0 %v1931
    %1997 = vmatprep.subr.mxu0 0.0
    %1998 = vmatpush1.msra.mxu0 %v1932
    %1999 = vmatprep.subr.mxu0 0.0
    %2000 = vmatpush1.msra.mxu0 %v1933
    %2001 = vmatprep.subr.mxu0 0.0
    %2002 = vmatpush1.msra.mxu0 %v1934
    %2003 = vmatprep.subr.mxu0 0.0
    %2004 = vmatpush1.msra.mxu0 %v1935
    %2005 = vmatprep.subr.mxu0 0.0
    %2006 = vmatpush1.msra.mxu0 %v1936
    %2007 = vmatprep.subr.mxu0 0.0
    %2008 = vmatpush1.msra.mxu0 %v1937
    %2009 = vmatprep.subr.mxu0 0.0
    %2010 = vmatpush1.msra.mxu0 %v1938
    %2011 = vmatprep.subr.mxu0 0.0
    %2012 = vmatpush1.msra.mxu0 %v1939
    %2013 = vmatprep.subr.mxu0 0.0
    %2014 = vmatpush1.msra.mxu0 %v1940
    %2015 = vmatprep.subr.mxu0 0.0
    %2016 = vmatpush1.msra.mxu0 %v1941
    %2017 = vmatprep.subr.mxu0 0.0
    %2018 = vmatpush1.msra.mxu0 %v1942
    %2019 = vmatprep.subr.mxu0 0.0
    %2020 = vmatpush1.msra.mxu0 %v1943
    %2021 = vmatprep.subr.mxu0 0.0
    %2022 = vmatpush1.msra.mxu0 %v1944
    %2023 = vmatprep.subr.mxu0 0.0
    %2024 = vmatpush1.msra.mxu0 %v1945
    %2025 = vmatprep.subr.mxu0 0.0
    %2026 = vmatpush1.msra.mxu0 %v1946
    %2027 = vmatprep.subr.mxu0 0.0
    %2028 = vmatpush1.msra.mxu0 %v1947
    %2029 = vmatprep.subr.mxu0 0.0
    %2030 = vmatpush1.msra.mxu0 %v1948
    %2031 = vmatprep.subr.mxu0 0.0
    %2032 = vmatpush1.msra.mxu0 %v1949
    %2033 = vmatprep.subr.mxu0 0.0
    %2034 = vmatpush1.msra.mxu0 %v1950
    %2035 = vmatprep.subr.mxu0 0.0
    %2036 = vmatpush1.msra.mxu0 %v1951
    %2037 = vmatprep.subr.mxu0 0.0
    %2038 = vmatpush1.msra.mxu0 %v1952
    %2039 = vmatprep.subr.mxu0 0.0
    %2040 = vmatpush1.msra.mxu0 %v1953
    %2041 = vmatprep.subr.mxu0 0.0
    %2042 = vmatpush1.msra.mxu0 %v1954
    %2043 = vmatprep.subr.mxu0 0.0
    %2044 = vmatpush1.msra.mxu0 %v1955
    %2045 = vmatprep.subr.mxu0 0.0
    %2046 = vmatpush1.msra.mxu0 %v1956
    %2047 = vmatprep.subr.mxu0 0.0
    %2048 = vmatpush1.msra.mxu0 %v1957
    %2049 = vmatprep.subr.mxu0 0.0
    %2050 = vmatpush1.msra.mxu0 %v1958
    %2051 = vmatprep.subr.mxu0 0.0
    %2052 = vmatpush1.msra.mxu0 %v1959
    %2053 = vmatprep.subr.mxu0 0.0
    %2054 = vmatpush1.msra.mxu0 %v1960
    %2055 = vmatprep.subr.mxu0 0.0
    %2056 = vmatpush1.msra.mxu0 %v1961
    %2057 = vmatprep.subr.mxu0 0.0
    %2058 = vmatpush1.msra.mxu0 %v1962
    %2059 = vmatprep.mubr.f32.mxu0 %v1924
    %2060 = vmatmul.mubr.f32.gmra.mrb[0].mxu0 %v1923
    %v2061 = vpop.f32.mrb[0].mxu0
    %v2062 = vadd.f32 0.0, %v2061
    %v2063 = vpop.f32.mrb[0].mxu0
    %2064 = vmatprep.mubr.f32.mxu0 %v1928
    %2065 = vmatmul.mubr.f32.gmra.mrb[0].mxu0 %v1927
    %v2066 = vpop.f32.mrb[0].mxu0
    %v2067 = vadd.f32 0.0, %v2066
    %v2068 = vpop.f32.mrb[0].mxu0
    %2069 = vdwg.mxu0
    %2070 = vmatprep.subr.mxu0 0.0
    %2071 = vmatpush1.msra.mxu0 %v1963
    %2072 = vmatprep.subr.mxu0 0.0
    %2073 = vmatpush1.msra.mxu0 %v1964
    %2074 = vmatprep.subr.mxu0 0.0
    %2075 = vmatpush1.msra.mxu0 %v1965
    %2076 = vmatprep.subr.mxu0 0.0
    %2077 = vmatpush1.msra.mxu0 %v1966
    %2078 = vmatprep.subr.mxu0 0.0
    %2079 = vmatpush1.msra.mxu0 %v1967
    %2080 = vmatprep.subr.mxu0 0.0
    %2081 = vmatpush1.msra.mxu0 %v1968
    %2082 = vmatprep.subr.mxu0 0.0
    %2083 = vmatpush1.msra.mxu0 %v1969
    %2084 = vmatprep.subr.mxu0 0.0
    %2085 = vmatpush1.msra.mxu0 %v1970
    %2086 = vmatprep.subr.mxu0 0.0
    %2087 = vmatpush1.msra.mxu0 %v1971
    %2088 = vmatprep.subr.mxu0 0.0
    %2089 = vmatpush1.msra.mxu0 %v1972
    %2090 = vmatprep.subr.mxu0 0.0
    %2091 = vmatpush1.msra.mxu0 %v1973
    %2092 = vmatprep.subr.mxu0 0.0
    %2093 = vmatpush1.msra.mxu0 %v1974
    %2094 = vmatprep.subr.mxu0 0.0
    %2095 = vmatpush1.msra.mxu0 %v1975
    %2096 = vmatprep.subr.mxu0 0.0
    %2097 = vmatpush1.msra.mxu0 %v1976
    %2098 = vmatprep.subr.mxu0 0.0
    %2099 = vmatpush1.msra.mxu0 %v1977
    %2100 = vmatprep.subr.mxu0 0.0
    %2101 = vmatpush1.msra.mxu0 %v1978
    %2102 = vmatprep.subr.mxu0 0.0
    %2103 = vmatpush1.msra.mxu0 %v1979
    %2104 = vmatprep.subr.mxu0 0.0
    %2105 = vmatpush1.msra.mxu0 %v1980
    %2106 = vmatprep.subr.mxu0 0.0
    %2107 = vmatpush1.msra.mxu0 %v1981
    %2108 = vmatprep.subr.mxu0 0.0
    %2109 = vmatpush1.msra.mxu0 %v1982
    %2110 = vmatprep.subr.mxu0 0.0
    %2111 = vmatpush1.msra.mxu0 %v1983
    %2112 = vmatprep.subr.mxu0 0.0
    %2113 = vmatpush1.msra.mxu0 %v1984
    %2114 = vmatprep.subr.mxu0 0.0
    %2115 = vmatpush1.msra.mxu0 %v1985
    %2116 = vmatprep.subr.mxu0 0.0
    %2117 = vmatpush1.msra.mxu0 %v1986
    %2118 = vmatprep.subr.mxu0 0.0
    %2119 = vmatpush1.msra.mxu0 %v1987
    %2120 = vmatprep.subr.mxu0 0.0
    %2121 = vmatpush1.msra.mxu0 %v1988
    %2122 = vmatprep.subr.mxu0 0.0
    %2123 = vmatpush1.msra.mxu0 %v1989
    %2124 = vmatprep.subr.mxu0 0.0
    %2125 = vmatpush1.msra.mxu0 %v1990
    %2126 = vmatprep.subr.mxu0 0.0
    %2127 = vmatpush1.msra.mxu0 %v1991
    %2128 = vmatprep.subr.mxu0 0.0
    %2129 = vmatpush1.msra.mxu0 %v1992
    %2130 = vmatprep.subr.mxu0 0.0
    %2131 = vmatpush1.msra.mxu0 %v1993
    %2132 = vmatprep.subr.mxu0 0.0
    %2133 = vmatpush1.msra.mxu0 %v1994
    %2134 = vmatprep.mubr.f32.mxu0 %v1926
    %2135 = vmatmul.mubr.f32.gmra.mrb[0].mxu0 %v1925
    %v2136 = vpop.f32.mrb[0].mxu0
    %v2137 = vadd.f32 %v2062, %v2136
    %v2138 = vpop.f32.mrb[0].mxu0
    %2139 = vmatprep.mubr.f32.mxu0 %v1930
    %2140 = vmatmul.mubr.f32.gmra.mrb[0].mxu0 %v1929
    %v2141 = vpop.f32.mrb[0].mxu0
    %v2142 = vadd.f32 %v2067, %v2141
    %v2143 = vpop.f32.mrb[0].mxu0
    %2144 = vdwg.mxu0
    %v2145 = vadd.f32 %v1451, %v2137
    %v2146 = vadd.f32 %v1456, %v2142
    %v2147 = vld [vmem:[#allocation5 + $0x60] sm:$0xff]
    %v2148 = vld [vmem:[#allocation5 + $0x68] sm:$0xff]
    %v2149 = vld [vmem:[#allocation5 + $0x70] sm:$0xff]
    %v2150 = vld [vmem:[#allocation5 + $0x78] sm:$0xff]
    %v2151 = vld [vmem:[#allocation5 + $0x120] sm:$0xff]
    %v2152 = vld [vmem:[#allocation5 + $0x128] sm:$0xff]
    %v2153 = vld [vmem:[#allocation5 + $0x130] sm:$0xff]
    %v2154 = vld [vmem:[#allocation5 + $0x138] sm:$0xff]
    %v2155 = vld [vmem:[#allocation5 + $0x1e0] sm:$0xff]
    %v2156 = vld [vmem:[#allocation5 + $0x1e8] sm:$0xff]
    %v2157 = vld [vmem:[#allocation5 + $0x1f0] sm:$0xff]
    %v2158 = vld [vmem:[#allocation5 + $0x1f8] sm:$0xff]
    %v2159 = vld [vmem:[#allocation5 + $0x2a0] sm:$0xff]
    %v2160 = vld [vmem:[#allocation5 + $0x2a8] sm:$0xff]
    %v2161 = vld [vmem:[#allocation5 + $0x2b0] sm:$0xff]
    %v2162 = vld [vmem:[#allocation5 + $0x2b8] sm:$0xff]
    %v2163 = vld [vmem:[#allocation5 + $0x360] sm:$0xff]
    %v2164 = vld [vmem:[#allocation5 + $0x368] sm:$0xff]
    %v2165 = vld [vmem:[#allocation5 + $0x370] sm:$0xff]
    %v2166 = vld [vmem:[#allocation5 + $0x378] sm:$0xff]
    %v2167 = vld [vmem:[#allocation5 + $0x420] sm:$0xff]
    %v2168 = vld [vmem:[#allocation5 + $0x428] sm:$0xff]
    %v2169 = vld [vmem:[#allocation5 + $0x430] sm:$0xff]
    %v2170 = vld [vmem:[#allocation5 + $0x438] sm:$0xff]
    %v2171 = vld [vmem:[#allocation5 + $0x4e0] sm:$0xff]
    %v2172 = vld [vmem:[#allocation5 + $0x4e8] sm:$0xff]
    %v2173 = vld [vmem:[#allocation5 + $0x4f0] sm:$0xff]
    %v2174 = vld [vmem:[#allocation5 + $0x4f8] sm:$0xff]
    %v2175 = vld [vmem:[#allocation5 + $0x5a0] sm:$0xff]
    %v2176 = vld [vmem:[#allocation5 + $0x5a8] sm:$0xff]
    %v2177 = vld [vmem:[#allocation5 + $0x5b0] sm:$0xff]
    %v2178 = vld [vmem:[#allocation5 + $0x5b8] sm:$0xff]
    %v2179 = vld [vmem:[#allocation5 + $0x660] sm:$0xff]
    %v2180 = vld [vmem:[#allocation5 + $0x668] sm:$0xff]
    %v2181 = vld [vmem:[#allocation5 + $0x670] sm:$0xff]
    %v2182 = vld [vmem:[#allocation5 + $0x678] sm:$0xff]
    %v2183 = vld [vmem:[#allocation5 + $0x720] sm:$0xff]
    %v2184 = vld [vmem:[#allocation5 + $0x728] sm:$0xff]
    %v2185 = vld [vmem:[#allocation5 + $0x730] sm:$0xff]
    %v2186 = vld [vmem:[#allocation5 + $0x738] sm:$0xff]
    %v2187 = vld [vmem:[#allocation5 + $0x7e0] sm:$0xff]
    %v2188 = vld [vmem:[#allocation5 + $0x7e8] sm:$0xff]
    %v2189 = vld [vmem:[#allocation5 + $0x7f0] sm:$0xff]
    %v2190 = vld [vmem:[#allocation5 + $0x7f8] sm:$0xff]
    %v2191 = vld [vmem:[#allocation5 + $0x8a0] sm:$0xff]
    %v2192 = vld [vmem:[#allocation5 + $0x8a8] sm:$0xff]
    %v2193 = vld [vmem:[#allocation5 + $0x8b0] sm:$0xff]
    %v2194 = vld [vmem:[#allocation5 + $0x8b8] sm:$0xff]
    %v2195 = vld [vmem:[#allocation5 + $0x960] sm:$0xff]
    %v2196 = vld [vmem:[#allocation5 + $0x968] sm:$0xff]
    %v2197 = vld [vmem:[#allocation5 + $0x970] sm:$0xff]
    %v2198 = vld [vmem:[#allocation5 + $0x978] sm:$0xff]
    %v2199 = vld [vmem:[#allocation5 + $0xa20] sm:$0xff]
    %v2200 = vld [vmem:[#allocation5 + $0xa28] sm:$0xff]
    %v2201 = vld [vmem:[#allocation5 + $0xa30] sm:$0xff]
    %v2202 = vld [vmem:[#allocation5 + $0xa38] sm:$0xff]
    %v2203 = vld [vmem:[#allocation5 + $0xae0] sm:$0xff]
    %v2204 = vld [vmem:[#allocation5 + $0xae8] sm:$0xff]
    %v2205 = vld [vmem:[#allocation5 + $0xaf0] sm:$0xff]
    %v2206 = vld [vmem:[#allocation5 + $0xaf8] sm:$0xff]
    %v2207 = vld [vmem:[#allocation5 + $0xba0] sm:$0xff]
    %v2208 = vld [vmem:[#allocation5 + $0xba8] sm:$0xff]
    %v2209 = vld [vmem:[#allocation5 + $0xbb0] sm:$0xff]
    %v2210 = vld [vmem:[#allocation5 + $0xbb8] sm:$0xff]
    %v2211 = vld [vmem:[#allocation7 + $0xc] sm:$0xf]
    %v2213 = vlaneseq
    %v2214 = vshrl.u32 %v2213, 7
    %v2215 = vsub.s32 0, %v2214
    %v2216 = vrot.slane %v2211, %v2215
    %v2217 = vlaneseq
    %v2218 = vshrl.u32 %v2217, 7
    %v2219 = vsub.s32 1, %v2218
    %v2220 = vrot.slane %v2211, %v2219
    %v2221 = vlaneseq
    %v2222 = vshrl.u32 %v2221, 7
    %v2223 = vsub.s32 2, %v2222
    %v2224 = vrot.slane %v2211, %v2223
    %v2225 = vlaneseq
    %v2226 = vshrl.u32 %v2225, 7
    %v2227 = vsub.s32 3, %v2226
    %v2228 = vrot.slane %v2211, %v2227
    %2233 = vmatprep.subr.mxu0 %v2148
    %2234 = vmatpush1.msra.mxu0 %v2147
    %2235 = vmatprep.subr.mxu0 %v2152
    %2236 = vmatpush1.msra.mxu0 %v2151
    %2237 = vmatprep.subr.mxu0 %v2156
    %2238 = vmatpush1.msra.mxu0 %v2155
    %2239 = vmatprep.subr.mxu0 %v2160
    %2240 = vmatpush1.msra.mxu0 %v2159
    %2241 = vmatprep.subr.mxu0 %v2164
    %2242 = vmatpush1.msra.mxu0 %v2163
    %2243 = vmatprep.subr.mxu0 %v2168
    %2244 = vmatpush1.msra.mxu0 %v2167
    %2245 = vmatprep.subr.mxu0 %v2172
    %2246 = vmatpush1.msra.mxu0 %v2171
    %2247 = vmatprep.subr.mxu0 %v2176
    %2248 = vmatpush1.msra.mxu0 %v2175
    %2249 = vmatprep.subr.mxu0 %v2180
    %2250 = vmatpush1.msra.mxu0 %v2179
    %2251 = vmatprep.subr.mxu0 %v2184
    %2252 = vmatpush1.msra.mxu0 %v2183
    %2253 = vmatprep.subr.mxu0 %v2188
    %2254 = vmatpush1.msra.mxu0 %v2187
    %2255 = vmatprep.subr.mxu0 %v2192
    %2256 = vmatpush1.msra.mxu0 %v2191
    %2257 = vmatprep.subr.mxu0 %v2196
    %2258 = vmatpush1.msra.mxu0 %v2195
    %2259 = vmatprep.subr.mxu0 %v2200
    %2260 = vmatpush1.msra.mxu0 %v2199
    %2261 = vmatprep.subr.mxu0 %v2204
    %2262 = vmatpush1.msra.mxu0 %v2203
    %2263 = vmatprep.subr.mxu0 %v2208
    %2264 = vmatpush1.msra.mxu0 %v2207
    %2265 = vmatprep.subr.mxu0 0.0
    %2266 = vmatpush1.msra.mxu0 0.0
    %2267 = vmatprep.subr.mxu0 0.0
    %2268 = vmatpush1.msra.mxu0 0.0
    %2269 = vmatprep.subr.mxu0 0.0
    %2270 = vmatpush1.msra.mxu0 0.0
    %2271 = vmatprep.subr.mxu0 0.0
    %2272 = vmatpush1.msra.mxu0 0.0
    %2273 = vmatprep.subr.mxu0 0.0
    %2274 = vmatpush1.msra.mxu0 0.0
    %2275 = vmatprep.subr.mxu0 0.0
    %2276 = vmatpush1.msra.mxu0 0.0
    %2277 = vmatprep.subr.mxu0 0.0
    %2278 = vmatpush1.msra.mxu0 0.0
    %2279 = vmatprep.subr.mxu0 0.0
    %2280 = vmatpush1.msra.mxu0 0.0
    %2281 = vmatprep.subr.mxu0 0.0
    %2282 = vmatpush1.msra.mxu0 0.0
    %2283 = vmatprep.subr.mxu0 0.0
    %2284 = vmatpush1.msra.mxu0 0.0
    %2285 = vmatprep.subr.mxu0 0.0
    %2286 = vmatpush1.msra.mxu0 0.0
    %2287 = vmatprep.subr.mxu0 0.0
    %2288 = vmatpush1.msra.mxu0 0.0
    %2289 = vmatprep.subr.mxu0 0.0
    %2290 = vmatpush1.msra.mxu0 0.0
    %2291 = vmatprep.subr.mxu0 0.0
    %2292 = vmatpush1.msra.mxu0 0.0
    %2293 = vmatprep.subr.mxu0 0.0
    %2294 = vmatpush1.msra.mxu0 0.0
    %2295 = vmatprep.subr.mxu0 0.0
    %2296 = vmatpush1.msra.mxu0 0.0
    %2297 = vmatprep.mubr.f32.mxu0 0.0
    %2298 = vmatmul.mubr.f32.gmra.mrb[0].mxu0 %v85
    %v2299 = vpop.f32.mrb[0].mxu0
    %v2300 = vadd.f32 %v2216, %v2299
    %v2301 = vpop.f32.mrb[0].mxu0
    %v2302 = vadd.f32 %v2220, %v2301
    %2303 = vmatprep.mubr.f32.mxu0 0.0
    %2304 = vmatmul.mubr.f32.gmra.mrb[0].mxu0 %v86
    %v2305 = vpop.f32.mrb[0].mxu0
    %v2306 = vadd.f32 %v2216, %v2305
    %v2307 = vpop.f32.mrb[0].mxu0
    %v2308 = vadd.f32 %v2220, %v2307
    %2309 = vdwg.mxu0
    %2310 = vmatprep.subr.mxu0 %v2150
    %2311 = vmatpush1.msra.mxu0 %v2149
    %2312 = vmatprep.subr.mxu0 %v2154
    %2313 = vmatpush1.msra.mxu0 %v2153
    %2314 = vmatprep.subr.mxu0 %v2158
    %2315 = vmatpush1.msra.mxu0 %v2157
    %2316 = vmatprep.subr.mxu0 %v2162
    %2317 = vmatpush1.msra.mxu0 %v2161
    %2318 = vmatprep.subr.mxu0 %v2166
    %2319 = vmatpush1.msra.mxu0 %v2165
    %2320 = vmatprep.subr.mxu0 %v2170
    %2321 = vmatpush1.msra.mxu0 %v2169
    %2322 = vmatprep.subr.mxu0 %v2174
    %2323 = vmatpush1.msra.mxu0 %v2173
    %2324 = vmatprep.subr.mxu0 %v2178
    %2325 = vmatpush1.msra.mxu0 %v2177
    %2326 = vmatprep.subr.mxu0 %v2182
    %2327 = vmatpush1.msra.mxu0 %v2181
    %2328 = vmatprep.subr.mxu0 %v2186
    %2329 = vmatpush1.msra.mxu0 %v2185
    %2330 = vmatprep.subr.mxu0 %v2190
    %2331 = vmatpush1.msra.mxu0 %v2189
    %2332 = vmatprep.subr.mxu0 %v2194
    %2333 = vmatpush1.msra.mxu0 %v2193
    %2334 = vmatprep.subr.mxu0 %v2198
    %2335 = vmatpush1.msra.mxu0 %v2197
    %2336 = vmatprep.subr.mxu0 %v2202
    %2337 = vmatpush1.msra.mxu0 %v2201
    %2338 = vmatprep.subr.mxu0 %v2206
    %2339 = vmatpush1.msra.mxu0 %v2205
    %2340 = vmatprep.subr.mxu0 %v2210
    %2341 = vmatpush1.msra.mxu0 %v2209
    %2342 = vmatprep.subr.mxu0 0.0
    %2343 = vmatpush1.msra.mxu0 0.0
    %2344 = vmatprep.subr.mxu0 0.0
    %2345 = vmatpush1.msra.mxu0 0.0
    %2346 = vmatprep.subr.mxu0 0.0
    %2347 = vmatpush1.msra.mxu0 0.0
    %2348 = vmatprep.subr.mxu0 0.0
    %2349 = vmatpush1.msra.mxu0 0.0
    %2350 = vmatprep.subr.mxu0 0.0
    %2351 = vmatpush1.msra.mxu0 0.0
    %2352 = vmatprep.subr.mxu0 0.0
    %2353 = vmatpush1.msra.mxu0 0.0
    %2354 = vmatprep.subr.mxu0 0.0
    %2355 = vmatpush1.msra.mxu0 0.0
    %2356 = vmatprep.subr.mxu0 0.0
    %2357 = vmatpush1.msra.mxu0 0.0
    %2358 = vmatprep.subr.mxu0 0.0
    %2359 = vmatpush1.msra.mxu0 0.0
    %2360 = vmatprep.subr.mxu0 0.0
    %2361 = vmatpush1.msra.mxu0 0.0
    %2362 = vmatprep.subr.mxu0 0.0
    %2363 = vmatpush1.msra.mxu0 0.0
    %2364 = vmatprep.subr.mxu0 0.0
    %2365 = vmatpush1.msra.mxu0 0.0
    %2366 = vmatprep.subr.mxu0 0.0
    %2367 = vmatpush1.msra.mxu0 0.0
    %2368 = vmatprep.subr.mxu0 0.0
    %2369 = vmatpush1.msra.mxu0 0.0
    %2370 = vmatprep.subr.mxu0 0.0
    %2371 = vmatpush1.msra.mxu0 0.0
    %2372 = vmatprep.subr.mxu0 0.0
    %2373 = vmatpush1.msra.mxu0 0.0
    %2374 = vmatprep.mubr.f32.mxu0 0.0
    %2375 = vmatmul.mubr.f32.gmra.mrb[0].mxu0 %v85
    %v2376 = vpop.f32.mrb[0].mxu0
    %v2377 = vadd.f32 %v2224, %v2376
    %v2378 = vpop.f32.mrb[0].mxu0
    %v2379 = vadd.f32 %v2228, %v2378
    %2380 = vmatprep.mubr.f32.mxu0 0.0
    %2381 = vmatmul.mubr.f32.gmra.mrb[0].mxu0 %v86
    %v2382 = vpop.f32.mrb[0].mxu0
    %v2383 = vadd.f32 %v2224, %v2382
    %v2384 = vpop.f32.mrb[0].mxu0
    %v2385 = vadd.f32 %v2228, %v2384
    %2386 = vdwg.mxu0
    %v2387 = vmul.f32 %v2300, 0.5
    %v2388 = vmul.f32 %v2302, 0.5
    %v2389 = vmul.f32 %v2377, 0.5
    %v2390 = vmul.f32 %v2379, 0.5
    %v2391 = vmul.f32 %v2306, 0.5
    %v2392 = vmul.f32 %v2308, 0.5
    %v2393 = vmul.f32 %v2383, 0.5
    %v2394 = vmul.f32 %v2385, 0.5
    %v2395 = vmul.f32 %v2300, 0.70710677
    %v2396 = vmul.f32 %v2302, 0.70710677
    %v2397 = vmul.f32 %v2377, 0.70710677
    %v2398 = vmul.f32 %v2379, 0.70710677
    %v2399 = vmul.f32 %v2306, 0.70710677
    %v2400 = vmul.f32 %v2308, 0.70710677
    %v2401 = vmul.f32 %v2383, 0.70710677
    %v2402 = vmul.f32 %v2385, 0.70710677
    %v2403 = vand.u32 2147483647, %v2395
    %v2404 = vand.u32 2147483647, %v2396
    %v2405 = vand.u32 2147483647, %v2397
    %v2406 = vand.u32 2147483647, %v2398
    %v2407 = vand.u32 2147483647, %v2399
    %v2408 = vand.u32 2147483647, %v2400
    %v2409 = vand.u32 2147483647, %v2401
    %v2410 = vand.u32 2147483647, %v2402
    %v2411 = vmul.f32 %v2403, 0.3275911
    %v2412 = vmul.f32 %v2404, 0.3275911
    %v2413 = vmul.f32 %v2405, 0.3275911
    %v2414 = vmul.f32 %v2406, 0.3275911
    %v2415 = vmul.f32 %v2407, 0.3275911
    %v2416 = vmul.f32 %v2408, 0.3275911
    %v2417 = vmul.f32 %v2409, 0.3275911
    %v2418 = vmul.f32 %v2410, 0.3275911
    %v2419 = vadd.f32 %v2411, 1.0
    %v2420 = vadd.f32 %v2412, 1.0
    %v2421 = vadd.f32 %v2413, 1.0
    %v2422 = vadd.f32 %v2414, 1.0
    %v2423 = vadd.f32 %v2415, 1.0
    %v2424 = vadd.f32 %v2416, 1.0
    %v2425 = vadd.f32 %v2417, 1.0
    %v2426 = vadd.f32 %v2418, 1.0
    %v2427 = vrcp.pop %v2419
    %v2428 = vrcp.pop %v2420
    %v2429 = vrcp.pop %v2421
    %v2430 = vrcp.pop %v2422
    %v2431 = vrcp.pop %v2423
    %v2432 = vrcp.pop %v2424
    %v2433 = vrcp.pop %v2425
    %v2434 = vrcp.pop %v2426
    %v2435 = vmul.f32 %v2419, %v2427
    %v2436 = vmul.f32 %v2420, %v2428
    %v2437 = vmul.f32 %v2421, %v2429
    %v2438 = vmul.f32 %v2422, %v2430
    %v2439 = vmul.f32 %v2423, %v2431
    %v2440 = vmul.f32 %v2424, %v2432
    %v2441 = vmul.f32 %v2425, %v2433
    %v2442 = vmul.f32 %v2426, %v2434
    %v2443 = vsub.f32 2.0, %v2435
    %v2444 = vsub.f32 2.0, %v2436
    %v2445 = vsub.f32 2.0, %v2437
    %v2446 = vsub.f32 2.0, %v2438
    %v2447 = vsub.f32 2.0, %v2439
    %v2448 = vsub.f32 2.0, %v2440
    %v2449 = vsub.f32 2.0, %v2441
    %v2450 = vsub.f32 2.0, %v2442
    %v2451 = vmul.f32 %v2427, %v2443
    %v2452 = vmul.f32 %v2428, %v2444
    %v2453 = vmul.f32 %v2429, %v2445
    %v2454 = vmul.f32 %v2430, %v2446
    %v2455 = vmul.f32 %v2431, %v2447
    %v2456 = vmul.f32 %v2432, %v2448
    %v2457 = vmul.f32 %v2433, %v2449
    %v2458 = vmul.f32 %v2434, %v2450
    %v2459 = vmul.f32 %v2451, 1.0614054
    %v2460 = vmul.f32 %v2452, 1.0614054
    %v2461 = vmul.f32 %v2453, 1.0614054
    %v2462 = vmul.f32 %v2454, 1.0614054
    %v2463 = vmul.f32 %v2455, 1.0614054
    %v2464 = vmul.f32 %v2456, 1.0614054
    %v2465 = vmul.f32 %v2457, 1.0614054
    %v2466 = vmul.f32 %v2458, 1.0614054
    %v2467 = vadd.f32 %v2459, -1.4531521
    %v2468 = vadd.f32 %v2460, -1.4531521
    %v2469 = vadd.f32 %v2461, -1.4531521
    %v2470 = vadd.f32 %v2462, -1.4531521
    %v2471 = vadd.f32 %v2463, -1.4531521
    %v2472 = vadd.f32 %v2464, -1.4531521
    %v2473 = vadd.f32 %v2465, -1.4531521
    %v2474 = vadd.f32 %v2466, -1.4531521
    %v2475 = vmul.f32 %v2467, %v2451
    %v2476 = vmul.f32 %v2468, %v2452
    %v2477 = vmul.f32 %v2469, %v2453
    %v2478 = vmul.f32 %v2470, %v2454
    %v2479 = vmul.f32 %v2471, %v2455
    %v2480 = vmul.f32 %v2472, %v2456
    %v2481 = vmul.f32 %v2473, %v2457
    %v2482 = vmul.f32 %v2474, %v2458
    %v2483 = vadd.f32 %v2475, 1.4214138
    %v2484 = vadd.f32 %v2476, 1.4214138
    %v2485 = vadd.f32 %v2477, 1.4214138
    %v2486 = vadd.f32 %v2478, 1.4214138
    %v2487 = vadd.f32 %v2479, 1.4214138
    %v2488 = vadd.f32 %v2480, 1.4214138
    %v2489 = vadd.f32 %v2481, 1.4214138
    %v2490 = vadd.f32 %v2482, 1.4214138
    %v2491 = vmul.f32 %v2483, %v2451
    %v2492 = vmul.f32 %v2484, %v2452
    %v2493 = vmul.f32 %v2485, %v2453
    %v2494 = vmul.f32 %v2486, %v2454
    %v2495 = vmul.f32 %v2487, %v2455
    %v2496 = vmul.f32 %v2488, %v2456
    %v2497 = vmul.f32 %v2489, %v2457
    %v2498 = vmul.f32 %v2490, %v2458
    %v2499 = vadd.f32 %v2491, -0.28449672
    %v2500 = vadd.f32 %v2492, -0.28449672
    %v2501 = vadd.f32 %v2493, -0.28449672
    %v2502 = vadd.f32 %v2494, -0.28449672
    %v2503 = vadd.f32 %v2495, -0.28449672
    %v2504 = vadd.f32 %v2496, -0.28449672
    %v2505 = vadd.f32 %v2497, -0.28449672
    %v2506 = vadd.f32 %v2498, -0.28449672
    %v2507 = vmul.f32 %v2499, %v2451
    %v2508 = vmul.f32 %v2500, %v2452
    %v2509 = vmul.f32 %v2501, %v2453
    %v2510 = vmul.f32 %v2502, %v2454
    %v2511 = vmul.f32 %v2503, %v2455
    %v2512 = vmul.f32 %v2504, %v2456
    %v2513 = vmul.f32 %v2505, %v2457
    %v2514 = vmul.f32 %v2506, %v2458
    %v2515 = vadd.f32 %v2507, 0.2548296
    %v2516 = vadd.f32 %v2508, 0.2548296
    %v2517 = vadd.f32 %v2509, 0.2548296
    %v2518 = vadd.f32 %v2510, 0.2548296
    %v2519 = vadd.f32 %v2511, 0.2548296
    %v2520 = vadd.f32 %v2512, 0.2548296
    %v2521 = vadd.f32 %v2513, 0.2548296
    %v2522 = vadd.f32 %v2514, 0.2548296
    %v2523 = vmul.f32 %v2515, %v2451
    %v2524 = vmul.f32 %v2516, %v2452
    %v2525 = vmul.f32 %v2517, %v2453
    %v2526 = vmul.f32 %v2518, %v2454
    %v2527 = vmul.f32 %v2519, %v2455
    %v2528 = vmul.f32 %v2520, %v2456
    %v2529 = vmul.f32 %v2521, %v2457
    %v2530 = vmul.f32 %v2522, %v2458
    %v2531 = vsub.f32 0.0, %v2403
    %v2532 = vsub.f32 0.0, %v2404
    %v2533 = vsub.f32 0.0, %v2405
    %v2534 = vsub.f32 0.0, %v2406
    %v2535 = vsub.f32 0.0, %v2407
    %v2536 = vsub.f32 0.0, %v2408
    %v2537 = vsub.f32 0.0, %v2409
    %v2538 = vsub.f32 0.0, %v2410
    %v2539 = vmul.f32 %v2531, %v2403
    %v2540 = vmul.f32 %v2532, %v2404
    %v2541 = vmul.f32 %v2533, %v2405
    %v2542 = vmul.f32 %v2534, %v2406
    %v2543 = vmul.f32 %v2535, %v2407
    %v2544 = vmul.f32 %v2536, %v2408
    %v2545 = vmul.f32 %v2537, %v2409
    %v2546 = vmul.f32 %v2538, %v2410
    %v2547 = vmul.f32 %v2539, 1.442695
    %v2548 = vpow.pop %v2547
    %v2549 = vmul.f32 %v2540, 1.442695
    %v2550 = vpow.pop %v2549
    %v2551 = vmul.f32 %v2541, 1.442695
    %v2552 = vpow.pop %v2551
    %v2553 = vmul.f32 %v2542, 1.442695
    %v2554 = vpow.pop %v2553
    %v2555 = vmul.f32 %v2543, 1.442695
    %v2556 = vpow.pop %v2555
    %v2557 = vmul.f32 %v2544, 1.442695
    %v2558 = vpow.pop %v2557
    %v2559 = vmul.f32 %v2545, 1.442695
    %v2560 = vpow.pop %v2559
    %v2561 = vmul.f32 %v2546, 1.442695
    %v2562 = vpow.pop %v2561
    %v2563 = vmul.f32 %v2523, %v2548
    %v2564 = vmul.f32 %v2524, %v2550
    %v2565 = vmul.f32 %v2525, %v2552
    %v2566 = vmul.f32 %v2526, %v2554
    %v2567 = vmul.f32 %v2527, %v2556
    %v2568 = vmul.f32 %v2528, %v2558
    %v2569 = vmul.f32 %v2529, %v2560
    %v2570 = vmul.f32 %v2530, %v2562
    %v2571 = vsub.f32 1.0, %v2563
    %v2572 = vsub.f32 1.0, %v2564
    %v2573 = vsub.f32 1.0, %v2565
    %v2574 = vsub.f32 1.0, %v2566
    %v2575 = vsub.f32 1.0, %v2567
    %v2576 = vsub.f32 1.0, %v2568
    %v2577 = vsub.f32 1.0, %v2569
    %v2578 = vsub.f32 1.0, %v2570
    %vm2579 = vcmp.lt.f32.partialorder %v2395, 0.0
    %vm2580 = vcmp.lt.f32.partialorder %v2396, 0.0
    %vm2581 = vcmp.lt.f32.partialorder %v2397, 0.0
    %vm2582 = vcmp.lt.f32.partialorder %v2398, 0.0
    %vm2583 = vcmp.lt.f32.partialorder %v2399, 0.0
    %vm2584 = vcmp.lt.f32.partialorder %v2400, 0.0
    %vm2585 = vcmp.lt.f32.partialorder %v2401, 0.0
    %vm2586 = vcmp.lt.f32.partialorder %v2402, 0.0
    %v2587 = vsub.f32 0.0, %v2571
    %v2588 = vsub.f32 0.0, %v2572
    %v2589 = vsub.f32 0.0, %v2573
    %v2590 = vsub.f32 0.0, %v2574
    %v2591 = vsub.f32 0.0, %v2575
    %v2592 = vsub.f32 0.0, %v2576
    %v2593 = vsub.f32 0.0, %v2577
    %v2594 = vsub.f32 0.0, %v2578
    %v2595 = vsel %vm2579, %v2587, %v2571
    %v2596 = vsel %vm2580, %v2588, %v2572
    %v2597 = vsel %vm2581, %v2589, %v2573
    %v2598 = vsel %vm2582, %v2590, %v2574
    %v2599 = vsel %vm2583, %v2591, %v2575
    %v2600 = vsel %vm2584, %v2592, %v2576
    %v2601 = vsel %vm2585, %v2593, %v2577
    %v2602 = vsel %vm2586, %v2594, %v2578
    %v2603 = vadd.f32 %v2595, 1.0
    %v2604 = vadd.f32 %v2596, 1.0
    %v2605 = vadd.f32 %v2597, 1.0
    %v2606 = vadd.f32 %v2598, 1.0
    %v2607 = vadd.f32 %v2599, 1.0
    %v2608 = vadd.f32 %v2600, 1.0
    %v2609 = vadd.f32 %v2601, 1.0
    %v2610 = vadd.f32 %v2602, 1.0
    %v2611 = vmul.f32 %v2387, %v2603
    %v2612 = vmul.f32 %v2388, %v2604
    %v2613 = vmul.f32 %v2389, %v2605
    %v2614 = vmul.f32 %v2390, %v2606
    %v2615 = vmul.f32 %v2391, %v2607
    %v2616 = vmul.f32 %v2392, %v2608
    %v2617 = vmul.f32 %v2393, %v2609
    %v2618 = vmul.f32 %v2394, %v2610
    %v2619 = vld [vmem:[#allocation8 + $0x600] sm:$0xff]
    %v2620 = vld [vmem:[#allocation8 + $0x608] sm:$0xff]
    %v2621 = vld [vmem:[#allocation8 + $0x610] sm:$0xff]
    %v2622 = vld [vmem:[#allocation8 + $0x618] sm:$0xff]
    %v2623 = vld [vmem:[#allocation8 + $0x620] sm:$0xff]
    %v2624 = vld [vmem:[#allocation8 + $0x628] sm:$0xff]
    %v2625 = vld [vmem:[#allocation8 + $0x630] sm:$0xff]
    %v2626 = vld [vmem:[#allocation8 + $0x638] sm:$0xff]
    %v2627 = vld [vmem:[#allocation8 + $0x640] sm:$0xff]
    %v2628 = vld [vmem:[#allocation8 + $0x648] sm:$0xff]
    %v2629 = vld [vmem:[#allocation8 + $0x650] sm:$0xff]
    %v2630 = vld [vmem:[#allocation8 + $0x658] sm:$0xff]
    %v2631 = vld [vmem:[#allocation8 + $0x660] sm:$0xff]
    %v2632 = vld [vmem:[#allocation8 + $0x668] sm:$0xff]
    %v2633 = vld [vmem:[#allocation8 + $0x670] sm:$0xff]
    %v2634 = vld [vmem:[#allocation8 + $0x678] sm:$0xff]
    %v2635 = vld [vmem:[#allocation8 + $0x680] sm:$0xff]
    %v2636 = vld [vmem:[#allocation8 + $0x688] sm:$0xff]
    %v2637 = vld [vmem:[#allocation8 + $0x690] sm:$0xff]
    %v2638 = vld [vmem:[#allocation8 + $0x698] sm:$0xff]
    %v2639 = vld [vmem:[#allocation8 + $0x6a0] sm:$0xff]
    %v2640 = vld [vmem:[#allocation8 + $0x6a8] sm:$0xff]
    %v2641 = vld [vmem:[#allocation8 + $0x6b0] sm:$0xff]
    %v2642 = vld [vmem:[#allocation8 + $0x6b8] sm:$0xff]
    %v2643 = vld [vmem:[#allocation8 + $0x6c0] sm:$0xff]
    %v2644 = vld [vmem:[#allocation8 + $0x6c8] sm:$0xff]
    %v2645 = vld [vmem:[#allocation8 + $0x6d0] sm:$0xff]
    %v2646 = vld [vmem:[#allocation8 + $0x6d8] sm:$0xff]
    %v2647 = vld [vmem:[#allocation8 + $0x6e0] sm:$0xff]
    %v2648 = vld [vmem:[#allocation8 + $0x6e8] sm:$0xff]
    %v2649 = vld [vmem:[#allocation8 + $0x6f0] sm:$0xff]
    %v2650 = vld [vmem:[#allocation8 + $0x6f8] sm:$0xff]
    %v2651 = vld [vmem:[#allocation8 + $0x700] sm:$0xff]
    %v2652 = vld [vmem:[#allocation8 + $0x708] sm:$0xff]
    %v2653 = vld [vmem:[#allocation8 + $0x710] sm:$0xff]
    %v2654 = vld [vmem:[#allocation8 + $0x718] sm:$0xff]
    %v2655 = vld [vmem:[#allocation8 + $0x720] sm:$0xff]
    %v2656 = vld [vmem:[#allocation8 + $0x728] sm:$0xff]
    %v2657 = vld [vmem:[#allocation8 + $0x730] sm:$0xff]
    %v2658 = vld [vmem:[#allocation8 + $0x738] sm:$0xff]
    %v2659 = vld [vmem:[#allocation8 + $0x740] sm:$0xff]
    %v2660 = vld [vmem:[#allocation8 + $0x748] sm:$0xff]
    %v2661 = vld [vmem:[#allocation8 + $0x750] sm:$0xff]
    %v2662 = vld [vmem:[#allocation8 + $0x758] sm:$0xff]
    %v2663 = vld [vmem:[#allocation8 + $0x760] sm:$0xff]
    %v2664 = vld [vmem:[#allocation8 + $0x768] sm:$0xff]
    %v2665 = vld [vmem:[#allocation8 + $0x770] sm:$0xff]
    %v2666 = vld [vmem:[#allocation8 + $0x778] sm:$0xff]
    %v2667 = vld [vmem:[#allocation8 + $0x780] sm:$0xff]
    %v2668 = vld [vmem:[#allocation8 + $0x788] sm:$0xff]
    %v2669 = vld [vmem:[#allocation8 + $0x790] sm:$0xff]
    %v2670 = vld [vmem:[#allocation8 + $0x798] sm:$0xff]
    %v2671 = vld [vmem:[#allocation8 + $0x7a0] sm:$0xff]
    %v2672 = vld [vmem:[#allocation8 + $0x7a8] sm:$0xff]
    %v2673 = vld [vmem:[#allocation8 + $0x7b0] sm:$0xff]
    %v2674 = vld [vmem:[#allocation8 + $0x7b8] sm:$0xff]
    %v2675 = vld [vmem:[#allocation8 + $0x7c0] sm:$0xff]
    %v2676 = vld [vmem:[#allocation8 + $0x7c8] sm:$0xff]
    %v2677 = vld [vmem:[#allocation8 + $0x7d0] sm:$0xff]
    %v2678 = vld [vmem:[#allocation8 + $0x7d8] sm:$0xff]
    %v2679 = vld [vmem:[#allocation8 + $0x7e0] sm:$0xff]
    %v2680 = vld [vmem:[#allocation8 + $0x7e8] sm:$0xff]
    %v2681 = vld [vmem:[#allocation8 + $0x7f0] sm:$0xff]
    %v2682 = vld [vmem:[#allocation8 + $0x7f8] sm:$0xff]
    %2683 = vmatprep.subr.mxu0 0.0
    %2684 = vmatpush1.msra.mxu0 %v2619
    %2685 = vmatprep.subr.mxu0 0.0
    %2686 = vmatpush1.msra.mxu0 %v2620
    %2687 = vmatprep.subr.mxu0 0.0
    %2688 = vmatpush1.msra.mxu0 %v2621
    %2689 = vmatprep.subr.mxu0 0.0
    %2690 = vmatpush1.msra.mxu0 %v2622
    %2691 = vmatprep.subr.mxu0 0.0
    %2692 = vmatpush1.msra.mxu0 %v2623
    %2693 = vmatprep.subr.mxu0 0.0
    %2694 = vmatpush1.msra.mxu0 %v2624
    %2695 = vmatprep.subr.mxu0 0.0
    %2696 = vmatpush1.msra.mxu0 %v2625
    %2697 = vmatprep.subr.mxu0 0.0
    %2698 = vmatpush1.msra.mxu0 %v2626
    %2699 = vmatprep.subr.mxu0 0.0
    %2700 = vmatpush1.msra.mxu0 %v2627
    %2701 = vmatprep.subr.mxu0 0.0
    %2702 = vmatpush1.msra.mxu0 %v2628
    %2703 = vmatprep.subr.mxu0 0.0
    %2704 = vmatpush1.msra.mxu0 %v2629
    %2705 = vmatprep.subr.mxu0 0.0
    %2706 = vmatpush1.msra.mxu0 %v2630
    %2707 = vmatprep.subr.mxu0 0.0
    %2708 = vmatpush1.msra.mxu0 %v2631
    %2709 = vmatprep.subr.mxu0 0.0
    %2710 = vmatpush1.msra.mxu0 %v2632
    %2711 = vmatprep.subr.mxu0 0.0
    %2712 = vmatpush1.msra.mxu0 %v2633
    %2713 = vmatprep.subr.mxu0 0.0
    %2714 = vmatpush1.msra.mxu0 %v2634
    %2715 = vmatprep.subr.mxu0 0.0
    %2716 = vmatpush1.msra.mxu0 %v2635
    %2717 = vmatprep.subr.mxu0 0.0
    %2718 = vmatpush1.msra.mxu0 %v2636
    %2719 = vmatprep.subr.mxu0 0.0
    %2720 = vmatpush1.msra.mxu0 %v2637
    %2721 = vmatprep.subr.mxu0 0.0
    %2722 = vmatpush1.msra.mxu0 %v2638
    %2723 = vmatprep.subr.mxu0 0.0
    %2724 = vmatpush1.msra.mxu0 %v2639
    %2725 = vmatprep.subr.mxu0 0.0
    %2726 = vmatpush1.msra.mxu0 %v2640
    %2727 = vmatprep.subr.mxu0 0.0
    %2728 = vmatpush1.msra.mxu0 %v2641
    %2729 = vmatprep.subr.mxu0 0.0
    %2730 = vmatpush1.msra.mxu0 %v2642
    %2731 = vmatprep.subr.mxu0 0.0
    %2732 = vmatpush1.msra.mxu0 %v2643
    %2733 = vmatprep.subr.mxu0 0.0
    %2734 = vmatpush1.msra.mxu0 %v2644
    %2735 = vmatprep.subr.mxu0 0.0
    %2736 = vmatpush1.msra.mxu0 %v2645
    %2737 = vmatprep.subr.mxu0 0.0
    %2738 = vmatpush1.msra.mxu0 %v2646
    %2739 = vmatprep.subr.mxu0 0.0
    %2740 = vmatpush1.msra.mxu0 %v2647
    %2741 = vmatprep.subr.mxu0 0.0
    %2742 = vmatpush1.msra.mxu0 %v2648
    %2743 = vmatprep.subr.mxu0 0.0
    %2744 = vmatpush1.msra.mxu0 %v2649
    %2745 = vmatprep.subr.mxu0 0.0
    %2746 = vmatpush1.msra.mxu0 %v2650
    %2747 = vmatprep.mubr.f32.mxu0 %v2612
    %2748 = vmatmul.mubr.f32.gmra.mrb[0].mxu0 %v2611
    %v2749 = vpop.f32.mrb[0].mxu0
    %v2750 = vadd.f32 0.0, %v2749
    %v2751 = vpop.f32.mrb[0].mxu0
    %2752 = vmatprep.mubr.f32.mxu0 %v2616
    %2753 = vmatmul.mubr.f32.gmra.mrb[0].mxu0 %v2615
    %v2754 = vpop.f32.mrb[0].mxu0
    %v2755 = vadd.f32 0.0, %v2754
    %v2756 = vpop.f32.mrb[0].mxu0
    %2757 = vdwg.mxu0
    %2758 = vmatprep.subr.mxu0 0.0
    %2759 = vmatpush1.msra.mxu0 %v2651
    %2760 = vmatprep.subr.mxu0 0.0
    %2761 = vmatpush1.msra.mxu0 %v2652
    %2762 = vmatprep.subr.mxu0 0.0
    %2763 = vmatpush1.msra.mxu0 %v2653
    %2764 = vmatprep.subr.mxu0 0.0
    %2765 = vmatpush1.msra.mxu0 %v2654
    %2766 = vmatprep.subr.mxu0 0.0
    %2767 = vmatpush1.msra.mxu0 %v2655
    %2768 = vmatprep.subr.mxu0 0.0
    %2769 = vmatpush1.msra.mxu0 %v2656
    %2770 = vmatprep.subr.mxu0 0.0
    %2771 = vmatpush1.msra.mxu0 %v2657
    %2772 = vmatprep.subr.mxu0 0.0
    %2773 = vmatpush1.msra.mxu0 %v2658
    %2774 = vmatprep.subr.mxu0 0.0
    %2775 = vmatpush1.msra.mxu0 %v2659
    %2776 = vmatprep.subr.mxu0 0.0
    %2777 = vmatpush1.msra.mxu0 %v2660
    %2778 = vmatprep.subr.mxu0 0.0
    %2779 = vmatpush1.msra.mxu0 %v2661
    %2780 = vmatprep.subr.mxu0 0.0
    %2781 = vmatpush1.msra.mxu0 %v2662
    %2782 = vmatprep.subr.mxu0 0.0
    %2783 = vmatpush1.msra.mxu0 %v2663
    %2784 = vmatprep.subr.mxu0 0.0
    %2785 = vmatpush1.msra.mxu0 %v2664
    %2786 = vmatprep.subr.mxu0 0.0
    %2787 = vmatpush1.msra.mxu0 %v2665
    %2788 = vmatprep.subr.mxu0 0.0
    %2789 = vmatpush1.msra.mxu0 %v2666
    %2790 = vmatprep.subr.mxu0 0.0
    %2791 = vmatpush1.msra.mxu0 %v2667
    %2792 = vmatprep.subr.mxu0 0.0
    %2793 = vmatpush1.msra.mxu0 %v2668
    %2794 = vmatprep.subr.mxu0 0.0
    %2795 = vmatpush1.msra.mxu0 %v2669
    %2796 = vmatprep.subr.mxu0 0.0
    %2797 = vmatpush1.msra.mxu0 %v2670
    %2798 = vmatprep.subr.mxu0 0.0
    %2799 = vmatpush1.msra.mxu0 %v2671
    %2800 = vmatprep.subr.mxu0 0.0
    %2801 = vmatpush1.msra.mxu0 %v2672
    %2802 = vmatprep.subr.mxu0 0.0
    %2803 = vmatpush1.msra.mxu0 %v2673
    %2804 = vmatprep.subr.mxu0 0.0
    %2805 = vmatpush1.msra.mxu0 %v2674
    %2806 = vmatprep.subr.mxu0 0.0
    %2807 = vmatpush1.msra.mxu0 %v2675
    %2808 = vmatprep.subr.mxu0 0.0
    %2809 = vmatpush1.msra.mxu0 %v2676
    %2810 = vmatprep.subr.mxu0 0.0
    %2811 = vmatpush1.msra.mxu0 %v2677
    %2812 = vmatprep.subr.mxu0 0.0
    %2813 = vmatpush1.msra.mxu0 %v2678
    %2814 = vmatprep.subr.mxu0 0.0
    %2815 = vmatpush1.msra.mxu0 %v2679
    %2816 = vmatprep.subr.mxu0 0.0
    %2817 = vmatpush1.msra.mxu0 %v2680
    %2818 = vmatprep.subr.mxu0 0.0
    %2819 = vmatpush1.msra.mxu0 %v2681
    %2820 = vmatprep.subr.mxu0 0.0
    %2821 = vmatpush1.msra.mxu0 %v2682
    %2822 = vmatprep.mubr.f32.mxu0 %v2614
    %2823 = vmatmul.mubr.f32.gmra.mrb[0].mxu0 %v2613
    %v2824 = vpop.f32.mrb[0].mxu0
    %v2825 = vadd.f32 %v2750, %v2824
    %v2826 = vpop.f32.mrb[0].mxu0
    %2827 = vmatprep.mubr.f32.mxu0 %v2618
    %2828 = vmatmul.mubr.f32.gmra.mrb[0].mxu0 %v2617
    %v2829 = vpop.f32.mrb[0].mxu0
    %v2830 = vadd.f32 %v2755, %v2829
    %v2831 = vpop.f32.mrb[0].mxu0
    %2832 = vdwg.mxu0
    %v2833 = vadd.f32 %v2145, %v2825
    %v2834 = vadd.f32 %v2146, %v2830
    %v2835 = vld [vmem:[#allocation5 + $0x80] sm:$0xff]
    %v2836 = vld [vmem:[#allocation5 + $0x88] sm:$0xff]
    %v2837 = vld [vmem:[#allocation5 + $0x90] sm:$0xff]
    %v2838 = vld [vmem:[#allocation5 + $0x98] sm:$0xff]
    %v2839 = vld [vmem:[#allocation5 + $0x140] sm:$0xff]
    %v2840 = vld [vmem:[#allocation5 + $0x148] sm:$0xff]
    %v2841 = vld [vmem:[#allocation5 + $0x150] sm:$0xff]
    %v2842 = vld [vmem:[#allocation5 + $0x158] sm:$0xff]
    %v2843 = vld [vmem:[#allocation5 + $0x200] sm:$0xff]
    %v2844 = vld [vmem:[#allocation5 + $0x208] sm:$0xff]
    %v2845 = vld [vmem:[#allocation5 + $0x210] sm:$0xff]
    %v2846 = vld [vmem:[#allocation5 + $0x218] sm:$0xff]
    %v2847 = vld [vmem:[#allocation5 + $0x2c0] sm:$0xff]
    %v2848 = vld [vmem:[#allocation5 + $0x2c8] sm:$0xff]
    %v2849 = vld [vmem:[#allocation5 + $0x2d0] sm:$0xff]
    %v2850 = vld [vmem:[#allocation5 + $0x2d8] sm:$0xff]
    %v2851 = vld [vmem:[#allocation5 + $0x380] sm:$0xff]
    %v2852 = vld [vmem:[#allocation5 + $0x388] sm:$0xff]
    %v2853 = vld [vmem:[#allocation5 + $0x390] sm:$0xff]
    %v2854 = vld [vmem:[#allocation5 + $0x398] sm:$0xff]
    %v2855 = vld [vmem:[#allocation5 + $0x440] sm:$0xff]
    %v2856 = vld [vmem:[#allocation5 + $0x448] sm:$0xff]
    %v2857 = vld [vmem:[#allocation5 + $0x450] sm:$0xff]
    %v2858 = vld [vmem:[#allocation5 + $0x458] sm:$0xff]
    %v2859 = vld [vmem:[#allocation5 + $0x500] sm:$0xff]
    %v2860 = vld [vmem:[#allocation5 + $0x508] sm:$0xff]
    %v2861 = vld [vmem:[#allocation5 + $0x510] sm:$0xff]
    %v2862 = vld [vmem:[#allocation5 + $0x518] sm:$0xff]
    %v2863 = vld [vmem:[#allocation5 + $0x5c0] sm:$0xff]
    %v2864 = vld [vmem:[#allocation5 + $0x5c8] sm:$0xff]
    %v2865 = vld [vmem:[#allocation5 + $0x5d0] sm:$0xff]
    %v2866 = vld [vmem:[#allocation5 + $0x5d8] sm:$0xff]
    %v2867 = vld [vmem:[#allocation5 + $0x680] sm:$0xff]
    %v2868 = vld [vmem:[#allocation5 + $0x688] sm:$0xff]
    %v2869 = vld [vmem:[#allocation5 + $0x690] sm:$0xff]
    %v2870 = vld [vmem:[#allocation5 + $0x698] sm:$0xff]
    %v2871 = vld [vmem:[#allocation5 + $0x740] sm:$0xff]
    %v2872 = vld [vmem:[#allocation5 + $0x748] sm:$0xff]
    %v2873 = vld [vmem:[#allocation5 + $0x750] sm:$0xff]
    %v2874 = vld [vmem:[#allocation5 + $0x758] sm:$0xff]
    %v2875 = vld [vmem:[#allocation5 + $0x800] sm:$0xff]
    %v2876 = vld [vmem:[#allocation5 + $0x808] sm:$0xff]
    %v2877 = vld [vmem:[#allocation5 + $0x810] sm:$0xff]
    %v2878 = vld [vmem:[#allocation5 + $0x818] sm:$0xff]
    %v2879 = vld [vmem:[#allocation5 + $0x8c0] sm:$0xff]
    %v2880 = vld [vmem:[#allocation5 + $0x8c8] sm:$0xff]
    %v2881 = vld [vmem:[#allocation5 + $0x8d0] sm:$0xff]
    %v2882 = vld [vmem:[#allocation5 + $0x8d8] sm:$0xff]
    %v2883 = vld [vmem:[#allocation5 + $0x980] sm:$0xff]
    %v2884 = vld [vmem:[#allocation5 + $0x988] sm:$0xff]
    %v2885 = vld [vmem:[#allocation5 + $0x990] sm:$0xff]
    %v2886 = vld [vmem:[#allocation5 + $0x998] sm:$0xff]
    %v2887 = vld [vmem:[#allocation5 + $0xa40] sm:$0xff]
    %v2888 = vld [vmem:[#allocation5 + $0xa48] sm:$0xff]
    %v2889 = vld [vmem:[#allocation5 + $0xa50] sm:$0xff]
    %v2890 = vld [vmem:[#allocation5 + $0xa58] sm:$0xff]
    %v2891 = vld [vmem:[#allocation5 + $0xb00] sm:$0xff]
    %v2892 = vld [vmem:[#allocation5 + $0xb08] sm:$0xff]
    %v2893 = vld [vmem:[#allocation5 + $0xb10] sm:$0xff]
    %v2894 = vld [vmem:[#allocation5 + $0xb18] sm:$0xff]
    %v2895 = vld [vmem:[#allocation5 + $0xbc0] sm:$0xff]
    %v2896 = vld [vmem:[#allocation5 + $0xbc8] sm:$0xff]
    %v2897 = vld [vmem:[#allocation5 + $0xbd0] sm:$0xff]
    %v2898 = vld [vmem:[#allocation5 + $0xbd8] sm:$0xff]
    %v2899 = vld [vmem:[#allocation7 + $0x10] sm:$0xf]
    %v2901 = vlaneseq
    %v2902 = vshrl.u32 %v2901, 7
    %v2903 = vsub.s32 0, %v2902
    %v2904 = vrot.slane %v2899, %v2903
    %v2905 = vlaneseq
    %v2906 = vshrl.u32 %v2905, 7
    %v2907 = vsub.s32 1, %v2906
    %v2908 = vrot.slane %v2899, %v2907
    %v2909 = vlaneseq
    %v2910 = vshrl.u32 %v2909, 7
    %v2911 = vsub.s32 2, %v2910
    %v2912 = vrot.slane %v2899, %v2911
    %v2913 = vlaneseq
    %v2914 = vshrl.u32 %v2913, 7
    %v2915 = vsub.s32 3, %v2914
    %v2916 = vrot.slane %v2899, %v2915
    %2921 = vmatprep.subr.mxu0 %v2836
    %2922 = vmatpush1.msra.mxu0 %v2835
    %2923 = vmatprep.subr.mxu0 %v2840
    %2924 = vmatpush1.msra.mxu0 %v2839
    %2925 = vmatprep.subr.mxu0 %v2844
    %2926 = vmatpush1.msra.mxu0 %v2843
    %2927 = vmatprep.subr.mxu0 %v2848
    %2928 = vmatpush1.msra.mxu0 %v2847
    %2929 = vmatprep.subr.mxu0 %v2852
    %2930 = vmatpush1.msra.mxu0 %v2851
    %2931 = vmatprep.subr.mxu0 %v2856
    %2932 = vmatpush1.msra.mxu0 %v2855
    %2933 = vmatprep.subr.mxu0 %v2860
    %2934 = vmatpush1.msra.mxu0 %v2859
    %2935 = vmatprep.subr.mxu0 %v2864
    %2936 = vmatpush1.msra.mxu0 %v2863
    %2937 = vmatprep.subr.mxu0 %v2868
    %2938 = vmatpush1.msra.mxu0 %v2867
    %2939 = vmatprep.subr.mxu0 %v2872
    %2940 = vmatpush1.msra.mxu0 %v2871
    %2941 = vmatprep.subr.mxu0 %v2876
    %2942 = vmatpush1.msra.mxu0 %v2875
    %2943 = vmatprep.subr.mxu0 %v2880
    %2944 = vmatpush1.msra.mxu0 %v2879
    %2945 = vmatprep.subr.mxu0 %v2884
    %2946 = vmatpush1.msra.mxu0 %v2883
    %2947 = vmatprep.subr.mxu0 %v2888
    %2948 = vmatpush1.msra.mxu0 %v2887
    %2949 = vmatprep.subr.mxu0 %v2892
    %2950 = vmatpush1.msra.mxu0 %v2891
    %2951 = vmatprep.subr.mxu0 %v2896
    %2952 = vmatpush1.msra.mxu0 %v2895
    %2953 = vmatprep.subr.mxu0 0.0
    %2954 = vmatpush1.msra.mxu0 0.0
    %2955 = vmatprep.subr.mxu0 0.0
    %2956 = vmatpush1.msra.mxu0 0.0
    %2957 = vmatprep.subr.mxu0 0.0
    %2958 = vmatpush1.msra.mxu0 0.0
    %2959 = vmatprep.subr.mxu0 0.0
    %2960 = vmatpush1.msra.mxu0 0.0
    %2961 = vmatprep.subr.mxu0 0.0
    %2962 = vmatpush1.msra.mxu0 0.0
    %2963 = vmatprep.subr.mxu0 0.0
    %2964 = vmatpush1.msra.mxu0 0.0
    %2965 = vmatprep.subr.mxu0 0.0
    %2966 = vmatpush1.msra.mxu0 0.0
    %2967 = vmatprep.subr.mxu0 0.0
    %2968 = vmatpush1.msra.mxu0 0.0
    %2969 = vmatprep.subr.mxu0 0.0
    %2970 = vmatpush1.msra.mxu0 0.0
    %2971 = vmatprep.subr.mxu0 0.0
    %2972 = vmatpush1.msra.mxu0 0.0
    %2973 = vmatprep.subr.mxu0 0.0
    %2974 = vmatpush1.msra.mxu0 0.0
    %2975 = vmatprep.subr.mxu0 0.0
    %2976 = vmatpush1.msra.mxu0 0.0
    %2977 = vmatprep.subr.mxu0 0.0
    %2978 = vmatpush1.msra.mxu0 0.0
    %2979 = vmatprep.subr.mxu0 0.0
    %2980 = vmatpush1.msra.mxu0 0.0
    %2981 = vmatprep.subr.mxu0 0.0
    %2982 = vmatpush1.msra.mxu0 0.0
    %2983 = vmatprep.subr.mxu0 0.0
    %2984 = vmatpush1.msra.mxu0 0.0
    %2985 = vmatprep.mubr.f32.mxu0 0.0
    %2986 = vmatmul.mubr.f32.gmra.mrb[0].mxu0 %v85
    %v2987 = vpop.f32.mrb[0].mxu0
    %v2988 = vadd.f32 %v2904, %v2987
    %v2989 = vpop.f32.mrb[0].mxu0
    %v2990 = vadd.f32 %v2908, %v2989
    %2991 = vmatprep.mubr.f32.mxu0 0.0
    %2992 = vmatmul.mubr.f32.gmra.mrb[0].mxu0 %v86
    %v2993 = vpop.f32.mrb[0].mxu0
    %v2994 = vadd.f32 %v2904, %v2993
    %v2995 = vpop.f32.mrb[0].mxu0
    %v2996 = vadd.f32 %v2908, %v2995
    %2997 = vdwg.mxu0
    %2998 = vmatprep.subr.mxu0 %v2838
    %2999 = vmatpush1.msra.mxu0 %v2837
    %3000 = vmatprep.subr.mxu0 %v2842
    %3001 = vmatpush1.msra.mxu0 %v2841
    %3002 = vmatprep.subr.mxu0 %v2846
    %3003 = vmatpush1.msra.mxu0 %v2845
    %3004 = vmatprep.subr.mxu0 %v2850
    %3005 = vmatpush1.msra.mxu0 %v2849
    %3006 = vmatprep.subr.mxu0 %v2854
    %3007 = vmatpush1.msra.mxu0 %v2853
    %3008 = vmatprep.subr.mxu0 %v2858
    %3009 = vmatpush1.msra.mxu0 %v2857
    %3010 = vmatprep.subr.mxu0 %v2862
    %3011 = vmatpush1.msra.mxu0 %v2861
    %3012 = vmatprep.subr.mxu0 %v2866
    %3013 = vmatpush1.msra.mxu0 %v2865
    %3014 = vmatprep.subr.mxu0 %v2870
    %3015 = vmatpush1.msra.mxu0 %v2869
    %3016 = vmatprep.subr.mxu0 %v2874
    %3017 = vmatpush1.msra.mxu0 %v2873
    %3018 = vmatprep.subr.mxu0 %v2878
    %3019 = vmatpush1.msra.mxu0 %v2877
    %3020 = vmatprep.subr.mxu0 %v2882
    %3021 = vmatpush1.msra.mxu0 %v2881
    %3022 = vmatprep.subr.mxu0 %v2886
    %3023 = vmatpush1.msra.mxu0 %v2885
    %3024 = vmatprep.subr.mxu0 %v2890
    %3025 = vmatpush1.msra.mxu0 %v2889
    %3026 = vmatprep.subr.mxu0 %v2894
    %3027 = vmatpush1.msra.mxu0 %v2893
    %3028 = vmatprep.subr.mxu0 %v2898
    %3029 = vmatpush1.msra.mxu0 %v2897
    %3030 = vmatprep.subr.mxu0 0.0
    %3031 = vmatpush1.msra.mxu0 0.0
    %3032 = vmatprep.subr.mxu0 0.0
    %3033 = vmatpush1.msra.mxu0 0.0
    %3034 = vmatprep.subr.mxu0 0.0
    %3035 = vmatpush1.msra.mxu0 0.0
    %3036 = vmatprep.subr.mxu0 0.0
    %3037 = vmatpush1.msra.mxu0 0.0
    %3038 = vmatprep.subr.mxu0 0.0
    %3039 = vmatpush1.msra.mxu0 0.0
    %3040 = vmatprep.subr.mxu0 0.0
    %3041 = vmatpush1.msra.mxu0 0.0
    %3042 = vmatprep.subr.mxu0 0.0
    %3043 = vmatpush1.msra.mxu0 0.0
    %3044 = vmatprep.subr.mxu0 0.0
    %3045 = vmatpush1.msra.mxu0 0.0
    %3046 = vmatprep.subr.mxu0 0.0
    %3047 = vmatpush1.msra.mxu0 0.0
    %3048 = vmatprep.subr.mxu0 0.0
    %3049 = vmatpush1.msra.mxu0 0.0
    %3050 = vmatprep.subr.mxu0 0.0
    %3051 = vmatpush1.msra.mxu0 0.0
    %3052 = vmatprep.subr.mxu0 0.0
    %3053 = vmatpush1.msra.mxu0 0.0
    %3054 = vmatprep.subr.mxu0 0.0
    %3055 = vmatpush1.msra.mxu0 0.0
    %3056 = vmatprep.subr.mxu0 0.0
    %3057 = vmatpush1.msra.mxu0 0.0
    %3058 = vmatprep.subr.mxu0 0.0
    %3059 = vmatpush1.msra.mxu0 0.0
    %3060 = vmatprep.subr.mxu0 0.0
    %3061 = vmatpush1.msra.mxu0 0.0
    %3062 = vmatprep.mubr.f32.mxu0 0.0
    %3063 = vmatmul.mubr.f32.gmra.mrb[0].mxu0 %v85
    %v3064 = vpop.f32.mrb[0].mxu0
    %v3065 = vadd.f32 %v2912, %v3064
    %v3066 = vpop.f32.mrb[0].mxu0
    %v3067 = vadd.f32 %v2916, %v3066
    %3068 = vmatprep.mubr.f32.mxu0 0.0
    %3069 = vmatmul.mubr.f32.gmra.mrb[0].mxu0 %v86
    %v3070 = vpop.f32.mrb[0].mxu0
    %v3071 = vadd.f32 %v2912, %v3070
    %v3072 = vpop.f32.mrb[0].mxu0
    %v3073 = vadd.f32 %v2916, %v3072
    %3074 = vdwg.mxu0
    %v3075 = vmul.f32 %v2988, 0.5
    %v3076 = vmul.f32 %v2990, 0.5
    %v3077 = vmul.f32 %v3065, 0.5
    %v3078 = vmul.f32 %v3067, 0.5
    %v3079 = vmul.f32 %v2994, 0.5
    %v3080 = vmul.f32 %v2996, 0.5
    %v3081 = vmul.f32 %v3071, 0.5
    %v3082 = vmul.f32 %v3073, 0.5
    %v3083 = vmul.f32 %v2988, 0.70710677
    %v3084 = vmul.f32 %v2990, 0.70710677
    %v3085 = vmul.f32 %v3065, 0.70710677
    %v3086 = vmul.f32 %v3067, 0.70710677
    %v3087 = vmul.f32 %v2994, 0.70710677
    %v3088 = vmul.f32 %v2996, 0.70710677
    %v3089 = vmul.f32 %v3071, 0.70710677
    %v3090 = vmul.f32 %v3073, 0.70710677
    %v3091 = vand.u32 2147483647, %v3083
    %v3092 = vand.u32 2147483647, %v3084
    %v3093 = vand.u32 2147483647, %v3085
    %v3094 = vand.u32 2147483647, %v3086
    %v3095 = vand.u32 2147483647, %v3087
    %v3096 = vand.u32 2147483647, %v3088
    %v3097 = vand.u32 2147483647, %v3089
    %v3098 = vand.u32 2147483647, %v3090
    %v3099 = vmul.f32 %v3091, 0.3275911
    %v3100 = vmul.f32 %v3092, 0.3275911
    %v3101 = vmul.f32 %v3093, 0.3275911
    %v3102 = vmul.f32 %v3094, 0.3275911
    %v3103 = vmul.f32 %v3095, 0.3275911
    %v3104 = vmul.f32 %v3096, 0.3275911
    %v3105 = vmul.f32 %v3097, 0.3275911
    %v3106 = vmul.f32 %v3098, 0.3275911
    %v3107 = vadd.f32 %v3099, 1.0
    %v3108 = vadd.f32 %v3100, 1.0
    %v3109 = vadd.f32 %v3101, 1.0
    %v3110 = vadd.f32 %v3102, 1.0
    %v3111 = vadd.f32 %v3103, 1.0
    %v3112 = vadd.f32 %v3104, 1.0
    %v3113 = vadd.f32 %v3105, 1.0
    %v3114 = vadd.f32 %v3106, 1.0
    %v3115 = vrcp.pop %v3107
    %v3116 = vrcp.pop %v3108
    %v3117 = vrcp.pop %v3109
    %v3118 = vrcp.pop %v3110
    %v3119 = vrcp.pop %v3111
    %v3120 = vrcp.pop %v3112
    %v3121 = vrcp.pop %v3113
    %v3122 = vrcp.pop %v3114
    %v3123 = vmul.f32 %v3107, %v3115
    %v3124 = vmul.f32 %v3108, %v3116
    %v3125 = vmul.f32 %v3109, %v3117
    %v3126 = vmul.f32 %v3110, %v3118
    %v3127 = vmul.f32 %v3111, %v3119
    %v3128 = vmul.f32 %v3112, %v3120
    %v3129 = vmul.f32 %v3113, %v3121
    %v3130 = vmul.f32 %v3114, %v3122
    %v3131 = vsub.f32 2.0, %v3123
    %v3132 = vsub.f32 2.0, %v3124
    %v3133 = vsub.f32 2.0, %v3125
    %v3134 = vsub.f32 2.0, %v3126
    %v3135 = vsub.f32 2.0, %v3127
    %v3136 = vsub.f32 2.0, %v3128
    %v3137 = vsub.f32 2.0, %v3129
    %v3138 = vsub.f32 2.0, %v3130
    %v3139 = vmul.f32 %v3115, %v3131
    %v3140 = vmul.f32 %v3116, %v3132
    %v3141 = vmul.f32 %v3117, %v3133
    %v3142 = vmul.f32 %v3118, %v3134
    %v3143 = vmul.f32 %v3119, %v3135
    %v3144 = vmul.f32 %v3120, %v3136
    %v3145 = vmul.f32 %v3121, %v3137
    %v3146 = vmul.f32 %v3122, %v3138
    %v3147 = vmul.f32 %v3139, 1.0614054
    %v3148 = vmul.f32 %v3140, 1.0614054
    %v3149 = vmul.f32 %v3141, 1.0614054
    %v3150 = vmul.f32 %v3142, 1.0614054
    %v3151 = vmul.f32 %v3143, 1.0614054
    %v3152 = vmul.f32 %v3144, 1.0614054
    %v3153 = vmul.f32 %v3145, 1.0614054
    %v3154 = vmul.f32 %v3146, 1.0614054
    %v3155 = vadd.f32 %v3147, -1.4531521
    %v3156 = vadd.f32 %v3148, -1.4531521
    %v3157 = vadd.f32 %v3149, -1.4531521
    %v3158 = vadd.f32 %v3150, -1.4531521
    %v3159 = vadd.f32 %v3151, -1.4531521
    %v3160 = vadd.f32 %v3152, -1.4531521
    %v3161 = vadd.f32 %v3153, -1.4531521
    %v3162 = vadd.f32 %v3154, -1.4531521
    %v3163 = vmul.f32 %v3155, %v3139
    %v3164 = vmul.f32 %v3156, %v3140
    %v3165 = vmul.f32 %v3157, %v3141
    %v3166 = vmul.f32 %v3158, %v3142
    %v3167 = vmul.f32 %v3159, %v3143
    %v3168 = vmul.f32 %v3160, %v3144
    %v3169 = vmul.f32 %v3161, %v3145
    %v3170 = vmul.f32 %v3162, %v3146
    %v3171 = vadd.f32 %v3163, 1.4214138
    %v3172 = vadd.f32 %v3164, 1.4214138
    %v3173 = vadd.f32 %v3165, 1.4214138
    %v3174 = vadd.f32 %v3166, 1.4214138
    %v3175 = vadd.f32 %v3167, 1.4214138
    %v3176 = vadd.f32 %v3168, 1.4214138
    %v3177 = vadd.f32 %v3169, 1.4214138
    %v3178 = vadd.f32 %v3170, 1.4214138
    %v3179 = vmul.f32 %v3171, %v3139
    %v3180 = vmul.f32 %v3172, %v3140
    %v3181 = vmul.f32 %v3173, %v3141
    %v3182 = vmul.f32 %v3174, %v3142
    %v3183 = vmul.f32 %v3175, %v3143
    %v3184 = vmul.f32 %v3176, %v3144
    %v3185 = vmul.f32 %v3177, %v3145
    %v3186 = vmul.f32 %v3178, %v3146
    %v3187 = vadd.f32 %v3179, -0.28449672
    %v3188 = vadd.f32 %v3180, -0.28449672
    %v3189 = vadd.f32 %v3181, -0.28449672
    %v3190 = vadd.f32 %v3182, -0.28449672
    %v3191 = vadd.f32 %v3183, -0.28449672
    %v3192 = vadd.f32 %v3184, -0.28449672
    %v3193 = vadd.f32 %v3185, -0.28449672
    %v3194 = vadd.f32 %v3186, -0.28449672
    %v3195 = vmul.f32 %v3187, %v3139
    %v3196 = vmul.f32 %v3188, %v3140
    %v3197 = vmul.f32 %v3189, %v3141
    %v3198 = vmul.f32 %v3190, %v3142
    %v3199 = vmul.f32 %v3191, %v3143
    %v3200 = vmul.f32 %v3192, %v3144
    %v3201 = vmul.f32 %v3193, %v3145
    %v3202 = vmul.f32 %v3194, %v3146
    %v3203 = vadd.f32 %v3195, 0.2548296
    %v3204 = vadd.f32 %v3196, 0.2548296
    %v3205 = vadd.f32 %v3197, 0.2548296
    %v3206 = vadd.f32 %v3198, 0.2548296
    %v3207 = vadd.f32 %v3199, 0.2548296
    %v3208 = vadd.f32 %v3200, 0.2548296
    %v3209 = vadd.f32 %v3201, 0.2548296
    %v3210 = vadd.f32 %v3202, 0.2548296
    %v3211 = vmul.f32 %v3203, %v3139
    %v3212 = vmul.f32 %v3204, %v3140
    %v3213 = vmul.f32 %v3205, %v3141
    %v3214 = vmul.f32 %v3206, %v3142
    %v3215 = vmul.f32 %v3207, %v3143
    %v3216 = vmul.f32 %v3208, %v3144
    %v3217 = vmul.f32 %v3209, %v3145
    %v3218 = vmul.f32 %v3210, %v3146
    %v3219 = vsub.f32 0.0, %v3091
    %v3220 = vsub.f32 0.0, %v3092
    %v3221 = vsub.f32 0.0, %v3093
    %v3222 = vsub.f32 0.0, %v3094
    %v3223 = vsub.f32 0.0, %v3095
    %v3224 = vsub.f32 0.0, %v3096
    %v3225 = vsub.f32 0.0, %v3097
    %v3226 = vsub.f32 0.0, %v3098
    %v3227 = vmul.f32 %v3219, %v3091
    %v3228 = vmul.f32 %v3220, %v3092
    %v3229 = vmul.f32 %v3221, %v3093
    %v3230 = vmul.f32 %v3222, %v3094
    %v3231 = vmul.f32 %v3223, %v3095
    %v3232 = vmul.f32 %v3224, %v3096
    %v3233 = vmul.f32 %v3225, %v3097
    %v3234 = vmul.f32 %v3226, %v3098
    %v3235 = vmul.f32 %v3227, 1.442695
    %v3236 = vpow.pop %v3235
    %v3237 = vmul.f32 %v3228, 1.442695
    %v3238 = vpow.pop %v3237
    %v3239 = vmul.f32 %v3229, 1.442695
    %v3240 = vpow.pop %v3239
    %v3241 = vmul.f32 %v3230, 1.442695
    %v3242 = vpow.pop %v3241
    %v3243 = vmul.f32 %v3231, 1.442695
    %v3244 = vpow.pop %v3243
    %v3245 = vmul.f32 %v3232, 1.442695
    %v3246 = vpow.pop %v3245
    %v3247 = vmul.f32 %v3233, 1.442695
    %v3248 = vpow.pop %v3247
    %v3249 = vmul.f32 %v3234, 1.442695
    %v3250 = vpow.pop %v3249
    %v3251 = vmul.f32 %v3211, %v3236
    %v3252 = vmul.f32 %v3212, %v3238
    %v3253 = vmul.f32 %v3213, %v3240
    %v3254 = vmul.f32 %v3214, %v3242
    %v3255 = vmul.f32 %v3215, %v3244
    %v3256 = vmul.f32 %v3216, %v3246
    %v3257 = vmul.f32 %v3217, %v3248
    %v3258 = vmul.f32 %v3218, %v3250
    %v3259 = vsub.f32 1.0, %v3251
    %v3260 = vsub.f32 1.0, %v3252
    %v3261 = vsub.f32 1.0, %v3253
    %v3262 = vsub.f32 1.0, %v3254
    %v3263 = vsub.f32 1.0, %v3255
    %v3264 = vsub.f32 1.0, %v3256
    %v3265 = vsub.f32 1.0, %v3257
    %v3266 = vsub.f32 1.0, %v3258
    %vm3267 = vcmp.lt.f32.partialorder %v3083, 0.0
    %vm3268 = vcmp.lt.f32.partialorder %v3084, 0.0
    %vm3269 = vcmp.lt.f32.partialorder %v3085, 0.0
    %vm3270 = vcmp.lt.f32.partialorder %v3086, 0.0
    %vm3271 = vcmp.lt.f32.partialorder %v3087, 0.0
    %vm3272 = vcmp.lt.f32.partialorder %v3088, 0.0
    %vm3273 = vcmp.lt.f32.partialorder %v3089, 0.0
    %vm3274 = vcmp.lt.f32.partialorder %v3090, 0.0
    %v3275 = vsub.f32 0.0, %v3259
    %v3276 = vsub.f32 0.0, %v3260
    %v3277 = vsub.f32 0.0, %v3261
    %v3278 = vsub.f32 0.0, %v3262
    %v3279 = vsub.f32 0.0, %v3263
    %v3280 = vsub.f32 0.0, %v3264
    %v3281 = vsub.f32 0.0, %v3265
    %v3282 = vsub.f32 0.0, %v3266
    %v3283 = vsel %vm3267, %v3275, %v3259
    %v3284 = vsel %vm3268, %v3276, %v3260
    %v3285 = vsel %vm3269, %v3277, %v3261
    %v3286 = vsel %vm3270, %v3278, %v3262
    %v3287 = vsel %vm3271, %v3279, %v3263
    %v3288 = vsel %vm3272, %v3280, %v3264
    %v3289 = vsel %vm3273, %v3281, %v3265
    %v3290 = vsel %vm3274, %v3282, %v3266
    %v3291 = vadd.f32 %v3283, 1.0
    %v3292 = vadd.f32 %v3284, 1.0
    %v3293 = vadd.f32 %v3285, 1.0
    %v3294 = vadd.f32 %v3286, 1.0
    %v3295 = vadd.f32 %v3287, 1.0
    %v3296 = vadd.f32 %v3288, 1.0
    %v3297 = vadd.f32 %v3289, 1.0
    %v3298 = vadd.f32 %v3290, 1.0
    %v3299 = vmul.f32 %v3075, %v3291
    %v3300 = vmul.f32 %v3076, %v3292
    %v3301 = vmul.f32 %v3077, %v3293
    %v3302 = vmul.f32 %v3078, %v3294
    %v3303 = vmul.f32 %v3079, %v3295
    %v3304 = vmul.f32 %v3080, %v3296
    %v3305 = vmul.f32 %v3081, %v3297
    %v3306 = vmul.f32 %v3082, %v3298
    %v3307 = vld [vmem:[#allocation8 + $0x800] sm:$0xff]
    %v3308 = vld [vmem:[#allocation8 + $0x808] sm:$0xff]
    %v3309 = vld [vmem:[#allocation8 + $0x810] sm:$0xff]
    %v3310 = vld [vmem:[#allocation8 + $0x818] sm:$0xff]
    %v3311 = vld [vmem:[#allocation8 + $0x820] sm:$0xff]
    %v3312 = vld [vmem:[#allocation8 + $0x828] sm:$0xff]
    %v3313 = vld [vmem:[#allocation8 + $0x830] sm:$0xff]
    %v3314 = vld [vmem:[#allocation8 + $0x838] sm:$0xff]
    %v3315 = vld [vmem:[#allocation8 + $0x840] sm:$0xff]
    %v3316 = vld [vmem:[#allocation8 + $0x848] sm:$0xff]
    %v3317 = vld [vmem:[#allocation8 + $0x850] sm:$0xff]
    %v3318 = vld [vmem:[#allocation8 + $0x858] sm:$0xff]
    %v3319 = vld [vmem:[#allocation8 + $0x860] sm:$0xff]
    %v3320 = vld [vmem:[#allocation8 + $0x868] sm:$0xff]
    %v3321 = vld [vmem:[#allocation8 + $0x870] sm:$0xff]
    %v3322 = vld [vmem:[#allocation8 + $0x878] sm:$0xff]
    %v3323 = vld [vmem:[#allocation8 + $0x880] sm:$0xff]
    %v3324 = vld [vmem:[#allocation8 + $0x888] sm:$0xff]
    %v3325 = vld [vmem:[#allocation8 + $0x890] sm:$0xff]
    %v3326 = vld [vmem:[#allocation8 + $0x898] sm:$0xff]
    %v3327 = vld [vmem:[#allocation8 + $0x8a0] sm:$0xff]
    %v3328 = vld [vmem:[#allocation8 + $0x8a8] sm:$0xff]
    %v3329 = vld [vmem:[#allocation8 + $0x8b0] sm:$0xff]
    %v3330 = vld [vmem:[#allocation8 + $0x8b8] sm:$0xff]
    %v3331 = vld [vmem:[#allocation8 + $0x8c0] sm:$0xff]
    %v3332 = vld [vmem:[#allocation8 + $0x8c8] sm:$0xff]
    %v3333 = vld [vmem:[#allocation8 + $0x8d0] sm:$0xff]
    %v3334 = vld [vmem:[#allocation8 + $0x8d8] sm:$0xff]
    %v3335 = vld [vmem:[#allocation8 + $0x8e0] sm:$0xff]
    %v3336 = vld [vmem:[#allocation8 + $0x8e8] sm:$0xff]
    %v3337 = vld [vmem:[#allocation8 + $0x8f0] sm:$0xff]
    %v3338 = vld [vmem:[#allocation8 + $0x8f8] sm:$0xff]
    %v3339 = vld [vmem:[#allocation8 + $0x900] sm:$0xff]
    %v3340 = vld [vmem:[#allocation8 + $0x908] sm:$0xff]
    %v3341 = vld [vmem:[#allocation8 + $0x910] sm:$0xff]
    %v3342 = vld [vmem:[#allocation8 + $0x918] sm:$0xff]
    %v3343 = vld [vmem:[#allocation8 + $0x920] sm:$0xff]
    %v3344 = vld [vmem:[#allocation8 + $0x928] sm:$0xff]
    %v3345 = vld [vmem:[#allocation8 + $0x930] sm:$0xff]
    %v3346 = vld [vmem:[#allocation8 + $0x938] sm:$0xff]
    %v3347 = vld [vmem:[#allocation8 + $0x940] sm:$0xff]
    %v3348 = vld [vmem:[#allocation8 + $0x948] sm:$0xff]
    %v3349 = vld [vmem:[#allocation8 + $0x950] sm:$0xff]
    %v3350 = vld [vmem:[#allocation8 + $0x958] sm:$0xff]
    %v3351 = vld [vmem:[#allocation8 + $0x960] sm:$0xff]
    %v3352 = vld [vmem:[#allocation8 + $0x968] sm:$0xff]
    %v3353 = vld [vmem:[#allocation8 + $0x970] sm:$0xff]
    %v3354 = vld [vmem:[#allocation8 + $0x978] sm:$0xff]
    %v3355 = vld [vmem:[#allocation8 + $0x980] sm:$0xff]
    %v3356 = vld [vmem:[#allocation8 + $0x988] sm:$0xff]
    %v3357 = vld [vmem:[#allocation8 + $0x990] sm:$0xff]
    %v3358 = vld [vmem:[#allocation8 + $0x998] sm:$0xff]
    %v3359 = vld [vmem:[#allocation8 + $0x9a0] sm:$0xff]
    %v3360 = vld [vmem:[#allocation8 + $0x9a8] sm:$0xff]
    %v3361 = vld [vmem:[#allocation8 + $0x9b0] sm:$0xff]
    %v3362 = vld [vmem:[#allocation8 + $0x9b8] sm:$0xff]
    %v3363 = vld [vmem:[#allocation8 + $0x9c0] sm:$0xff]
    %v3364 = vld [vmem:[#allocation8 + $0x9c8] sm:$0xff]
    %v3365 = vld [vmem:[#allocation8 + $0x9d0] sm:$0xff]
    %v3366 = vld [vmem:[#allocation8 + $0x9d8] sm:$0xff]
    %v3367 = vld [vmem:[#allocation8 + $0x9e0] sm:$0xff]
    %v3368 = vld [vmem:[#allocation8 + $0x9e8] sm:$0xff]
    %v3369 = vld [vmem:[#allocation8 + $0x9f0] sm:$0xff]
    %v3370 = vld [vmem:[#allocation8 + $0x9f8] sm:$0xff]
    %3371 = vmatprep.subr.mxu0 0.0
    %3372 = vmatpush1.msra.mxu0 %v3307
    %3373 = vmatprep.subr.mxu0 0.0
    %3374 = vmatpush1.msra.mxu0 %v3308
    %3375 = vmatprep.subr.mxu0 0.0
    %3376 = vmatpush1.msra.mxu0 %v3309
    %3377 = vmatprep.subr.mxu0 0.0
    %3378 = vmatpush1.msra.mxu0 %v3310
    %3379 = vmatprep.subr.mxu0 0.0
    %3380 = vmatpush1.msra.mxu0 %v3311
    %3381 = vmatprep.subr.mxu0 0.0
    %3382 = vmatpush1.msra.mxu0 %v3312
    %3383 = vmatprep.subr.mxu0 0.0
    %3384 = vmatpush1.msra.mxu0 %v3313
    %3385 = vmatprep.subr.mxu0 0.0
    %3386 = vmatpush1.msra.mxu0 %v3314
    %3387 = vmatprep.subr.mxu0 0.0
    %3388 = vmatpush1.msra.mxu0 %v3315
    %3389 = vmatprep.subr.mxu0 0.0
    %3390 = vmatpush1.msra.mxu0 %v3316
    %3391 = vmatprep.subr.mxu0 0.0
    %3392 = vmatpush1.msra.mxu0 %v3317
    %3393 = vmatprep.subr.mxu0 0.0
    %3394 = vmatpush1.msra.mxu0 %v3318
    %3395 = vmatprep.subr.mxu0 0.0
    %3396 = vmatpush1.msra.mxu0 %v3319
    %3397 = vmatprep.subr.mxu0 0.0
    %3398 = vmatpush1.msra.mxu0 %v3320
    %3399 = vmatprep.subr.mxu0 0.0
    %3400 = vmatpush1.msra.mxu0 %v3321
    %3401 = vmatprep.subr.mxu0 0.0
    %3402 = vmatpush1.msra.mxu0 %v3322
    %3403 = vmatprep.subr.mxu0 0.0
    %3404 = vmatpush1.msra.mxu0 %v3323
    %3405 = vmatprep.subr.mxu0 0.0
    %3406 = vmatpush1.msra.mxu0 %v3324
    %3407 = vmatprep.subr.mxu0 0.0
    %3408 = vmatpush1.msra.mxu0 %v3325
    %3409 = vmatprep.subr.mxu0 0.0
    %3410 = vmatpush1.msra.mxu0 %v3326
    %3411 = vmatprep.subr.mxu0 0.0
    %3412 = vmatpush1.msra.mxu0 %v3327
    %3413 = vmatprep.subr.mxu0 0.0
    %3414 = vmatpush1.msra.mxu0 %v3328
    %3415 = vmatprep.subr.mxu0 0.0
    %3416 = vmatpush1.msra.mxu0 %v3329
    %3417 = vmatprep.subr.mxu0 0.0
    %3418 = vmatpush1.msra.mxu0 %v3330
    %3419 = vmatprep.subr.mxu0 0.0
    %3420 = vmatpush1.msra.mxu0 %v3331
    %3421 = vmatprep.subr.mxu0 0.0
    %3422 = vmatpush1.msra.mxu0 %v3332
    %3423 = vmatprep.subr.mxu0 0.0
    %3424 = vmatpush1.msra.mxu0 %v3333
    %3425 = vmatprep.subr.mxu0 0.0
    %3426 = vmatpush1.msra.mxu0 %v3334
    %3427 = vmatprep.subr.mxu0 0.0
    %3428 = vmatpush1.msra.mxu0 %v3335
    %3429 = vmatprep.subr.mxu0 0.0
    %3430 = vmatpush1.msra.mxu0 %v3336
    %3431 = vmatprep.subr.mxu0 0.0
    %3432 = vmatpush1.msra.mxu0 %v3337
    %3433 = vmatprep.subr.mxu0 0.0
    %3434 = vmatpush1.msra.mxu0 %v3338
    %3435 = vmatprep.mubr.f32.mxu0 %v3300
    %3436 = vmatmul.mubr.f32.gmra.mrb[0].mxu0 %v3299
    %v3437 = vpop.f32.mrb[0].mxu0
    %v3438 = vadd.f32 0.0, %v3437
    %v3439 = vpop.f32.mrb[0].mxu0
    %3440 = vmatprep.mubr.f32.mxu0 %v3304
    %3441 = vmatmul.mubr.f32.gmra.mrb[0].mxu0 %v3303
    %v3442 = vpop.f32.mrb[0].mxu0
    %v3443 = vadd.f32 0.0, %v3442
    %v3444 = vpop.f32.mrb[0].mxu0
    %3445 = vdwg.mxu0
    %3446 = vmatprep.subr.mxu0 0.0
    %3447 = vmatpush1.msra.mxu0 %v3339
    %3448 = vmatprep.subr.mxu0 0.0
    %3449 = vmatpush1.msra.mxu0 %v3340
    %3450 = vmatprep.subr.mxu0 0.0
    %3451 = vmatpush1.msra.mxu0 %v3341
    %3452 = vmatprep.subr.mxu0 0.0
    %3453 = vmatpush1.msra.mxu0 %v3342
    %3454 = vmatprep.subr.mxu0 0.0
    %3455 = vmatpush1.msra.mxu0 %v3343
    %3456 = vmatprep.subr.mxu0 0.0
    %3457 = vmatpush1.msra.mxu0 %v3344
    %3458 = vmatprep.subr.mxu0 0.0
    %3459 = vmatpush1.msra.mxu0 %v3345
    %3460 = vmatprep.subr.mxu0 0.0
    %3461 = vmatpush1.msra.mxu0 %v3346
    %3462 = vmatprep.subr.mxu0 0.0
    %3463 = vmatpush1.msra.mxu0 %v3347
    %3464 = vmatprep.subr.mxu0 0.0
    %3465 = vmatpush1.msra.mxu0 %v3348
    %3466 = vmatprep.subr.mxu0 0.0
    %3467 = vmatpush1.msra.mxu0 %v3349
    %3468 = vmatprep.subr.mxu0 0.0
    %3469 = vmatpush1.msra.mxu0 %v3350
    %3470 = vmatprep.subr.mxu0 0.0
    %3471 = vmatpush1.msra.mxu0 %v3351
    %3472 = vmatprep.subr.mxu0 0.0
    %3473 = vmatpush1.msra.mxu0 %v3352
    %3474 = vmatprep.subr.mxu0 0.0
    %3475 = vmatpush1.msra.mxu0 %v3353
    %3476 = vmatprep.subr.mxu0 0.0
    %3477 = vmatpush1.msra.mxu0 %v3354
    %3478 = vmatprep.subr.mxu0 0.0
    %3479 = vmatpush1.msra.mxu0 %v3355
    %3480 = vmatprep.subr.mxu0 0.0
    %3481 = vmatpush1.msra.mxu0 %v3356
    %3482 = vmatprep.subr.mxu0 0.0
    %3483 = vmatpush1.msra.mxu0 %v3357
    %3484 = vmatprep.subr.mxu0 0.0
    %3485 = vmatpush1.msra.mxu0 %v3358
    %3486 = vmatprep.subr.mxu0 0.0
    %3487 = vmatpush1.msra.mxu0 %v3359
    %3488 = vmatprep.subr.mxu0 0.0
    %3489 = vmatpush1.msra.mxu0 %v3360
    %3490 = vmatprep.subr.mxu0 0.0
    %3491 = vmatpush1.msra.mxu0 %v3361
    %3492 = vmatprep.subr.mxu0 0.0
    %3493 = vmatpush1.msra.mxu0 %v3362
    %3494 = vmatprep.subr.mxu0 0.0
    %3495 = vmatpush1.msra.mxu0 %v3363
    %3496 = vmatprep.subr.mxu0 0.0
    %3497 = vmatpush1.msra.mxu0 %v3364
    %3498 = vmatprep.subr.mxu0 0.0
    %3499 = vmatpush1.msra.mxu0 %v3365
    %3500 = vmatprep.subr.mxu0 0.0
    %3501 = vmatpush1.msra.mxu0 %v3366
    %3502 = vmatprep.subr.mxu0 0.0
    %3503 = vmatpush1.msra.mxu0 %v3367
    %3504 = vmatprep.subr.mxu0 0.0
    %3505 = vmatpush1.msra.mxu0 %v3368
    %3506 = vmatprep.subr.mxu0 0.0
    %3507 = vmatpush1.msra.mxu0 %v3369
    %3508 = vmatprep.subr.mxu0 0.0
    %3509 = vmatpush1.msra.mxu0 %v3370
    %3510 = vmatprep.mubr.f32.mxu0 %v3302
    %3511 = vmatmul.mubr.f32.gmra.mrb[0].mxu0 %v3301
    %v3512 = vpop.f32.mrb[0].mxu0
    %v3513 = vadd.f32 %v3438, %v3512
    %v3514 = vpop.f32.mrb[0].mxu0
    %3515 = vmatprep.mubr.f32.mxu0 %v3306
    %3516 = vmatmul.mubr.f32.gmra.mrb[0].mxu0 %v3305
    %v3517 = vpop.f32.mrb[0].mxu0
    %v3518 = vadd.f32 %v3443, %v3517
    %v3519 = vpop.f32.mrb[0].mxu0
    %3520 = vdwg.mxu0
    %v3521 = vadd.f32 %v2833, %v3513
    %v3522 = vadd.f32 %v2834, %v3518
    %v3523 = vld [vmem:[#allocation5 + $0xa0] sm:$0xff]
    %v3524 = vld [vmem:[#allocation5 + $0xa8] sm:$0xff]
    %v3525 = vld [vmem:[#allocation5 + $0xb0] sm:$0xff]
    %v3526 = vld [vmem:[#allocation5 + $0xb8] sm:$0xff]
    %v3527 = vld [vmem:[#allocation5 + $0x160] sm:$0xff]
    %v3528 = vld [vmem:[#allocation5 + $0x168] sm:$0xff]
    %v3529 = vld [vmem:[#allocation5 + $0x170] sm:$0xff]
    %v3530 = vld [vmem:[#allocation5 + $0x178] sm:$0xff]
    %v3531 = vld [vmem:[#allocation5 + $0x220] sm:$0xff]
    %v3532 = vld [vmem:[#allocation5 + $0x228] sm:$0xff]
    %v3533 = vld [vmem:[#allocation5 + $0x230] sm:$0xff]
    %v3534 = vld [vmem:[#allocation5 + $0x238] sm:$0xff]
    %v3535 = vld [vmem:[#allocation5 + $0x2e0] sm:$0xff]
    %v3536 = vld [vmem:[#allocation5 + $0x2e8] sm:$0xff]
    %v3537 = vld [vmem:[#allocation5 + $0x2f0] sm:$0xff]
    %v3538 = vld [vmem:[#allocation5 + $0x2f8] sm:$0xff]
    %v3539 = vld [vmem:[#allocation5 + $0x3a0] sm:$0xff]
    %v3540 = vld [vmem:[#allocation5 + $0x3a8] sm:$0xff]
    %v3541 = vld [vmem:[#allocation5 + $0x3b0] sm:$0xff]
    %v3542 = vld [vmem:[#allocation5 + $0x3b8] sm:$0xff]
    %v3543 = vld [vmem:[#allocation5 + $0x460] sm:$0xff]
    %v3544 = vld [vmem:[#allocation5 + $0x468] sm:$0xff]
    %v3545 = vld [vmem:[#allocation5 + $0x470] sm:$0xff]
    %v3546 = vld [vmem:[#allocation5 + $0x478] sm:$0xff]
    %v3547 = vld [vmem:[#allocation5 + $0x520] sm:$0xff]
    %v3548 = vld [vmem:[#allocation5 + $0x528] sm:$0xff]
    %v3549 = vld [vmem:[#allocation5 + $0x530] sm:$0xff]
    %v3550 = vld [vmem:[#allocation5 + $0x538] sm:$0xff]
    %v3551 = vld [vmem:[#allocation5 + $0x5e0] sm:$0xff]
    %v3552 = vld [vmem:[#allocation5 + $0x5e8] sm:$0xff]
    %v3553 = vld [vmem:[#allocation5 + $0x5f0] sm:$0xff]
    %v3554 = vld [vmem:[#allocation5 + $0x5f8] sm:$0xff]
    %v3555 = vld [vmem:[#allocation5 + $0x6a0] sm:$0xff]
    %v3556 = vld [vmem:[#allocation5 + $0x6a8] sm:$0xff]
    %v3557 = vld [vmem:[#allocation5 + $0x6b0] sm:$0xff]
    %v3558 = vld [vmem:[#allocation5 + $0x6b8] sm:$0xff]
    %v3559 = vld [vmem:[#allocation5 + $0x760] sm:$0xff]
    %v3560 = vld [vmem:[#allocation5 + $0x768] sm:$0xff]
    %v3561 = vld [vmem:[#allocation5 + $0x770] sm:$0xff]
    %v3562 = vld [vmem:[#allocation5 + $0x778] sm:$0xff]
    %v3563 = vld [vmem:[#allocation5 + $0x820] sm:$0xff]
    %v3564 = vld [vmem:[#allocation5 + $0x828] sm:$0xff]
    %v3565 = vld [vmem:[#allocation5 + $0x830] sm:$0xff]
    %v3566 = vld [vmem:[#allocation5 + $0x838] sm:$0xff]
    %v3567 = vld [vmem:[#allocation5 + $0x8e0] sm:$0xff]
    %v3568 = vld [vmem:[#allocation5 + $0x8e8] sm:$0xff]
    %v3569 = vld [vmem:[#allocation5 + $0x8f0] sm:$0xff]
    %v3570 = vld [vmem:[#allocation5 + $0x8f8] sm:$0xff]
    %v3571 = vld [vmem:[#allocation5 + $0x9a0] sm:$0xff]
    %v3572 = vld [vmem:[#allocation5 + $0x9a8] sm:$0xff]
    %v3573 = vld [vmem:[#allocation5 + $0x9b0] sm:$0xff]
    %v3574 = vld [vmem:[#allocation5 + $0x9b8] sm:$0xff]
    %v3575 = vld [vmem:[#allocation5 + $0xa60] sm:$0xff]
    %v3576 = vld [vmem:[#allocation5 + $0xa68] sm:$0xff]
    %v3577 = vld [vmem:[#allocation5 + $0xa70] sm:$0xff]
    %v3578 = vld [vmem:[#allocation5 + $0xa78] sm:$0xff]
    %v3579 = vld [vmem:[#allocation5 + $0xb20] sm:$0xff]
    %v3580 = vld [vmem:[#allocation5 + $0xb28] sm:$0xff]
    %v3581 = vld [vmem:[#allocation5 + $0xb30] sm:$0xff]
    %v3582 = vld [vmem:[#allocation5 + $0xb38] sm:$0xff]
    %v3583 = vld [vmem:[#allocation5 + $0xbe0] sm:$0xff]
    %v3584 = vld [vmem:[#allocation5 + $0xbe8] sm:$0xff]
    %v3585 = vld [vmem:[#allocation5 + $0xbf0] sm:$0xff]
    %v3586 = vld [vmem:[#allocation5 + $0xbf8] sm:$0xff]
    %v3587 = vld [vmem:[#allocation7 + $0x14] sm:$0xf]
    %v3589 = vlaneseq
    %v3590 = vshrl.u32 %v3589, 7
    %v3591 = vsub.s32 0, %v3590
    %v3592 = vrot.slane %v3587, %v3591
    %v3593 = vlaneseq
    %v3594 = vshrl.u32 %v3593, 7
    %v3595 = vsub.s32 1, %v3594
    %v3596 = vrot.slane %v3587, %v3595
    %v3597 = vlaneseq
    %v3598 = vshrl.u32 %v3597, 7
    %v3599 = vsub.s32 2, %v3598
    %v3600 = vrot.slane %v3587, %v3599
    %v3601 = vlaneseq
    %v3602 = vshrl.u32 %v3601, 7
    %v3603 = vsub.s32 3, %v3602
    %v3604 = vrot.slane %v3587, %v3603
    %3609 = vmatprep.subr.mxu0 %v3524
    %3610 = vmatpush1.msra.mxu0 %v3523
    %3611 = vmatprep.subr.mxu0 %v3528
    %3612 = vmatpush1.msra.mxu0 %v3527
    %3613 = vmatprep.subr.mxu0 %v3532
    %3614 = vmatpush1.msra.mxu0 %v3531
    %3615 = vmatprep.subr.mxu0 %v3536
    %3616 = vmatpush1.msra.mxu0 %v3535
    %3617 = vmatprep.subr.mxu0 %v3540
    %3618 = vmatpush1.msra.mxu0 %v3539
    %3619 = vmatprep.subr.mxu0 %v3544
    %3620 = vmatpush1.msra.mxu0 %v3543
    %3621 = vmatprep.subr.mxu0 %v3548
    %3622 = vmatpush1.msra.mxu0 %v3547
    %3623 = vmatprep.subr.mxu0 %v3552
    %3624 = vmatpush1.msra.mxu0 %v3551
    %3625 = vmatprep.subr.mxu0 %v3556
    %3626 = vmatpush1.msra.mxu0 %v3555
    %3627 = vmatprep.subr.mxu0 %v3560
    %3628 = vmatpush1.msra.mxu0 %v3559
    %3629 = vmatprep.subr.mxu0 %v3564
    %3630 = vmatpush1.msra.mxu0 %v3563
    %3631 = vmatprep.subr.mxu0 %v3568
    %3632 = vmatpush1.msra.mxu0 %v3567
    %3633 = vmatprep.subr.mxu0 %v3572
    %3634 = vmatpush1.msra.mxu0 %v3571
    %3635 = vmatprep.subr.mxu0 %v3576
    %3636 = vmatpush1.msra.mxu0 %v3575
    %3637 = vmatprep.subr.mxu0 %v3580
    %3638 = vmatpush1.msra.mxu0 %v3579
    %3639 = vmatprep.subr.mxu0 %v3584
    %3640 = vmatpush1.msra.mxu0 %v3583
    %3641 = vmatprep.subr.mxu0 0.0
    %3642 = vmatpush1.msra.mxu0 0.0
    %3643 = vmatprep.subr.mxu0 0.0
    %3644 = vmatpush1.msra.mxu0 0.0
    %3645 = vmatprep.subr.mxu0 0.0
    %3646 = vmatpush1.msra.mxu0 0.0
    %3647 = vmatprep.subr.mxu0 0.0
    %3648 = vmatpush1.msra.mxu0 0.0
    %3649 = vmatprep.subr.mxu0 0.0
    %3650 = vmatpush1.msra.mxu0 0.0
    %3651 = vmatprep.subr.mxu0 0.0
    %3652 = vmatpush1.msra.mxu0 0.0
    %3653 = vmatprep.subr.mxu0 0.0
    %3654 = vmatpush1.msra.mxu0 0.0
    %3655 = vmatprep.subr.mxu0 0.0
    %3656 = vmatpush1.msra.mxu0 0.0
    %3657 = vmatprep.subr.mxu0 0.0
    %3658 = vmatpush1.msra.mxu0 0.0
    %3659 = vmatprep.subr.mxu0 0.0
    %3660 = vmatpush1.msra.mxu0 0.0
    %3661 = vmatprep.subr.mxu0 0.0
    %3662 = vmatpush1.msra.mxu0 0.0
    %3663 = vmatprep.subr.mxu0 0.0
    %3664 = vmatpush1.msra.mxu0 0.0
    %3665 = vmatprep.subr.mxu0 0.0
    %3666 = vmatpush1.msra.mxu0 0.0
    %3667 = vmatprep.subr.mxu0 0.0
    %3668 = vmatpush1.msra.mxu0 0.0
    %3669 = vmatprep.subr.mxu0 0.0
    %3670 = vmatpush1.msra.mxu0 0.0
    %3671 = vmatprep.subr.mxu0 0.0
    %3672 = vmatpush1.msra.mxu0 0.0
    %3673 = vmatprep.mubr.f32.mxu0 0.0
    %3674 = vmatmul.mubr.f32.gmra.mrb[0].mxu0 %v85
    %v3675 = vpop.f32.mrb[0].mxu0
    %v3676 = vadd.f32 %v3592, %v3675
    %v3677 = vpop.f32.mrb[0].mxu0
    %v3678 = vadd.f32 %v3596, %v3677
    %3679 = vmatprep.mubr.f32.mxu0 0.0
    %3680 = vmatmul.mubr.f32.gmra.mrb[0].mxu0 %v86
    %v3681 = vpop.f32.mrb[0].mxu0
    %v3682 = vadd.f32 %v3592, %v3681
    %v3683 = vpop.f32.mrb[0].mxu0
    %v3684 = vadd.f32 %v3596, %v3683
    %3685 = vdwg.mxu0
    %3686 = vmatprep.subr.mxu0 %v3526
    %3687 = vmatpush1.msra.mxu0 %v3525
    %3688 = vmatprep.subr.mxu0 %v3530
    %3689 = vmatpush1.msra.mxu0 %v3529
    %3690 = vmatprep.subr.mxu0 %v3534
    %3691 = vmatpush1.msra.mxu0 %v3533
    %3692 = vmatprep.subr.mxu0 %v3538
    %3693 = vmatpush1.msra.mxu0 %v3537
    %3694 = vmatprep.subr.mxu0 %v3542
    %3695 = vmatpush1.msra.mxu0 %v3541
    %3696 = vmatprep.subr.mxu0 %v3546
    %3697 = vmatpush1.msra.mxu0 %v3545
    %3698 = vmatprep.subr.mxu0 %v3550
    %3699 = vmatpush1.msra.mxu0 %v3549
    %3700 = vmatprep.subr.mxu0 %v3554
    %3701 = vmatpush1.msra.mxu0 %v3553
    %3702 = vmatprep.subr.mxu0 %v3558
    %3703 = vmatpush1.msra.mxu0 %v3557
    %3704 = vmatprep.subr.mxu0 %v3562
    %3705 = vmatpush1.msra.mxu0 %v3561
    %3706 = vmatprep.subr.mxu0 %v3566
    %3707 = vmatpush1.msra.mxu0 %v3565
    %3708 = vmatprep.subr.mxu0 %v3570
    %3709 = vmatpush1.msra.mxu0 %v3569
    %3710 = vmatprep.subr.mxu0 %v3574
    %3711 = vmatpush1.msra.mxu0 %v3573
    %3712 = vmatprep.subr.mxu0 %v3578
    %3713 = vmatpush1.msra.mxu0 %v3577
    %3714 = vmatprep.subr.mxu0 %v3582
    %3715 = vmatpush1.msra.mxu0 %v3581
    %3716 = vmatprep.subr.mxu0 %v3586
    %3717 = vmatpush1.msra.mxu0 %v3585
    %3718 = vmatprep.subr.mxu0 0.0
    %3719 = vmatpush1.msra.mxu0 0.0
    %3720 = vmatprep.subr.mxu0 0.0
    %3721 = vmatpush1.msra.mxu0 0.0
    %3722 = vmatprep.subr.mxu0 0.0
    %3723 = vmatpush1.msra.mxu0 0.0
    %3724 = vmatprep.subr.mxu0 0.0
    %3725 = vmatpush1.msra.mxu0 0.0
    %3726 = vmatprep.subr.mxu0 0.0
    %3727 = vmatpush1.msra.mxu0 0.0
    %3728 = vmatprep.subr.mxu0 0.0
    %3729 = vmatpush1.msra.mxu0 0.0
    %3730 = vmatprep.subr.mxu0 0.0
    %3731 = vmatpush1.msra.mxu0 0.0
    %3732 = vmatprep.subr.mxu0 0.0
    %3733 = vmatpush1.msra.mxu0 0.0
    %3734 = vmatprep.subr.mxu0 0.0
    %3735 = vmatpush1.msra.mxu0 0.0
    %3736 = vmatprep.subr.mxu0 0.0
    %3737 = vmatpush1.msra.mxu0 0.0
    %3738 = vmatprep.subr.mxu0 0.0
    %3739 = vmatpush1.msra.mxu0 0.0
    %3740 = vmatprep.subr.mxu0 0.0
    %3741 = vmatpush1.msra.mxu0 0.0
    %3742 = vmatprep.subr.mxu0 0.0
    %3743 = vmatpush1.msra.mxu0 0.0
    %3744 = vmatprep.subr.mxu0 0.0
    %3745 = vmatpush1.msra.mxu0 0.0
    %3746 = vmatprep.subr.mxu0 0.0
    %3747 = vmatpush1.msra.mxu0 0.0
    %3748 = vmatprep.subr.mxu0 0.0
    %3749 = vmatpush1.msra.mxu0 0.0
    %3750 = vmatprep.mubr.f32.mxu0 0.0
    %3751 = vmatmul.mubr.f32.gmra.mrb[0].mxu0 %v85
    %v3752 = vpop.f32.mrb[0].mxu0
    %v3753 = vadd.f32 %v3600, %v3752
    %v3754 = vpop.f32.mrb[0].mxu0
    %v3755 = vadd.f32 %v3604, %v3754
    %3756 = vmatprep.mubr.f32.mxu0 0.0
    %3757 = vmatmul.mubr.f32.gmra.mrb[0].mxu0 %v86
    %v3758 = vpop.f32.mrb[0].mxu0
    %v3759 = vadd.f32 %v3600, %v3758
    %v3760 = vpop.f32.mrb[0].mxu0
    %v3761 = vadd.f32 %v3604, %v3760
    %3762 = vdwg.mxu0
    %v3763 = vmul.f32 %v3676, 0.5
    %v3764 = vmul.f32 %v3678, 0.5
    %v3765 = vmul.f32 %v3753, 0.5
    %v3766 = vmul.f32 %v3755, 0.5
    %v3767 = vmul.f32 %v3682, 0.5
    %v3768 = vmul.f32 %v3684, 0.5
    %v3769 = vmul.f32 %v3759, 0.5
    %v3770 = vmul.f32 %v3761, 0.5
    %v3771 = vmul.f32 %v3676, 0.70710677
    %v3772 = vmul.f32 %v3678, 0.70710677
    %v3773 = vmul.f32 %v3753, 0.70710677
    %v3774 = vmul.f32 %v3755, 0.70710677
    %v3775 = vmul.f32 %v3682, 0.70710677
    %v3776 = vmul.f32 %v3684, 0.70710677
    %v3777 = vmul.f32 %v3759, 0.70710677
    %v3778 = vmul.f32 %v3761, 0.70710677
    %v3779 = vand.u32 2147483647, %v3771
    %v3780 = vand.u32 2147483647, %v3772
    %v3781 = vand.u32 2147483647, %v3773
    %v3782 = vand.u32 2147483647, %v3774
    %v3783 = vand.u32 2147483647, %v3775
    %v3784 = vand.u32 2147483647, %v3776
    %v3785 = vand.u32 2147483647, %v3777
    %v3786 = vand.u32 2147483647, %v3778
    %v3787 = vmul.f32 %v3779, 0.3275911
    %v3788 = vmul.f32 %v3780, 0.3275911
    %v3789 = vmul.f32 %v3781, 0.3275911
    %v3790 = vmul.f32 %v3782, 0.3275911
    %v3791 = vmul.f32 %v3783, 0.3275911
    %v3792 = vmul.f32 %v3784, 0.3275911
    %v3793 = vmul.f32 %v3785, 0.3275911
    %v3794 = vmul.f32 %v3786, 0.3275911
    %v3795 = vadd.f32 %v3787, 1.0
    %v3796 = vadd.f32 %v3788, 1.0
    %v3797 = vadd.f32 %v3789, 1.0
    %v3798 = vadd.f32 %v3790, 1.0
    %v3799 = vadd.f32 %v3791, 1.0
    %v3800 = vadd.f32 %v3792, 1.0
    %v3801 = vadd.f32 %v3793, 1.0
    %v3802 = vadd.f32 %v3794, 1.0
    %v3803 = vrcp.pop %v3795
    %v3804 = vrcp.pop %v3796
    %v3805 = vrcp.pop %v3797
    %v3806 = vrcp.pop %v3798
    %v3807 = vrcp.pop %v3799
    %v3808 = vrcp.pop %v3800
    %v3809 = vrcp.pop %v3801
    %v3810 = vrcp.pop %v3802
    %v3811 = vmul.f32 %v3795, %v3803
    %v3812 = vmul.f32 %v3796, %v3804
    %v3813 = vmul.f32 %v3797, %v3805
    %v3814 = vmul.f32 %v3798, %v3806
    %v3815 = vmul.f32 %v3799, %v3807
    %v3816 = vmul.f32 %v3800, %v3808
    %v3817 = vmul.f32 %v3801, %v3809
    %v3818 = vmul.f32 %v3802, %v3810
    %v3819 = vsub.f32 2.0, %v3811
    %v3820 = vsub.f32 2.0, %v3812
    %v3821 = vsub.f32 2.0, %v3813
    %v3822 = vsub.f32 2.0, %v3814
    %v3823 = vsub.f32 2.0, %v3815
    %v3824 = vsub.f32 2.0, %v3816
    %v3825 = vsub.f32 2.0, %v3817
    %v3826 = vsub.f32 2.0, %v3818
    %v3827 = vmul.f32 %v3803, %v3819
    %v3828 = vmul.f32 %v3804, %v3820
    %v3829 = vmul.f32 %v3805, %v3821
    %v3830 = vmul.f32 %v3806, %v3822
    %v3831 = vmul.f32 %v3807, %v3823
    %v3832 = vmul.f32 %v3808, %v3824
    %v3833 = vmul.f32 %v3809, %v3825
    %v3834 = vmul.f32 %v3810, %v3826
    %v3835 = vmul.f32 %v3827, 1.0614054
    %v3836 = vmul.f32 %v3828, 1.0614054
    %v3837 = vmul.f32 %v3829, 1.0614054
    %v3838 = vmul.f32 %v3830, 1.0614054
    %v3839 = vmul.f32 %v3831, 1.0614054
    %v3840 = vmul.f32 %v3832, 1.0614054
    %v3841 = vmul.f32 %v3833, 1.0614054
    %v3842 = vmul.f32 %v3834, 1.0614054
    %v3843 = vadd.f32 %v3835, -1.4531521
    %v3844 = vadd.f32 %v3836, -1.4531521
    %v3845 = vadd.f32 %v3837, -1.4531521
    %v3846 = vadd.f32 %v3838, -1.4531521
    %v3847 = vadd.f32 %v3839, -1.4531521
    %v3848 = vadd.f32 %v3840, -1.4531521
    %v3849 = vadd.f32 %v3841, -1.4531521
    %v3850 = vadd.f32 %v3842, -1.4531521
    %v3851 = vmul.f32 %v3843, %v3827
    %v3852 = vmul.f32 %v3844, %v3828
    %v3853 = vmul.f32 %v3845, %v3829
    %v3854 = vmul.f32 %v3846, %v3830
    %v3855 = vmul.f32 %v3847, %v3831
    %v3856 = vmul.f32 %v3848, %v3832
    %v3857 = vmul.f32 %v3849, %v3833
    %v3858 = vmul.f32 %v3850, %v3834
    %v3859 = vadd.f32 %v3851, 1.4214138
    %v3860 = vadd.f32 %v3852, 1.4214138
    %v3861 = vadd.f32 %v3853, 1.4214138
    %v3862 = vadd.f32 %v3854, 1.4214138
    %v3863 = vadd.f32 %v3855, 1.4214138
    %v3864 = vadd.f32 %v3856, 1.4214138
    %v3865 = vadd.f32 %v3857, 1.4214138
    %v3866 = vadd.f32 %v3858, 1.4214138
    %v3867 = vmul.f32 %v3859, %v3827
    %v3868 = vmul.f32 %v3860, %v3828
    %v3869 = vmul.f32 %v3861, %v3829
    %v3870 = vmul.f32 %v3862, %v3830
    %v3871 = vmul.f32 %v3863, %v3831
    %v3872 = vmul.f32 %v3864, %v3832
    %v3873 = vmul.f32 %v3865, %v3833
    %v3874 = vmul.f32 %v3866, %v3834
    %v3875 = vadd.f32 %v3867, -0.28449672
    %v3876 = vadd.f32 %v3868, -0.28449672
    %v3877 = vadd.f32 %v3869, -0.28449672
    %v3878 = vadd.f32 %v3870, -0.28449672
    %v3879 = vadd.f32 %v3871, -0.28449672
    %v3880 = vadd.f32 %v3872, -0.28449672
    %v3881 = vadd.f32 %v3873, -0.28449672
    %v3882 = vadd.f32 %v3874, -0.28449672
    %v3883 = vmul.f32 %v3875, %v3827
    %v3884 = vmul.f32 %v3876, %v3828
    %v3885 = vmul.f32 %v3877, %v3829
    %v3886 = vmul.f32 %v3878, %v3830
    %v3887 = vmul.f32 %v3879, %v3831
    %v3888 = vmul.f32 %v3880, %v3832
    %v3889 = vmul.f32 %v3881, %v3833
    %v3890 = vmul.f32 %v3882, %v3834
    %v3891 = vadd.f32 %v3883, 0.2548296
    %v3892 = vadd.f32 %v3884, 0.2548296
    %v3893 = vadd.f32 %v3885, 0.2548296
    %v3894 = vadd.f32 %v3886, 0.2548296
    %v3895 = vadd.f32 %v3887, 0.2548296
    %v3896 = vadd.f32 %v3888, 0.2548296
    %v3897 = vadd.f32 %v3889, 0.2548296
    %v3898 = vadd.f32 %v3890, 0.2548296
    %v3899 = vmul.f32 %v3891, %v3827
    %v3900 = vmul.f32 %v3892, %v3828
    %v3901 = vmul.f32 %v3893, %v3829
    %v3902 = vmul.f32 %v3894, %v3830
    %v3903 = vmul.f32 %v3895, %v3831
    %v3904 = vmul.f32 %v3896, %v3832
    %v3905 = vmul.f32 %v3897, %v3833
    %v3906 = vmul.f32 %v3898, %v3834
    %v3907 = vsub.f32 0.0, %v3779
    %v3908 = vsub.f32 0.0, %v3780
    %v3909 = vsub.f32 0.0, %v3781
    %v3910 = vsub.f32 0.0, %v3782
    %v3911 = vsub.f32 0.0, %v3783
    %v3912 = vsub.f32 0.0, %v3784
    %v3913 = vsub.f32 0.0, %v3785
    %v3914 = vsub.f32 0.0, %v3786
    %v3915 = vmul.f32 %v3907, %v3779
    %v3916 = vmul.f32 %v3908, %v3780
    %v3917 = vmul.f32 %v3909, %v3781
    %v3918 = vmul.f32 %v3910, %v3782
    %v3919 = vmul.f32 %v3911, %v3783
    %v3920 = vmul.f32 %v3912, %v3784
    %v3921 = vmul.f32 %v3913, %v3785
    %v3922 = vmul.f32 %v3914, %v3786
    %v3923 = vmul.f32 %v3915, 1.442695
    %v3924 = vpow.pop %v3923
    %v3925 = vmul.f32 %v3916, 1.442695
    %v3926 = vpow.pop %v3925
    %v3927 = vmul.f32 %v3917, 1.442695
    %v3928 = vpow.pop %v3927
    %v3929 = vmul.f32 %v3918, 1.442695
    %v3930 = vpow.pop %v3929
    %v3931 = vmul.f32 %v3919, 1.442695
    %v3932 = vpow.pop %v3931
    %v3933 = vmul.f32 %v3920, 1.442695
    %v3934 = vpow.pop %v3933
    %v3935 = vmul.f32 %v3921, 1.442695
    %v3936 = vpow.pop %v3935
    %v3937 = vmul.f32 %v3922, 1.442695
    %v3938 = vpow.pop %v3937
    %v3939 = vmul.f32 %v3899, %v3924
    %v3940 = vmul.f32 %v3900, %v3926
    %v3941 = vmul.f32 %v3901, %v3928
    %v3942 = vmul.f32 %v3902, %v3930
    %v3943 = vmul.f32 %v3903, %v3932
    %v3944 = vmul.f32 %v3904, %v3934
    %v3945 = vmul.f32 %v3905, %v3936
    %v3946 = vmul.f32 %v3906, %v3938
    %v3947 = vsub.f32 1.0, %v3939
    %v3948 = vsub.f32 1.0, %v3940
    %v3949 = vsub.f32 1.0, %v3941
    %v3950 = vsub.f32 1.0, %v3942
    %v3951 = vsub.f32 1.0, %v3943
    %v3952 = vsub.f32 1.0, %v3944
    %v3953 = vsub.f32 1.0, %v3945
    %v3954 = vsub.f32 1.0, %v3946
    %vm3955 = vcmp.lt.f32.partialorder %v3771, 0.0
    %vm3956 = vcmp.lt.f32.partialorder %v3772, 0.0
    %vm3957 = vcmp.lt.f32.partialorder %v3773, 0.0
    %vm3958 = vcmp.lt.f32.partialorder %v3774, 0.0
    %vm3959 = vcmp.lt.f32.partialorder %v3775, 0.0
    %vm3960 = vcmp.lt.f32.partialorder %v3776, 0.0
    %vm3961 = vcmp.lt.f32.partialorder %v3777, 0.0
    %vm3962 = vcmp.lt.f32.partialorder %v3778, 0.0
    %v3963 = vsub.f32 0.0, %v3947
    %v3964 = vsub.f32 0.0, %v3948
    %v3965 = vsub.f32 0.0, %v3949
    %v3966 = vsub.f32 0.0, %v3950
    %v3967 = vsub.f32 0.0, %v3951
    %v3968 = vsub.f32 0.0, %v3952
    %v3969 = vsub.f32 0.0, %v3953
    %v3970 = vsub.f32 0.0, %v3954
    %v3971 = vsel %vm3955, %v3963, %v3947
    %v3972 = vsel %vm3956, %v3964, %v3948
    %v3973 = vsel %vm3957, %v3965, %v3949
    %v3974 = vsel %vm3958, %v3966, %v3950
    %v3975 = vsel %vm3959, %v3967, %v3951
    %v3976 = vsel %vm3960, %v3968, %v3952
    %v3977 = vsel %vm3961, %v3969, %v3953
    %v3978 = vsel %vm3962, %v3970, %v3954
    %v3979 = vadd.f32 %v3971, 1.0
    %v3980 = vadd.f32 %v3972, 1.0
    %v3981 = vadd.f32 %v3973, 1.0
    %v3982 = vadd.f32 %v3974, 1.0
    %v3983 = vadd.f32 %v3975, 1.0
    %v3984 = vadd.f32 %v3976, 1.0
    %v3985 = vadd.f32 %v3977, 1.0
    %v3986 = vadd.f32 %v3978, 1.0
    %v3987 = vmul.f32 %v3763, %v3979
    %v3988 = vmul.f32 %v3764, %v3980
    %v3989 = vmul.f32 %v3765, %v3981
    %v3990 = vmul.f32 %v3766, %v3982
    %v3991 = vmul.f32 %v3767, %v3983
    %v3992 = vmul.f32 %v3768, %v3984
    %v3993 = vmul.f32 %v3769, %v3985
    %v3994 = vmul.f32 %v3770, %v3986
    %v3995 = vld [vmem:[#allocation8 + $0xa00] sm:$0xff]
    %v3996 = vld [vmem:[#allocation8 + $0xa08] sm:$0xff]
    %v3997 = vld [vmem:[#allocation8 + $0xa10] sm:$0xff]
    %v3998 = vld [vmem:[#allocation8 + $0xa18] sm:$0xff]
    %v3999 = vld [vmem:[#allocation8 + $0xa20] sm:$0xff]
    %v4000 = vld [vmem:[#allocation8 + $0xa28] sm:$0xff]
    %v4001 = vld [vmem:[#allocation8 + $0xa30] sm:$0xff]
    %v4002 = vld [vmem:[#allocation8 + $0xa38] sm:$0xff]
    %v4003 = vld [vmem:[#allocation8 + $0xa40] sm:$0xff]
    %v4004 = vld [vmem:[#allocation8 + $0xa48] sm:$0xff]
    %v4005 = vld [vmem:[#allocation8 + $0xa50] sm:$0xff]
    %v4006 = vld [vmem:[#allocation8 + $0xa58] sm:$0xff]
    %v4007 = vld [vmem:[#allocation8 + $0xa60] sm:$0xff]
    %v4008 = vld [vmem:[#allocation8 + $0xa68] sm:$0xff]
    %v4009 = vld [vmem:[#allocation8 + $0xa70] sm:$0xff]
    %v4010 = vld [vmem:[#allocation8 + $0xa78] sm:$0xff]
    %v4011 = vld [vmem:[#allocation8 + $0xa80] sm:$0xff]
    %v4012 = vld [vmem:[#allocation8 + $0xa88] sm:$0xff]
    %v4013 = vld [vmem:[#allocation8 + $0xa90] sm:$0xff]
    %v4014 = vld [vmem:[#allocation8 + $0xa98] sm:$0xff]
    %v4015 = vld [vmem:[#allocation8 + $0xaa0] sm:$0xff]
    %v4016 = vld [vmem:[#allocation8 + $0xaa8] sm:$0xff]
    %v4017 = vld [vmem:[#allocation8 + $0xab0] sm:$0xff]
    %v4018 = vld [vmem:[#allocation8 + $0xab8] sm:$0xff]
    %v4019 = vld [vmem:[#allocation8 + $0xac0] sm:$0xff]
    %v4020 = vld [vmem:[#allocation8 + $0xac8] sm:$0xff]
    %v4021 = vld [vmem:[#allocation8 + $0xad0] sm:$0xff]
    %v4022 = vld [vmem:[#allocation8 + $0xad8] sm:$0xff]
    %v4023 = vld [vmem:[#allocation8 + $0xae0] sm:$0xff]
    %v4024 = vld [vmem:[#allocation8 + $0xae8] sm:$0xff]
    %v4025 = vld [vmem:[#allocation8 + $0xaf0] sm:$0xff]
    %v4026 = vld [vmem:[#allocation8 + $0xaf8] sm:$0xff]
    %v4027 = vld [vmem:[#allocation8 + $0xb00] sm:$0xff]
    %v4028 = vld [vmem:[#allocation8 + $0xb08] sm:$0xff]
    %v4029 = vld [vmem:[#allocation8 + $0xb10] sm:$0xff]
    %v4030 = vld [vmem:[#allocation8 + $0xb18] sm:$0xff]
    %v4031 = vld [vmem:[#allocation8 + $0xb20] sm:$0xff]
    %v4032 = vld [vmem:[#allocation8 + $0xb28] sm:$0xff]
    %v4033 = vld [vmem:[#allocation8 + $0xb30] sm:$0xff]
    %v4034 = vld [vmem:[#allocation8 + $0xb38] sm:$0xff]
    %v4035 = vld [vmem:[#allocation8 + $0xb40] sm:$0xff]
    %v4036 = vld [vmem:[#allocation8 + $0xb48] sm:$0xff]
    %v4037 = vld [vmem:[#allocation8 + $0xb50] sm:$0xff]
    %v4038 = vld [vmem:[#allocation8 + $0xb58] sm:$0xff]
    %v4039 = vld [vmem:[#allocation8 + $0xb60] sm:$0xff]
    %v4040 = vld [vmem:[#allocation8 + $0xb68] sm:$0xff]
    %v4041 = vld [vmem:[#allocation8 + $0xb70] sm:$0xff]
    %v4042 = vld [vmem:[#allocation8 + $0xb78] sm:$0xff]
    %v4043 = vld [vmem:[#allocation8 + $0xb80] sm:$0xff]
    %v4044 = vld [vmem:[#allocation8 + $0xb88] sm:$0xff]
    %v4045 = vld [vmem:[#allocation8 + $0xb90] sm:$0xff]
    %v4046 = vld [vmem:[#allocation8 + $0xb98] sm:$0xff]
    %v4047 = vld [vmem:[#allocation8 + $0xba0] sm:$0xff]
    %v4048 = vld [vmem:[#allocation8 + $0xba8] sm:$0xff]
    %v4049 = vld [vmem:[#allocation8 + $0xbb0] sm:$0xff]
    %v4050 = vld [vmem:[#allocation8 + $0xbb8] sm:$0xff]
    %v4051 = vld [vmem:[#allocation8 + $0xbc0] sm:$0xff]
    %v4052 = vld [vmem:[#allocation8 + $0xbc8] sm:$0xff]
    %v4053 = vld [vmem:[#allocation8 + $0xbd0] sm:$0xff]
    %v4054 = vld [vmem:[#allocation8 + $0xbd8] sm:$0xff]
    %v4055 = vld [vmem:[#allocation8 + $0xbe0] sm:$0xff]
    %v4056 = vld [vmem:[#allocation8 + $0xbe8] sm:$0xff]
    %v4057 = vld [vmem:[#allocation8 + $0xbf0] sm:$0xff]
    %v4058 = vld [vmem:[#allocation8 + $0xbf8] sm:$0xff]
    %4059 = vmatprep.subr.mxu0 0.0
    %4060 = vmatpush1.msra.mxu0 %v3995
    %4061 = vmatprep.subr.mxu0 0.0
    %4062 = vmatpush1.msra.mxu0 %v3996
    %4063 = vmatprep.subr.mxu0 0.0
    %4064 = vmatpush1.msra.mxu0 %v3997
    %4065 = vmatprep.subr.mxu0 0.0
    %4066 = vmatpush1.msra.mxu0 %v3998
    %4067 = vmatprep.subr.mxu0 0.0
    %4068 = vmatpush1.msra.mxu0 %v3999
    %4069 = vmatprep.subr.mxu0 0.0
    %4070 = vmatpush1.msra.mxu0 %v4000
    %4071 = vmatprep.subr.mxu0 0.0
    %4072 = vmatpush1.msra.mxu0 %v4001
    %4073 = vmatprep.subr.mxu0 0.0
    %4074 = vmatpush1.msra.mxu0 %v4002
    %4075 = vmatprep.subr.mxu0 0.0
    %4076 = vmatpush1.msra.mxu0 %v4003
    %4077 = vmatprep.subr.mxu0 0.0
    %4078 = vmatpush1.msra.mxu0 %v4004
    %4079 = vmatprep.subr.mxu0 0.0
    %4080 = vmatpush1.msra.mxu0 %v4005
    %4081 = vmatprep.subr.mxu0 0.0
    %4082 = vmatpush1.msra.mxu0 %v4006
    %4083 = vmatprep.subr.mxu0 0.0
    %4084 = vmatpush1.msra.mxu0 %v4007
    %4085 = vmatprep.subr.mxu0 0.0
    %4086 = vmatpush1.msra.mxu0 %v4008
    %4087 = vmatprep.subr.mxu0 0.0
    %4088 = vmatpush1.msra.mxu0 %v4009
    %4089 = vmatprep.subr.mxu0 0.0
    %4090 = vmatpush1.msra.mxu0 %v4010
    %4091 = vmatprep.subr.mxu0 0.0
    %4092 = vmatpush1.msra.mxu0 %v4011
    %4093 = vmatprep.subr.mxu0 0.0
    %4094 = vmatpush1.msra.mxu0 %v4012
    %4095 = vmatprep.subr.mxu0 0.0
    %4096 = vmatpush1.msra.mxu0 %v4013
    %4097 = vmatprep.subr.mxu0 0.0
    %4098 = vmatpush1.msra.mxu0 %v4014
    %4099 = vmatprep.subr.mxu0 0.0
    %4100 = vmatpush1.msra.mxu0 %v4015
    %4101 = vmatprep.subr.mxu0 0.0
    %4102 = vmatpush1.msra.mxu0 %v4016
    %4103 = vmatprep.subr.mxu0 0.0
    %4104 = vmatpush1.msra.mxu0 %v4017
    %4105 = vmatprep.subr.mxu0 0.0
    %4106 = vmatpush1.msra.mxu0 %v4018
    %4107 = vmatprep.subr.mxu0 0.0
    %4108 = vmatpush1.msra.mxu0 %v4019
    %4109 = vmatprep.subr.mxu0 0.0
    %4110 = vmatpush1.msra.mxu0 %v4020
    %4111 = vmatprep.subr.mxu0 0.0
    %4112 = vmatpush1.msra.mxu0 %v4021
    %4113 = vmatprep.subr.mxu0 0.0
    %4114 = vmatpush1.msra.mxu0 %v4022
    %4115 = vmatprep.subr.mxu0 0.0
    %4116 = vmatpush1.msra.mxu0 %v4023
    %4117 = vmatprep.subr.mxu0 0.0
    %4118 = vmatpush1.msra.mxu0 %v4024
    %4119 = vmatprep.subr.mxu0 0.0
    %4120 = vmatpush1.msra.mxu0 %v4025
    %4121 = vmatprep.subr.mxu0 0.0
    %4122 = vmatpush1.msra.mxu0 %v4026
    %4123 = vmatprep.mubr.f32.mxu0 %v3988
    %4124 = vmatmul.mubr.f32.gmra.mrb[0].mxu0 %v3987
    %v4125 = vpop.f32.mrb[0].mxu0
    %v4126 = vadd.f32 0.0, %v4125
    %v4127 = vpop.f32.mrb[0].mxu0
    %4128 = vmatprep.mubr.f32.mxu0 %v3992
    %4129 = vmatmul.mubr.f32.gmra.mrb[0].mxu0 %v3991
    %v4130 = vpop.f32.mrb[0].mxu0
    %v4131 = vadd.f32 0.0, %v4130
    %v4132 = vpop.f32.mrb[0].mxu0
    %4133 = vdwg.mxu0
    %4134 = vmatprep.subr.mxu0 0.0
    %4135 = vmatpush1.msra.mxu0 %v4027
    %4136 = vmatprep.subr.mxu0 0.0
    %4137 = vmatpush1.msra.mxu0 %v4028
    %4138 = vmatprep.subr.mxu0 0.0
    %4139 = vmatpush1.msra.mxu0 %v4029
    %4140 = vmatprep.subr.mxu0 0.0
    %4141 = vmatpush1.msra.mxu0 %v4030
    %4142 = vmatprep.subr.mxu0 0.0
    %4143 = vmatpush1.msra.mxu0 %v4031
    %4144 = vmatprep.subr.mxu0 0.0
    %4145 = vmatpush1.msra.mxu0 %v4032
    %4146 = vmatprep.subr.mxu0 0.0
    %4147 = vmatpush1.msra.mxu0 %v4033
    %4148 = vmatprep.subr.mxu0 0.0
    %4149 = vmatpush1.msra.mxu0 %v4034
    %4150 = vmatprep.subr.mxu0 0.0
    %4151 = vmatpush1.msra.mxu0 %v4035
    %4152 = vmatprep.subr.mxu0 0.0
    %4153 = vmatpush1.msra.mxu0 %v4036
    %4154 = vmatprep.subr.mxu0 0.0
    %4155 = vmatpush1.msra.mxu0 %v4037
    %4156 = vmatprep.subr.mxu0 0.0
    %4157 = vmatpush1.msra.mxu0 %v4038
    %4158 = vmatprep.subr.mxu0 0.0
    %4159 = vmatpush1.msra.mxu0 %v4039
    %4160 = vmatprep.subr.mxu0 0.0
    %4161 = vmatpush1.msra.mxu0 %v4040
    %4162 = vmatprep.subr.mxu0 0.0
    %4163 = vmatpush1.msra.mxu0 %v4041
    %4164 = vmatprep.subr.mxu0 0.0
    %4165 = vmatpush1.msra.mxu0 %v4042
    %4166 = vmatprep.subr.mxu0 0.0
    %4167 = vmatpush1.msra.mxu0 %v4043
    %4168 = vmatprep.subr.mxu0 0.0
    %4169 = vmatpush1.msra.mxu0 %v4044
    %4170 = vmatprep.subr.mxu0 0.0
    %4171 = vmatpush1.msra.mxu0 %v4045
    %4172 = vmatprep.subr.mxu0 0.0
    %4173 = vmatpush1.msra.mxu0 %v4046
    %4174 = vmatprep.subr.mxu0 0.0
    %4175 = vmatpush1.msra.mxu0 %v4047
    %4176 = vmatprep.subr.mxu0 0.0
    %4177 = vmatpush1.msra.mxu0 %v4048
    %4178 = vmatprep.subr.mxu0 0.0
    %4179 = vmatpush1.msra.mxu0 %v4049
    %4180 = vmatprep.subr.mxu0 0.0
    %4181 = vmatpush1.msra.mxu0 %v4050
    %4182 = vmatprep.subr.mxu0 0.0
    %4183 = vmatpush1.msra.mxu0 %v4051
    %4184 = vmatprep.subr.mxu0 0.0
    %4185 = vmatpush1.msra.mxu0 %v4052
    %4186 = vmatprep.subr.mxu0 0.0
    %4187 = vmatpush1.msra.mxu0 %v4053
    %4188 = vmatprep.subr.mxu0 0.0
    %4189 = vmatpush1.msra.mxu0 %v4054
    %4190 = vmatprep.subr.mxu0 0.0
    %4191 = vmatpush1.msra.mxu0 %v4055
    %4192 = vmatprep.subr.mxu0 0.0
    %4193 = vmatpush1.msra.mxu0 %v4056
    %4194 = vmatprep.subr.mxu0 0.0
    %4195 = vmatpush1.msra.mxu0 %v4057
    %4196 = vmatprep.subr.mxu0 0.0
    %4197 = vmatpush1.msra.mxu0 %v4058
    %4198 = vmatprep.mubr.f32.mxu0 %v3990
    %4199 = vmatmul.mubr.f32.gmra.mrb[0].mxu0 %v3989
    %v4200 = vpop.f32.mrb[0].mxu0
    %v4201 = vadd.f32 %v4126, %v4200
    %v4202 = vpop.f32.mrb[0].mxu0
    %4203 = vmatprep.mubr.f32.mxu0 %v3994
    %4204 = vmatmul.mubr.f32.gmra.mrb[0].mxu0 %v3993
    %v4205 = vpop.f32.mrb[0].mxu0
    %v4206 = vadd.f32 %v4131, %v4205
    %v4207 = vpop.f32.mrb[0].mxu0
    %4208 = vdwg.mxu0
    %v4209 = vadd.f32 %v3521, %v4201
    %v4210 = vadd.f32 %v3522, %v4206
    %v4211 = vld [vmem:[#allocation10] sm:$0x1]
    %v4213 = vlaneseq
    %v4214 = vshrl.u32 %v4213, 7
    %v4215 = vsub.s32 0, %v4214
    %v4216 = vrot.slane %v4211, %v4215
    %v4218 = vadd.f32 %v4209, %v4216
    %v4219 = vadd.f32 %v4210, %v4216
    %4220 = vst [vmem:[#allocation11] sm:$0xff] %v4218
    %4221 = vst [vmem:[#allocation11 + $0x8] sm:$0xff] %v4219
    // Predicated region
    $region42: #{mlp_forward.1} parent=1 // pred_check
      _
    $region43: #{mlp_forward.1} parent=1 // pred_check_branch
      %4223 = sbr.rel (0) target = $region45
    $region44: #{mlp_forward.1} parent=1 // pred_region
      %s4225 = ssub.s32 256, 256
      %4226 = vsyncadd [#allocation4], %s4225
      %s4227 = sshll.u32 [#allocation11], 4
      %s4228 = int_to_ptr.vmem [resolvable:$true] %s4227
      %4233 = dma.vmem_to_hbm [thread:$0]  %s4228, 256, %s5, [#allocation4], 128, 128, 8
    $region45: #{mlp_forward.1} parent=1 // pred_fallthru
      _
    // Predicated region
    $region46: #{mlp_forward.1} parent=1 // pred_check
      _
    $region47: #{mlp_forward.1} parent=1 // pred_check_branch
      %4235 = sbr.rel (0) target = $region49
    $region48: #{mlp_forward.1} parent=1 // pred_region
      %4236 = dma.done [#allocation4], 256
    $region49: #{mlp_forward.1} parent=1 // pred_fallthru
      _
    %4237 = vsyncpa [#allocation3], 1
    %4238 = vsyncpa [#allocation6], 1
    %4239 = vsyncpa [#allocation9], 1
    %4240 = vsyncpa [#allocation4], 1

</llo_original>
